<compile_context>
chip_gen: v7x
topology: tpu7x:2x2x1
jax: 0.10.0
libtpu: 0.0.40
codegen_flags: <defaults>
</compile_context>

<pallas_src>
import jax
import jax.numpy as jnp
from jax.experimental import pallas as pl
from jax.experimental.pallas import tpu as pltpu

IN_FEATURES = 3 * 32 * 32   # 3072, fixed by the module
OUT_FEATURES = 10
LANE = 128                  # TPU vreg lane width
SUBLANE = 8


def _round_up(x, m):
    return (x + m - 1) // m * m


def _vmem_capacity_bytes():
    try:
        info = pltpu.get_tpu_info()
        return int(getattr(info, "vmem_capacity_bytes", 64 * 1024 * 1024))
    except Exception:
        return 64 * 1024 * 1024   # conservative (v7x per-TC size)


def _pick_hidden_tile(h_pad, cap):
    """Largest multiple of 128 that divides h_pad and is <= cap (>= 128)."""
    m = h_pad // LANE
    best = 1
    for d in range(1, m + 1):
        if m % d == 0 and d * LANE <= cap:
            best = d
    return best * LANE


def _mlp_kernel(x_ref, w1_ref, b1_ref, w2_ref, b2_ref, o_ref, acc_ref):
    # Grid = (batch tiles, hidden tiles); hidden axis is the fc2 reduction.
    # x_ref : (bm, 3072)    w1_ref: (3072, hk)   b1_ref: (1, hk)
    # w2_ref: (hk, o_pad)   b2_ref: (1, o_pad)   o_ref : (bm, o_pad)
    # acc_ref: (bm, o_pad) f32 resident accumulator.
    k = pl.program_id(1)

    @pl.when(k == 0)
    def _init():
        acc_ref[...] = jnp.zeros_like(acc_ref)

    h = jnp.dot(x_ref[...], w1_ref[...], preferred_element_type=jnp.float32)
    h = jnp.maximum(h + b1_ref[...].astype(jnp.float32), 0.0)          # ReLU
    acc_ref[...] += jnp.dot(h.astype(w2_ref.dtype), w2_ref[...],
                            preferred_element_type=jnp.float32)

    @pl.when(k == pl.num_programs(1) - 1)
    def _finalize():
        out = acc_ref[...] + b2_ref[...].astype(jnp.float32)
        o_ref[...] = out.astype(o_ref.dtype)


def prepare_params(w1, b1, w2, b2, *, dtype=jnp.float32):
    """One-time parameter prep (hoisted out of the per-call hot path).

    Takes PyTorch-layout params (w1: (M, 3072), b1: (M,), w2: (10, M),
    b2: (10,)) and returns lane-dense, pre-transposed, zero-padded arrays:
      w1t: (3072, H_pad), b1r: (1, H_pad), w2t: (H_pad, O_pad), b2r: (1, O_pad)
    with H_pad = round_up(M, 128), O_pad = 128.  Zero padding is exact through
    ReLU; padded output columns are sliced off after the kernel.  Pass
    dtype=jnp.bfloat16 (and supply bf16 x from the producer) to halve the
    HBM traffic of this x-read-bound kernel; biases stay f32.
    """
    m = w1.shape[0]
    h_pad = _round_up(m, LANE)
    o_pad = _round_up(OUT_FEATURES, LANE)
    w1t = jnp.zeros((IN_FEATURES, h_pad), dtype).at[:, :m].set(w1.T.astype(dtype))
    b1r = jnp.zeros((1, h_pad), jnp.float32).at[0, :m].set(b1.astype(jnp.float32))
    w2t = jnp.zeros((h_pad, o_pad), dtype).at[:m, :OUT_FEATURES].set(w2.T.astype(dtype))
    b2r = jnp.zeros((1, o_pad), jnp.float32).at[0, :OUT_FEATURES].set(b2.astype(jnp.float32))
    return w1t, b1r, w2t, b2r


def net_forward(x, w1t, b1r, w2t, b2r, *, bm=None, hk=None):
    """Forward pass. x: (B, 3, 32, 32) or (B, 3072) -> (B, 10)."""
    x = x.reshape(-1, IN_FEATURES)               # torch's .view(-1, 3*32*32)
    B = int(x.shape[0])
    h_pad = int(w1t.shape[1])
    o_pad = int(w2t.shape[1])
    out_dtype = x.dtype

    vmem_cap = _vmem_capacity_bytes()
    big_vmem = vmem_cap >= 100 * 1024 * 1024     # v5e/v6e (128 MiB) vs v7x (64 MiB)

    # --- batch tile --------------------------------------------------------
    if bm is None:
        bm = 1024 if (big_vmem and B >= 2048) else 512
    if B <= SUBLANE:
        bm_eff = B                               # single block == full batch dim
    else:
        bm_eff = max(SUBLANE, min(bm, (B // SUBLANE) * SUBLANE))
        # Keep >= 2 batch steps when possible so the "parallel" batch axis can
        # shard across both TensorCores on multi-TC chips (v7x).
        if pl.cdiv(B, bm_eff) < 2:
            bm_eff = max(SUBLANE, _round_up(pl.cdiv(B, 2), SUBLANE))
    nb = pl.cdiv(B, bm_eff)

    # --- hidden (reduction) tile --------------------------------------------
    if hk is None:
        hk_cap = 2048 if big_vmem else 1024
        hk = _pick_hidden_tile(h_pad, hk_cap)
    assert h_pad % hk == 0 and hk % LANE == 0
    nk = h_pad // hk
    weights_single = (nk == 1)                   # constant block index -> 1 buffer

    # --- VMEM budget / cost estimate ----------------------------------------
    xi = jnp.dtype(x.dtype).itemsize
    wi = jnp.dtype(w1t.dtype).itemsize
    oi = jnp.dtype(out_dtype).itemsize
    wbuf = 1 if weights_single else 2
    est = (2 * bm_eff * IN_FEATURES * xi
           + wbuf * (IN_FEATURES * hk * wi + hk * o_pad * wi + (hk + o_pad) * 4)
           + 2 * bm_eff * o_pad * oi
           + bm_eff * o_pad * 4)
    vmem_limit = int(min(max(int(est * 1.3), 32 * 1024 * 1024),
                         int(vmem_cap * 0.75)))

    cost = pl.CostEstimate(
        flops=2 * B * IN_FEATURES * h_pad + 2 * B * h_pad * o_pad,
        transcendentals=0,
        bytes_accessed=int(B * IN_FEATURES * xi
                           + (w1t.size + w2t.size) * wi
                           + (b1r.size + b2r.size) * 4
                           + B * o_pad * oi))

    def _run(single_buffer_consts):
        def const_kw():
            return ({"pipeline_mode": pl.Buffered(1)}
                    if single_buffer_consts else {})
        w_kw = const_kw() if weights_single else {}
        grid_spec = pltpu.PrefetchScalarGridSpec(
            num_scalar_prefetch=0,
            grid=(nb, nk),
            in_specs=[
                # batch-tiled input; block index constant across the hidden axis
                pl.BlockSpec((bm_eff, IN_FEATURES), lambda i, k: (i, 0)),
                pl.BlockSpec((IN_FEATURES, hk), lambda i, k: (0, k), **w_kw),
                pl.BlockSpec((1, hk), lambda i, k: (0, k), **w_kw),
                pl.BlockSpec((hk, o_pad), lambda i, k: (k, 0), **w_kw),
                pl.BlockSpec((1, o_pad), lambda i, k: (0, 0), **const_kw()),
            ],
            out_specs=pl.BlockSpec((bm_eff, o_pad), lambda i, k: (i, 0)),
            scratch_shapes=[pltpu.VMEM((bm_eff, o_pad), jnp.float32)],
        )
        return pl.pallas_call(
            _mlp_kernel,
            out_shape=jax.ShapeDtypeStruct((B, o_pad), out_dtype),
            grid_spec=grid_spec,
            compiler_params=pltpu.CompilerParams(
                dimension_semantics=("parallel", "arbitrary"),
                vmem_limit_bytes=vmem_limit),
            cost_estimate=cost,
        )(x, w1t, b1r, w2t, b2r)

    try:
        out = _run(True)       # single-buffer constant-index weight/bias blocks
    except Exception:          # pipeline_mode unsupported -> default buffering
        out = _run(False)

    # Drop the lane padding of the output dim.  No batch padding existed: the
    # partial last block's OOB rows were masked on the output store.
    return out[:, :OUT_FEATURES]


def _reference(x, w1, b1, w2, b2):
    xf = x.reshape(-1, IN_FEATURES)
    return jnp.maximum(xf @ w1.T + b1, 0.0) @ w2.T + b2


if __name__ == "__main__":
    key = jax.random.PRNGKey(0)

    def make_case(key, B, M):
        kx, k1, k2, k3, k4 = jax.random.split(key, 5)
        x = jax.random.normal(kx, (B, 3, 32, 32), dtype=jnp.float32)
        bound1 = 1.0 / jnp.sqrt(IN_FEATURES)
        bound2 = 1.0 / jnp.sqrt(M)
        w1 = jax.random.uniform(k1, (M, IN_FEATURES), jnp.float32, -bound1, bound1)
        b1 = jax.random.uniform(k2, (M,), jnp.float32, -bound1, bound1)
        w2 = jax.random.uniform(k3, (OUT_FEATURES, M), jnp.float32, -bound2, bound2)
        b2 = jax.random.uniform(k4, (OUT_FEATURES,), jnp.float32, -bound2, bound2)
        return x, (w1, b1, w2, b2)

    k_a, k_b = jax.random.split(key)

    # Case 1: tiny batch (single block, single hidden tile).
    x_a, raw_a = make_case(k_a, B=4, M=32)
    params_a = prepare_params(*raw_a)                       # one-time prep
    out_a = jax.block_until_ready(net_forward(x_a, *params_a))
    ref_a = _reference(x_a, *raw_a)
    assert out_a.shape == (4, OUT_FEATURES)
    assert jnp.allclose(out_a, ref_a, atol=5e-4, rtol=5e-4), "case1 mismatch"

    # Case 2: non-multiple batch (partial last block, 2 batch steps) and a
    # forced 2-step hidden reduction to exercise the accumulator path.
    x_b, raw_b = make_case(k_b, B=20, M=160)
    params_b = prepare_params(*raw_b)
    out_b = jax.block_until_ready(net_forward(x_b, *params_b, hk=128))
    ref_b = _reference(x_b, *raw_b)
    assert out_b.shape == (20, OUT_FEATURES)
    assert jnp.allclose(out_b, ref_b, atol=5e-4, rtol=5e-4), "case2 mismatch"

    print("KERNEL_OK")
</pallas_src>

<mosaic_0001>
module attributes {stable_mosaic.version = 11 : i64} {
  func.func @_mlp_kernel(%arg0: i32, %arg1: i32, %arg2: memref<4x3072xf32, #tpu.memory_space<vmem>>, %arg3: memref<3072x128xf32, #tpu.memory_space<vmem>>, %arg4: memref<1x128xf32, #tpu.memory_space<vmem>>, %arg5: memref<128x128xf32, #tpu.memory_space<vmem>>, %arg6: memref<1x128xf32, #tpu.memory_space<vmem>>, %arg7: memref<4x128xf32, #tpu.memory_space<vmem>>, %arg8: memref<4x128xf32, #tpu.memory_space<vmem>>) attributes {dimension_semantics = [#tpu.dimension_semantics<parallel>, #tpu.dimension_semantics<arbitrary>], iteration_bounds = array<i64: 1, 1>, scalar_prefetch = 0 : i64, scratch_operands = 1 : i64, tpu.core_type = #tpu.core_type<tc>, window_params = [{transform_indices = @transform_0, window_bounds = array<i64: 4, 3072>}, {pipeline_mode = #tpu.pipeline_mode<synchronous>, transform_indices = @transform_1, window_bounds = array<i64: 3072, 128>}, {pipeline_mode = #tpu.pipeline_mode<synchronous>, transform_indices = @transform_2, window_bounds = array<i64: 1, 128>}, {pipeline_mode = #tpu.pipeline_mode<synchronous>, transform_indices = @transform_3, window_bounds = array<i64: 128, 128>}, {pipeline_mode = #tpu.pipeline_mode<synchronous>, transform_indices = @transform_4, window_bounds = array<i64: 1, 128>}, {transform_indices = @transform_5, window_bounds = array<i64: 4, 128>}]} {
    %c0_i32 = arith.constant 0 : i32
    %0 = arith.cmpi eq, %arg1, %c0_i32 : i32
    %1 = arith.extui %0 : i1 to i32
    %c0_i32_0 = arith.constant 0 : i32
    %2 = arith.cmpi ne, %1, %c0_i32_0 : i32
    scf.if %2 {
      %cst_16 = arith.constant 0.000000e+00 : f32
      %19 = vector.broadcast %cst_16 : f32 to vector<4x128xf32>
      %c0_17 = arith.constant 0 : index
      %c0_18 = arith.constant 0 : index
      %20 = vector.load %arg8[%c0_17, %c0_18] : memref<4x128xf32, #tpu.memory_space<vmem>>, vector<4x128xf32>
      tpu.vector_store %arg8[%c0_17, %c0_18], %19 {strides = array<i32>} : memref<4x128xf32, #tpu.memory_space<vmem>>, vector<4x128xf32>,
    } else {
    }
    %c0 = arith.constant 0 : index
    %c0_1 = arith.constant 0 : index
    %3 = vector.load %arg2[%c0, %c0_1] : memref<4x3072xf32, #tpu.memory_space<vmem>>, vector<4x3072xf32>
    %c0_2 = arith.constant 0 : index
    %c0_3 = arith.constant 0 : index
    %4 = vector.load %arg3[%c0_2, %c0_3] : memref<3072x128xf32, #tpu.memory_space<vmem>>, vector<3072x128xf32>
    %cst = arith.constant dense<0.000000e+00> : vector<4x128xf32>
    %5 = tpu.matmul %3, %4, %cst {dimension_numbers = #tpu.dot_dimension_numbers<[1], [0], [0], [1], [0, 0, 1, 1], [], []>} : vector<4x3072xf32>, vector<3072x128xf32>, vector<4x128xf32> -> vector<4x128xf32>
    %c0_4 = arith.constant 0 : index
    %c0_5 = arith.constant 0 : index
    %6 = vector.load %arg4[%c0_4, %c0_5] : memref<1x128xf32, #tpu.memory_space<vmem>>, vector<1x128xf32>
    %7 = vector.broadcast %6 : vector<1x128xf32> to vector<4x128xf32>
    %8 = arith.addf %5, %7 : vector<4x128xf32>
    %cst_6 = arith.constant 0.000000e+00 : f32
    %9 = vector.broadcast %cst_6 : f32 to vector<4x128xf32>
    %10 = arith.maximumf %8, %9 : vector<4x128xf32>
    %c0_7 = arith.constant 0 : index
    %c0_8 = arith.constant 0 : index
    %11 = vector.load %arg8[%c0_7, %c0_8] : memref<4x128xf32, #tpu.memory_space<vmem>>, vector<4x128xf32>
    %c0_9 = arith.constant 0 : index
    %c0_10 = arith.constant 0 : index
    %12 = vector.load %arg5[%c0_9, %c0_10] : memref<128x128xf32, #tpu.memory_space<vmem>>, vector<128x128xf32>
    %cst_11 = arith.constant dense<0.000000e+00> : vector<4x128xf32>
    %13 = tpu.matmul %10, %12, %cst_11 {dimension_numbers = #tpu.dot_dimension_numbers<[1], [0], [0], [1], [0, 0, 1, 1], [], []>} : vector<4x128xf32>, vector<128x128xf32>, vector<4x128xf32> -> vector<4x128xf32>
    %14 = arith.addf %11, %13 : vector<4x128xf32>
    %c0_12 = arith.constant 0 : index
    %c0_13 = arith.constant 0 : index
    %15 = vector.load %arg8[%c0_12, %c0_13] : memref<4x128xf32, #tpu.memory_space<vmem>>, vector<4x128xf32>
    tpu.vector_store %arg8[%c0_12, %c0_13], %14 {strides = array<i32>} : memref<4x128xf32, #tpu.memory_space<vmem>>, vector<4x128xf32>,
    %c0_i32_14 = arith.constant 0 : i32
    %16 = arith.cmpi eq, %arg1, %c0_i32_14 : i32
    %17 = arith.extui %16 : i1 to i32
    %c0_i32_15 = arith.constant 0 : i32
    %18 = arith.cmpi ne, %17, %c0_i32_15 : i32
    scf.if %18 {
      %c0_16 = arith.constant 0 : index
      %c0_17 = arith.constant 0 : index
      %19 = vector.load %arg8[%c0_16, %c0_17] : memref<4x128xf32, #tpu.memory_space<vmem>>, vector<4x128xf32>
      %c0_18 = arith.constant 0 : index
      %c0_19 = arith.constant 0 : index
      %20 = vector.load %arg6[%c0_18, %c0_19] : memref<1x128xf32, #tpu.memory_space<vmem>>, vector<1x128xf32>
      %21 = vector.broadcast %20 : vector<1x128xf32> to vector<4x128xf32>
      %22 = arith.addf %19, %21 : vector<4x128xf32>
      %c0_20 = arith.constant 0 : index
      %c0_21 = arith.constant 0 : index
      %23 = vector.load %arg7[%c0_20, %c0_21] : memref<4x128xf32, #tpu.memory_space<vmem>>, vector<4x128xf32>
      tpu.vector_store %arg7[%c0_20, %c0_21], %22 {strides = array<i32>} : memref<4x128xf32, #tpu.memory_space<vmem>>, vector<4x128xf32>,
    } else {
    }
    return
  }
  func.func @transform_0(%arg0: i32, %arg1: i32) -> (i32, i32) {
    %c0_i32 = arith.constant 0 : i32
    %c0_i32_0 = arith.constant 0 : i32
    return %arg0, %c0_i32 : i32, i32
  }
  func.func @transform_1(%arg0: i32, %arg1: i32) -> (i32, i32) {
    %c0_i32 = arith.constant 0 : i32
    %c0_i32_0 = arith.constant 0 : i32
    return %c0_i32, %arg1 : i32, i32
  }
  func.func @transform_2(%arg0: i32, %arg1: i32) -> (i32, i32) {
    %c0_i32 = arith.constant 0 : i32
    %c0_i32_0 = arith.constant 0 : i32
    return %c0_i32, %arg1 : i32, i32
  }
  func.func @transform_3(%arg0: i32, %arg1: i32) -> (i32, i32) {
    %c0_i32 = arith.constant 0 : i32
    %c0_i32_0 = arith.constant 0 : i32
    return %arg1, %c0_i32 : i32, i32
  }
  func.func @transform_4(%arg0: i32, %arg1: i32) -> (i32, i32) {
    %c0_i32 = arith.constant 0 : i32
    %c0_i32_0 = arith.constant 0 : i32
    %c0_i32_1 = arith.constant 0 : i32
    return %c0_i32, %c0_i32_0 : i32, i32
  }
  func.func @transform_5(%arg0: i32, %arg1: i32) -> (i32, i32) {
    %c0_i32 = arith.constant 0 : i32
    %c0_i32_0 = arith.constant 0 : i32
    return %arg0, %c0_i32 : i32, i32
  }
}

module attributes {stable_mosaic.version = 11 : i64} {
  func.func @_mlp_kernel(%arg0: i32, %arg1: i32, %arg2: memref<4x3072xf32, #tpu.memory_space<vmem>>, %arg3: memref<3072x128xf32, #tpu.memory_space<vmem>>, %arg4: memref<1x128xf32, #tpu.memory_space<vmem>>, %arg5: memref<128x128xf32, #tpu.memory_space<vmem>>, %arg6: memref<1x128xf32, #tpu.memory_space<vmem>>, %arg7: memref<4x128xf32, #tpu.memory_space<vmem>>, %arg8: memref<4x128xf32, #tpu.memory_space<vmem>>) attributes {dimension_semantics = [#tpu.dimension_semantics<parallel>, #tpu.dimension_semantics<arbitrary>], iteration_bounds = array<i64: 1, 1>, scalar_prefetch = 0 : i64, scratch_operands = 1 : i64, tpu.core_type = #tpu.core_type<tc>, window_params = [{transform_indices = @transform_0, window_bounds = array<i64: 4, 3072>}, {transform_indices = @transform_1, window_bounds = array<i64: 3072, 128>}, {transform_indices = @transform_2, window_bounds = array<i64: 1, 128>}, {transform_indices = @transform_3, window_bounds = array<i64: 128, 128>}, {pipeline_mode = #tpu.pipeline_mode<synchronous>, transform_indices = @transform_4, window_bounds = array<i64: 1, 128>}, {transform_indices = @transform_5, window_bounds = array<i64: 4, 128>}]} {
    %c0_i32 = arith.constant 0 : i32
    %0 = arith.cmpi eq, %arg1, %c0_i32 : i32
    %1 = arith.extui %0 : i1 to i32
    %c0_i32_0 = arith.constant 0 : i32
    %2 = arith.cmpi ne, %1, %c0_i32_0 : i32
    scf.if %2 {
      %cst_16 = arith.constant 0.000000e+00 : f32
      %19 = vector.broadcast %cst_16 : f32 to vector<4x128xf32>
      %c0_17 = arith.constant 0 : index
      %c0_18 = arith.constant 0 : index
      %20 = vector.load %arg8[%c0_17, %c0_18] : memref<4x128xf32, #tpu.memory_space<vmem>>, vector<4x128xf32>
      tpu.vector_store %arg8[%c0_17, %c0_18], %19 {strides = array<i32>} : memref<4x128xf32, #tpu.memory_space<vmem>>, vector<4x128xf32>,
    } else {
    }
    %c0 = arith.constant 0 : index
    %c0_1 = arith.constant 0 : index
    %3 = vector.load %arg2[%c0, %c0_1] : memref<4x3072xf32, #tpu.memory_space<vmem>>, vector<4x3072xf32>
    %c0_2 = arith.constant 0 : index
    %c0_3 = arith.constant 0 : index
    %4 = vector.load %arg3[%c0_2, %c0_3] : memref<3072x128xf32, #tpu.memory_space<vmem>>, vector<3072x128xf32>
    %cst = arith.constant dense<0.000000e+00> : vector<4x128xf32>
    %5 = tpu.matmul %3, %4, %cst {dimension_numbers = #tpu.dot_dimension_numbers<[1], [0], [0], [1], [0, 0, 1, 1], [], []>} : vector<4x3072xf32>, vector<3072x128xf32>, vector<4x128xf32> -> vector<4x128xf32>
    %c0_4 = arith.constant 0 : index
    %c0_5 = arith.constant 0 : index
    %6 = vector.load %arg4[%c0_4, %c0_5] : memref<1x128xf32, #tpu.memory_space<vmem>>, vector<1x128xf32>
    %7 = vector.broadcast %6 : vector<1x128xf32> to vector<4x128xf32>
    %8 = arith.addf %5, %7 : vector<4x128xf32>
    %cst_6 = arith.constant 0.000000e+00 : f32
    %9 = vector.broadcast %cst_6 : f32 to vector<4x128xf32>
    %10 = arith.maximumf %8, %9 : vector<4x128xf32>
    %c0_7 = arith.constant 0 : index
    %c0_8 = arith.constant 0 : index
    %11 = vector.load %arg8[%c0_7, %c0_8] : memref<4x128xf32, #tpu.memory_space<vmem>>, vector<4x128xf32>
    %c0_9 = arith.constant 0 : index
    %c0_10 = arith.constant 0 : index
    %12 = vector.load %arg5[%c0_9, %c0_10] : memref<128x128xf32, #tpu.memory_space<vmem>>, vector<128x128xf32>
    %cst_11 = arith.constant dense<0.000000e+00> : vector<4x128xf32>
    %13 = tpu.matmul %10, %12, %cst_11 {dimension_numbers = #tpu.dot_dimension_numbers<[1], [0], [0], [1], [0, 0, 1, 1], [], []>} : vector<4x128xf32>, vector<128x128xf32>, vector<4x128xf32> -> vector<4x128xf32>
    %14 = arith.addf %11, %13 : vector<4x128xf32>
    %c0_12 = arith.constant 0 : index
    %c0_13 = arith.constant 0 : index
    %15 = vector.load %arg8[%c0_12, %c0_13] : memref<4x128xf32, #tpu.memory_space<vmem>>, vector<4x128xf32>
    tpu.vector_store %arg8[%c0_12, %c0_13], %14 {strides = array<i32>} : memref<4x128xf32, #tpu.memory_space<vmem>>, vector<4x128xf32>,
    %c0_i32_14 = arith.constant 0 : i32
    %16 = arith.cmpi eq, %arg1, %c0_i32_14 : i32
    %17 = arith.extui %16 : i1 to i32
    %c0_i32_15 = arith.constant 0 : i32
    %18 = arith.cmpi ne, %17, %c0_i32_15 : i32
    scf.if %18 {
      %c0_16 = arith.constant 0 : index
      %c0_17 = arith.constant 0 : index
      %19 = vector.load %arg8[%c0_16, %c0_17] : memref<4x128xf32, #tpu.memory_space<vmem>>, vector<4x128xf32>
      %c0_18 = arith.constant 0 : index
      %c0_19 = arith.constant 0 : index
      %20 = vector.load %arg6[%c0_18, %c0_19] : memref<1x128xf32, #tpu.memory_space<vmem>>, vector<1x128xf32>
      %21 = vector.broadcast %20 : vector<1x128xf32> to vector<4x128xf32>
      %22 = arith.addf %19, %21 : vector<4x128xf32>
      %c0_20 = arith.constant 0 : index
      %c0_21 = arith.constant 0 : index
      %23 = vector.load %arg7[%c0_20, %c0_21] : memref<4x128xf32, #tpu.memory_space<vmem>>, vector<4x128xf32>
      tpu.vector_store %arg7[%c0_20, %c0_21], %22 {strides = array<i32>} : memref<4x128xf32, #tpu.memory_space<vmem>>, vector<4x128xf32>,
    } else {
    }
    return
  }
  func.func @transform_0(%arg0: i32, %arg1: i32) -> (i32, i32) {
    %c0_i32 = arith.constant 0 : i32
    %c0_i32_0 = arith.constant 0 : i32
    return %arg0, %c0_i32 : i32, i32
  }
  func.func @transform_1(%arg0: i32, %arg1: i32) -> (i32, i32) {
    %c0_i32 = arith.constant 0 : i32
    %c0_i32_0 = arith.constant 0 : i32
    return %c0_i32, %arg1 : i32, i32
  }
  func.func @transform_2(%arg0: i32, %arg1: i32) -> (i32, i32) {
    %c0_i32 = arith.constant 0 : i32
    %c0_i32_0 = arith.constant 0 : i32
    return %c0_i32, %arg1 : i32, i32
  }
  func.func @transform_3(%arg0: i32, %arg1: i32) -> (i32, i32) {
    %c0_i32 = arith.constant 0 : i32
    %c0_i32_0 = arith.constant 0 : i32
    return %arg1, %c0_i32 : i32, i32
  }
  func.func @transform_4(%arg0: i32, %arg1: i32) -> (i32, i32) {
    %c0_i32 = arith.constant 0 : i32
    %c0_i32_0 = arith.constant 0 : i32
    %c0_i32_1 = arith.constant 0 : i32
    return %c0_i32, %c0_i32_0 : i32, i32
  }
  func.func @transform_5(%arg0: i32, %arg1: i32) -> (i32, i32) {
    %c0_i32 = arith.constant 0 : i32
    %c0_i32_0 = arith.constant 0 : i32
    return %arg0, %c0_i32 : i32, i32
  }
}

</mosaic_0001>

<llo_original>
// kernel: tpu_custom_call.1
$region0: #{tpu_custom_call.1}
  #allocation0 [shape = 'u32[]', space=smem, size = 0x4, offset = 0x4, fixed_abs, tag = 'smem constant byte address 0x4 - core index']
  #allocation1 [shape = 'u32[144,128]{1,0:T(1,128)}', space=vmem, size = 0x12000, scoped, tag = 'internal scratch']
  #allocation2 [shape = 'f32[4,128]{1,0:T(4,128)}', space=vmem, size = 0x800, scoped, tag = 'scratch operand']
  %s0 = inlined_call_operand.hbm [shape: f32[4,3072], index: 0, kind: input, shape index: {}]
  %s1 = inlined_call_operand.hbm [shape: f32[3072,128], index: 1, kind: input, shape index: {}]
  %s2 = inlined_call_operand.hbm [shape: f32[1,128], index: 2, kind: input, shape index: {}]
  %s3 = inlined_call_operand.hbm [shape: f32[128,128], index: 3, kind: input, shape index: {}]
  %s4 = inlined_call_operand.hbm [shape: f32[1,128], index: 4, kind: input, shape index: {}]
  %s5 = inlined_call_operand.hbm [shape: f32[4,128], index: 5, kind: output, shape index: {}]
  %s6 = sld [smem:[#allocation0]]
  $region58: #{tpu_custom_call.1} parent=0
    _
  %s8 = ssub.s32 1, %s6
  %s9 = scalar_select 0, %s8, %s6
  $region1: #{tpu_custom_call.1} parent=0
    #allocation3 [shape = 'u8[49152]{0}', space=vmem, size = 0xc000, scoped, tag = 'input window, operand 0, single buffered']
    #allocation4 [shape = 's32[1]{0}', space=sflag, size = 0x4, scoped, tag = 'scoped memory for tpu_custom_call.1']
    #allocation5 [shape = 's32[1]{0}', space=sflag, size = 0x4, scoped, tag = 'scoped memory for tpu_custom_call.1']
    #allocation6 [shape = 'u8[1572864]{0}', space=vmem, size = 0x180000, scoped, tag = 'input window, operand 1, single buffered']
    #allocation7 [shape = 's32[1]{0}', space=sflag, size = 0x4, scoped, tag = 'scoped memory for tpu_custom_call.1']
    #allocation8 [shape = 'u8[512]{0}', space=vmem, size = 0x400, scoped, tag = 'input window, operand 2, single buffered']
    #allocation9 [shape = 'u8[65536]{0}', space=vmem, size = 0x10000, scoped, tag = 'input window, operand 3, single buffered']
    #allocation10 [shape = 's32[1]{0}', space=sflag, size = 0x4, scoped, tag = 'scoped memory for tpu_custom_call.1']
    #allocation11 [shape = 'u8[512]{0}', space=vmem, size = 0x400, scoped, tag = 'input window, operand 4, single buffered']
    #allocation12 [shape = 'u8[2048]{0}', space=vmem, size = 0x800, scoped, tag = 'output window, operand 0, single buffered']
    %10 = vsyncpa [#allocation4], 0
    %11 = vsyncpa [#allocation7], 0
    %12 = vsyncpa [#allocation10], 0
    %13 = vsyncpa [#allocation5], 0
    // Predicated region
    $region2: #{tpu_custom_call.1} parent=1 // pred_check
      _
    $region3: #{tpu_custom_call.1} parent=1 // pred_check_branch
      %15 = sbr.rel (0) target = $region5
    $region4: #{tpu_custom_call.1} parent=1 // pred_region
      %s17 = ssub.s32 1536, 1536
      %18 = vsyncadd [#allocation4], %s17
      %s20 = sshll.u32 [#allocation3], 4
      %s21 = int_to_ptr.vmem [resolvable:$true] %s20
      %23 = dma.hbm_to_vmem [thread:$0]  %s0, 1536, %s21, [#allocation4]
    $region5: #{tpu_custom_call.1} parent=1 // pred_fallthru
      _
    // Predicated region
    $region6: #{tpu_custom_call.1} parent=1 // pred_check
      _
    $region7: #{tpu_custom_call.1} parent=1 // pred_check_branch
      %25 = sbr.rel (0) target = $region9
    $region8: #{tpu_custom_call.1} parent=1 // pred_region
      %s27 = ssub.s32 49152, 49152
      %28 = vsyncadd [#allocation7], %s27
      %s29 = sshll.u32 [#allocation6], 4
      %s30 = int_to_ptr.vmem [resolvable:$true] %s29
      %35 = dma.hbm_to_vmem [thread:$0]  %s1, 49152, %s30, [#allocation7], 128, 128, 8
    $region9: #{tpu_custom_call.1} parent=1 // pred_fallthru
      _
    // Predicated region
    $region10: #{tpu_custom_call.1} parent=1 // pred_check
      _
    $region11: #{tpu_custom_call.1} parent=1 // pred_check_branch
      %37 = sbr.rel (0) target = $region13
    $region12: #{tpu_custom_call.1} parent=1 // pred_region
      %s39 = ssub.s32 16, 16
      %40 = vsyncadd [#allocation7], %s39
      %s42 = sshll.u32 [#allocation8], 4
      %s43 = int_to_ptr.vmem [resolvable:$true] %s42
      %45 = dma.hbm_to_vmem [thread:$0]  %s2, 16, %s43, [#allocation7]
    $region13: #{tpu_custom_call.1} parent=1 // pred_fallthru
      _
    // Predicated region
    $region14: #{tpu_custom_call.1} parent=1 // pred_check
      _
    $region15: #{tpu_custom_call.1} parent=1 // pred_check_branch
      %47 = sbr.rel (0) target = $region17
    $region16: #{tpu_custom_call.1} parent=1 // pred_region
      %s49 = ssub.s32 2048, 2048
      %50 = vsyncadd [#allocation10], %s49
      %s51 = sshll.u32 [#allocation9], 4
      %s52 = int_to_ptr.vmem [resolvable:$true] %s51
      %57 = dma.hbm_to_vmem [thread:$0]  %s3, 2048, %s52, [#allocation10], 128, 128, 8
    $region17: #{tpu_custom_call.1} parent=1 // pred_fallthru
      _
    // Predicated region
    $region18: #{tpu_custom_call.1} parent=1 // pred_check
      _
    $region19: #{tpu_custom_call.1} parent=1 // pred_check_branch
      %59 = sbr.rel (0) target = $region21
    $region20: #{tpu_custom_call.1} parent=1 // pred_region
      %s61 = ssub.s32 16, 16
      %62 = vsyncadd [#allocation10], %s61
      %s64 = sshll.u32 [#allocation11], 4
      %s65 = int_to_ptr.vmem [resolvable:$true] %s64
      %67 = dma.hbm_to_vmem [thread:$0]  %s4, 16, %s65, [#allocation10]
    $region21: #{tpu_custom_call.1} parent=1 // pred_fallthru
      _
    // Predicated region
    $region22: #{tpu_custom_call.1} parent=1 // pred_check
      _
    $region23: #{tpu_custom_call.1} parent=1 // pred_check_branch
      %69 = sbr.rel (0) target = $region25
    $region24: #{tpu_custom_call.1} parent=1 // pred_region
      %70 = dma.done [#allocation4], 1536
    $region25: #{tpu_custom_call.1} parent=1 // pred_fallthru
      _
    // Predicated region
    $region26: #{tpu_custom_call.1} parent=1 // pred_check
      _
    $region27: #{tpu_custom_call.1} parent=1 // pred_check_branch
      %72 = sbr.rel (0) target = $region29
    $region28: #{tpu_custom_call.1} parent=1 // pred_region
      %73 = dma.done [#allocation7], 49152
    $region29: #{tpu_custom_call.1} parent=1 // pred_fallthru
      _
    // Predicated region
    $region30: #{tpu_custom_call.1} parent=1 // pred_check
      _
    $region31: #{tpu_custom_call.1} parent=1 // pred_check_branch
      %75 = sbr.rel (0) target = $region33
    $region32: #{tpu_custom_call.1} parent=1 // pred_region
      %76 = dma.done [#allocation7], 16
    $region33: #{tpu_custom_call.1} parent=1 // pred_fallthru
      _
    // Predicated region
    $region34: #{tpu_custom_call.1} parent=1 // pred_check
      _
    $region35: #{tpu_custom_call.1} parent=1 // pred_check_branch
      %78 = sbr.rel (0) target = $region37
    $region36: #{tpu_custom_call.1} parent=1 // pred_region
      %79 = dma.done [#allocation10], 2048
    $region37: #{tpu_custom_call.1} parent=1 // pred_fallthru
      _
    // Predicated region
    $region38: #{tpu_custom_call.1} parent=1 // pred_check
      _
    $region39: #{tpu_custom_call.1} parent=1 // pred_check_branch
      %81 = sbr.rel (0) target = $region41
    $region40: #{tpu_custom_call.1} parent=1 // pred_region
      %82 = dma.done [#allocation10], 16
    $region41: #{tpu_custom_call.1} parent=1 // pred_fallthru
      _
    %p83 = scmp.eq.s32.totalorder 0, 0
    // Predicated region
    $region42: #{tpu_custom_call.1} parent=1 // pred_check
      %p84 = pneg %p83
    $region43: #{tpu_custom_call.1} parent=1 // pred_check_branch
      %86 = sbr.rel (%p84) target = $region45
    $region44: #{tpu_custom_call.1} parent=1 // pred_region
      %87 = vst [vmem:[#allocation2] sm:$0xf] 0.0
    $region45: #{tpu_custom_call.1} parent=1 // pred_fallthru
      _
    %v88 = vld [vmem:[#allocation3] sm:$0xff]
    %v89 = vld [vmem:[#allocation3 + $0x8] sm:$0xff]
    %v90 = vld [vmem:[#allocation3 + $0x10] sm:$0xff]
    %v91 = vld [vmem:[#allocation3 + $0x18] sm:$0xff]
    %v92 = vld [vmem:[#allocation3 + $0x20] sm:$0xff]
    %v93 = vld [vmem:[#allocation3 + $0x28] sm:$0xff]
    %v94 = vld [vmem:[#allocation3 + $0x30] sm:$0xff]
    %v95 = vld [vmem:[#allocation3 + $0x38] sm:$0xff]
    %v96 = vld [vmem:[#allocation3 + $0x40] sm:$0xff]
    %v97 = vld [vmem:[#allocation3 + $0x48] sm:$0xff]
    %v98 = vld [vmem:[#allocation3 + $0x50] sm:$0xff]
    %v99 = vld [vmem:[#allocation3 + $0x58] sm:$0xff]
    %v100 = vld [vmem:[#allocation6] sm:$0xff]
    %v101 = vld [vmem:[#allocation6 + $0x8] sm:$0xff]
    %v102 = vld [vmem:[#allocation6 + $0x10] sm:$0xff]
    %v103 = vld [vmem:[#allocation6 + $0x18] sm:$0xff]
    %v104 = vld [vmem:[#allocation6 + $0x20] sm:$0xff]
    %v105 = vld [vmem:[#allocation6 + $0x28] sm:$0xff]
    %v106 = vld [vmem:[#allocation6 + $0x30] sm:$0xff]
    %v107 = vld [vmem:[#allocation6 + $0x38] sm:$0xff]
    %v108 = vld [vmem:[#allocation6 + $0x40] sm:$0xff]
    %v109 = vld [vmem:[#allocation6 + $0x48] sm:$0xff]
    %v110 = vld [vmem:[#allocation6 + $0x50] sm:$0xff]
    %v111 = vld [vmem:[#allocation6 + $0x58] sm:$0xff]
    %v112 = vld [vmem:[#allocation6 + $0x60] sm:$0xff]
    %v113 = vld [vmem:[#allocation6 + $0x68] sm:$0xff]
    %v114 = vld [vmem:[#allocation6 + $0x70] sm:$0xff]
    %v115 = vld [vmem:[#allocation6 + $0x78] sm:$0xff]
    %v116 = vld [vmem:[#allocation6 + $0x80] sm:$0xff]
    %v117 = vld [vmem:[#allocation6 + $0x88] sm:$0xff]
    %v118 = vld [vmem:[#allocation6 + $0x90] sm:$0xff]
    %v119 = vld [vmem:[#allocation6 + $0x98] sm:$0xff]
    %v120 = vld [vmem:[#allocation6 + $0xa0] sm:$0xff]
    %v121 = vld [vmem:[#allocation6 + $0xa8] sm:$0xff]
    %v122 = vld [vmem:[#allocation6 + $0xb0] sm:$0xff]
    %v123 = vld [vmem:[#allocation6 + $0xb8] sm:$0xff]
    %v124 = vld [vmem:[#allocation6 + $0xc0] sm:$0xff]
    %v125 = vld [vmem:[#allocation6 + $0xc8] sm:$0xff]
    %v126 = vld [vmem:[#allocation6 + $0xd0] sm:$0xff]
    %v127 = vld [vmem:[#allocation6 + $0xd8] sm:$0xff]
    %v128 = vld [vmem:[#allocation6 + $0xe0] sm:$0xff]
    %v129 = vld [vmem:[#allocation6 + $0xe8] sm:$0xff]
    %v130 = vld [vmem:[#allocation6 + $0xf0] sm:$0xff]
    %v131 = vld [vmem:[#allocation6 + $0xf8] sm:$0xff]
    %v132 = vld [vmem:[#allocation6 + $0x100] sm:$0xff]
    %v133 = vld [vmem:[#allocation6 + $0x108] sm:$0xff]
    %v134 = vld [vmem:[#allocation6 + $0x110] sm:$0xff]
    %v135 = vld [vmem:[#allocation6 + $0x118] sm:$0xff]
    %v136 = vld [vmem:[#allocation6 + $0x120] sm:$0xff]
    %v137 = vld [vmem:[#allocation6 + $0x128] sm:$0xff]
    %v138 = vld [vmem:[#allocation6 + $0x130] sm:$0xff]
    %v139 = vld [vmem:[#allocation6 + $0x138] sm:$0xff]
    %v140 = vld [vmem:[#allocation6 + $0x140] sm:$0xff]
    %v141 = vld [vmem:[#allocation6 + $0x148] sm:$0xff]
    %v142 = vld [vmem:[#allocation6 + $0x150] sm:$0xff]
    %v143 = vld [vmem:[#allocation6 + $0x158] sm:$0xff]
    %v144 = vld [vmem:[#allocation6 + $0x160] sm:$0xff]
    %v145 = vld [vmem:[#allocation6 + $0x168] sm:$0xff]
    %v146 = vld [vmem:[#allocation6 + $0x170] sm:$0xff]
    %v147 = vld [vmem:[#allocation6 + $0x178] sm:$0xff]
    %v148 = vld [vmem:[#allocation6 + $0x180] sm:$0xff]
    %v149 = vld [vmem:[#allocation6 + $0x188] sm:$0xff]
    %v150 = vld [vmem:[#allocation6 + $0x190] sm:$0xff]
    %v151 = vld [vmem:[#allocation6 + $0x198] sm:$0xff]
    %v152 = vld [vmem:[#allocation6 + $0x1a0] sm:$0xff]
    %v153 = vld [vmem:[#allocation6 + $0x1a8] sm:$0xff]
    %v154 = vld [vmem:[#allocation6 + $0x1b0] sm:$0xff]
    %v155 = vld [vmem:[#allocation6 + $0x1b8] sm:$0xff]
    %v156 = vld [vmem:[#allocation6 + $0x1c0] sm:$0xff]
    %v157 = vld [vmem:[#allocation6 + $0x1c8] sm:$0xff]
    %v158 = vld [vmem:[#allocation6 + $0x1d0] sm:$0xff]
    %v159 = vld [vmem:[#allocation6 + $0x1d8] sm:$0xff]
    %v160 = vld [vmem:[#allocation6 + $0x1e0] sm:$0xff]
    %v161 = vld [vmem:[#allocation6 + $0x1e8] sm:$0xff]
    %v162 = vld [vmem:[#allocation6 + $0x1f0] sm:$0xff]
    %v163 = vld [vmem:[#allocation6 + $0x1f8] sm:$0xff]
    %v164 = vld [vmem:[#allocation6 + $0x200] sm:$0xff]
    %v165 = vld [vmem:[#allocation6 + $0x208] sm:$0xff]
    %v166 = vld [vmem:[#allocation6 + $0x210] sm:$0xff]
    %v167 = vld [vmem:[#allocation6 + $0x218] sm:$0xff]
    %v168 = vld [vmem:[#allocation6 + $0x220] sm:$0xff]
    %v169 = vld [vmem:[#allocation6 + $0x228] sm:$0xff]
    %v170 = vld [vmem:[#allocation6 + $0x230] sm:$0xff]
    %v171 = vld [vmem:[#allocation6 + $0x238] sm:$0xff]
    %v172 = vld [vmem:[#allocation6 + $0x240] sm:$0xff]
    %v173 = vld [vmem:[#allocation6 + $0x248] sm:$0xff]
    %v174 = vld [vmem:[#allocation6 + $0x250] sm:$0xff]
    %v175 = vld [vmem:[#allocation6 + $0x258] sm:$0xff]
    %v176 = vld [vmem:[#allocation6 + $0x260] sm:$0xff]
    %v177 = vld [vmem:[#allocation6 + $0x268] sm:$0xff]
    %v178 = vld [vmem:[#allocation6 + $0x270] sm:$0xff]
    %v179 = vld [vmem:[#allocation6 + $0x278] sm:$0xff]
    %v180 = vld [vmem:[#allocation6 + $0x280] sm:$0xff]
    %v181 = vld [vmem:[#allocation6 + $0x288] sm:$0xff]
    %v182 = vld [vmem:[#allocation6 + $0x290] sm:$0xff]
    %v183 = vld [vmem:[#allocation6 + $0x298] sm:$0xff]
    %v184 = vld [vmem:[#allocation6 + $0x2a0] sm:$0xff]
    %v185 = vld [vmem:[#allocation6 + $0x2a8] sm:$0xff]
    %v186 = vld [vmem:[#allocation6 + $0x2b0] sm:$0xff]
    %v187 = vld [vmem:[#allocation6 + $0x2b8] sm:$0xff]
    %v188 = vld [vmem:[#allocation6 + $0x2c0] sm:$0xff]
    %v189 = vld [vmem:[#allocation6 + $0x2c8] sm:$0xff]
    %v190 = vld [vmem:[#allocation6 + $0x2d0] sm:$0xff]
    %v191 = vld [vmem:[#allocation6 + $0x2d8] sm:$0xff]
    %v192 = vld [vmem:[#allocation6 + $0x2e0] sm:$0xff]
    %v193 = vld [vmem:[#allocation6 + $0x2e8] sm:$0xff]
    %v194 = vld [vmem:[#allocation6 + $0x2f0] sm:$0xff]
    %v195 = vld [vmem:[#allocation6 + $0x2f8] sm:$0xff]
    %v196 = vld [vmem:[#allocation6 + $0x300] sm:$0xff]
    %v197 = vld [vmem:[#allocation6 + $0x308] sm:$0xff]
    %v198 = vld [vmem:[#allocation6 + $0x310] sm:$0xff]
    %v199 = vld [vmem:[#allocation6 + $0x318] sm:$0xff]
    %v200 = vld [vmem:[#allocation6 + $0x320] sm:$0xff]
    %v201 = vld [vmem:[#allocation6 + $0x328] sm:$0xff]
    %v202 = vld [vmem:[#allocation6 + $0x330] sm:$0xff]
    %v203 = vld [vmem:[#allocation6 + $0x338] sm:$0xff]
    %v204 = vld [vmem:[#allocation6 + $0x340] sm:$0xff]
    %v205 = vld [vmem:[#allocation6 + $0x348] sm:$0xff]
    %v206 = vld [vmem:[#allocation6 + $0x350] sm:$0xff]
    %v207 = vld [vmem:[#allocation6 + $0x358] sm:$0xff]
    %v208 = vld [vmem:[#allocation6 + $0x360] sm:$0xff]
    %v209 = vld [vmem:[#allocation6 + $0x368] sm:$0xff]
    %v210 = vld [vmem:[#allocation6 + $0x370] sm:$0xff]
    %v211 = vld [vmem:[#allocation6 + $0x378] sm:$0xff]
    %v212 = vld [vmem:[#allocation6 + $0x380] sm:$0xff]
    %v213 = vld [vmem:[#allocation6 + $0x388] sm:$0xff]
    %v214 = vld [vmem:[#allocation6 + $0x390] sm:$0xff]
    %v215 = vld [vmem:[#allocation6 + $0x398] sm:$0xff]
    %v216 = vld [vmem:[#allocation6 + $0x3a0] sm:$0xff]
    %v217 = vld [vmem:[#allocation6 + $0x3a8] sm:$0xff]
    %v218 = vld [vmem:[#allocation6 + $0x3b0] sm:$0xff]
    %v219 = vld [vmem:[#allocation6 + $0x3b8] sm:$0xff]
    %v220 = vld [vmem:[#allocation6 + $0x3c0] sm:$0xff]
    %v221 = vld [vmem:[#allocation6 + $0x3c8] sm:$0xff]
    %v222 = vld [vmem:[#allocation6 + $0x3d0] sm:$0xff]
    %v223 = vld [vmem:[#allocation6 + $0x3d8] sm:$0xff]
    %v224 = vld [vmem:[#allocation6 + $0x3e0] sm:$0xff]
    %v225 = vld [vmem:[#allocation6 + $0x3e8] sm:$0xff]
    %v226 = vld [vmem:[#allocation6 + $0x3f0] sm:$0xff]
    %v227 = vld [vmem:[#allocation6 + $0x3f8] sm:$0xff]
    %v228 = vld [vmem:[#allocation6 + $0x400] sm:$0xff]
    %v229 = vld [vmem:[#allocation6 + $0x408] sm:$0xff]
    %v230 = vld [vmem:[#allocation6 + $0x410] sm:$0xff]
    %v231 = vld [vmem:[#allocation6 + $0x418] sm:$0xff]
    %v232 = vld [vmem:[#allocation6 + $0x420] sm:$0xff]
    %v233 = vld [vmem:[#allocation6 + $0x428] sm:$0xff]
    %v234 = vld [vmem:[#allocation6 + $0x430] sm:$0xff]
    %v235 = vld [vmem:[#allocation6 + $0x438] sm:$0xff]
    %v236 = vld [vmem:[#allocation6 + $0x440] sm:$0xff]
    %v237 = vld [vmem:[#allocation6 + $0x448] sm:$0xff]
    %v238 = vld [vmem:[#allocation6 + $0x450] sm:$0xff]
    %v239 = vld [vmem:[#allocation6 + $0x458] sm:$0xff]
    %v240 = vld [vmem:[#allocation6 + $0x460] sm:$0xff]
    %v241 = vld [vmem:[#allocation6 + $0x468] sm:$0xff]
    %v242 = vld [vmem:[#allocation6 + $0x470] sm:$0xff]
    %v243 = vld [vmem:[#allocation6 + $0x478] sm:$0xff]
    %v244 = vld [vmem:[#allocation6 + $0x480] sm:$0xff]
    %v245 = vld [vmem:[#allocation6 + $0x488] sm:$0xff]
    %v246 = vld [vmem:[#allocation6 + $0x490] sm:$0xff]
    %v247 = vld [vmem:[#allocation6 + $0x498] sm:$0xff]
    %v248 = vld [vmem:[#allocation6 + $0x4a0] sm:$0xff]
    %v249 = vld [vmem:[#allocation6 + $0x4a8] sm:$0xff]
    %v250 = vld [vmem:[#allocation6 + $0x4b0] sm:$0xff]
    %v251 = vld [vmem:[#allocation6 + $0x4b8] sm:$0xff]
    %v252 = vld [vmem:[#allocation6 + $0x4c0] sm:$0xff]
    %v253 = vld [vmem:[#allocation6 + $0x4c8] sm:$0xff]
    %v254 = vld [vmem:[#allocation6 + $0x4d0] sm:$0xff]
    %v255 = vld [vmem:[#allocation6 + $0x4d8] sm:$0xff]
    %v256 = vld [vmem:[#allocation6 + $0x4e0] sm:$0xff]
    %v257 = vld [vmem:[#allocation6 + $0x4e8] sm:$0xff]
    %v258 = vld [vmem:[#allocation6 + $0x4f0] sm:$0xff]
    %v259 = vld [vmem:[#allocation6 + $0x4f8] sm:$0xff]
    %v260 = vld [vmem:[#allocation6 + $0x500] sm:$0xff]
    %v261 = vld [vmem:[#allocation6 + $0x508] sm:$0xff]
    %v262 = vld [vmem:[#allocation6 + $0x510] sm:$0xff]
    %v263 = vld [vmem:[#allocation6 + $0x518] sm:$0xff]
    %v264 = vld [vmem:[#allocation6 + $0x520] sm:$0xff]
    %v265 = vld [vmem:[#allocation6 + $0x528] sm:$0xff]
    %v266 = vld [vmem:[#allocation6 + $0x530] sm:$0xff]
    %v267 = vld [vmem:[#allocation6 + $0x538] sm:$0xff]
    %v268 = vld [vmem:[#allocation6 + $0x540] sm:$0xff]
    %v269 = vld [vmem:[#allocation6 + $0x548] sm:$0xff]
    %v270 = vld [vmem:[#allocation6 + $0x550] sm:$0xff]
    %v271 = vld [vmem:[#allocation6 + $0x558] sm:$0xff]
    %v272 = vld [vmem:[#allocation6 + $0x560] sm:$0xff]
    %v273 = vld [vmem:[#allocation6 + $0x568] sm:$0xff]
    %v274 = vld [vmem:[#allocation6 + $0x570] sm:$0xff]
    %v275 = vld [vmem:[#allocation6 + $0x578] sm:$0xff]
    %v276 = vld [vmem:[#allocation6 + $0x580] sm:$0xff]
    %v277 = vld [vmem:[#allocation6 + $0x588] sm:$0xff]
    %v278 = vld [vmem:[#allocation6 + $0x590] sm:$0xff]
    %v279 = vld [vmem:[#allocation6 + $0x598] sm:$0xff]
    %v280 = vld [vmem:[#allocation6 + $0x5a0] sm:$0xff]
    %v281 = vld [vmem:[#allocation6 + $0x5a8] sm:$0xff]
    %v282 = vld [vmem:[#allocation6 + $0x5b0] sm:$0xff]
    %v283 = vld [vmem:[#allocation6 + $0x5b8] sm:$0xff]
    %v284 = vld [vmem:[#allocation6 + $0x5c0] sm:$0xff]
    %v285 = vld [vmem:[#allocation6 + $0x5c8] sm:$0xff]
    %v286 = vld [vmem:[#allocation6 + $0x5d0] sm:$0xff]
    %v287 = vld [vmem:[#allocation6 + $0x5d8] sm:$0xff]
    %v288 = vld [vmem:[#allocation6 + $0x5e0] sm:$0xff]
    %v289 = vld [vmem:[#allocation6 + $0x5e8] sm:$0xff]
    %v290 = vld [vmem:[#allocation6 + $0x5f0] sm:$0xff]
    %v291 = vld [vmem:[#allocation6 + $0x5f8] sm:$0xff]
    %v292 = vld [vmem:[#allocation6 + $0x600] sm:$0xff]
    %v293 = vld [vmem:[#allocation6 + $0x608] sm:$0xff]
    %v294 = vld [vmem:[#allocation6 + $0x610] sm:$0xff]
    %v295 = vld [vmem:[#allocation6 + $0x618] sm:$0xff]
    %v296 = vld [vmem:[#allocation6 + $0x620] sm:$0xff]
    %v297 = vld [vmem:[#allocation6 + $0x628] sm:$0xff]
    %v298 = vld [vmem:[#allocation6 + $0x630] sm:$0xff]
    %v299 = vld [vmem:[#allocation6 + $0x638] sm:$0xff]
    %v300 = vld [vmem:[#allocation6 + $0x640] sm:$0xff]
    %v301 = vld [vmem:[#allocation6 + $0x648] sm:$0xff]
    %v302 = vld [vmem:[#allocation6 + $0x650] sm:$0xff]
    %v303 = vld [vmem:[#allocation6 + $0x658] sm:$0xff]
    %v304 = vld [vmem:[#allocation6 + $0x660] sm:$0xff]
    %v305 = vld [vmem:[#allocation6 + $0x668] sm:$0xff]
    %v306 = vld [vmem:[#allocation6 + $0x670] sm:$0xff]
    %v307 = vld [vmem:[#allocation6 + $0x678] sm:$0xff]
    %v308 = vld [vmem:[#allocation6 + $0x680] sm:$0xff]
    %v309 = vld [vmem:[#allocation6 + $0x688] sm:$0xff]
    %v310 = vld [vmem:[#allocation6 + $0x690] sm:$0xff]
    %v311 = vld [vmem:[#allocation6 + $0x698] sm:$0xff]
    %v312 = vld [vmem:[#allocation6 + $0x6a0] sm:$0xff]
    %v313 = vld [vmem:[#allocation6 + $0x6a8] sm:$0xff]
    %v314 = vld [vmem:[#allocation6 + $0x6b0] sm:$0xff]
    %v315 = vld [vmem:[#allocation6 + $0x6b8] sm:$0xff]
    %v316 = vld [vmem:[#allocation6 + $0x6c0] sm:$0xff]
    %v317 = vld [vmem:[#allocation6 + $0x6c8] sm:$0xff]
    %v318 = vld [vmem:[#allocation6 + $0x6d0] sm:$0xff]
    %v319 = vld [vmem:[#allocation6 + $0x6d8] sm:$0xff]
    %v320 = vld [vmem:[#allocation6 + $0x6e0] sm:$0xff]
    %v321 = vld [vmem:[#allocation6 + $0x6e8] sm:$0xff]
    %v322 = vld [vmem:[#allocation6 + $0x6f0] sm:$0xff]
    %v323 = vld [vmem:[#allocation6 + $0x6f8] sm:$0xff]
    %v324 = vld [vmem:[#allocation6 + $0x700] sm:$0xff]
    %v325 = vld [vmem:[#allocation6 + $0x708] sm:$0xff]
    %v326 = vld [vmem:[#allocation6 + $0x710] sm:$0xff]
    %v327 = vld [vmem:[#allocation6 + $0x718] sm:$0xff]
    %v328 = vld [vmem:[#allocation6 + $0x720] sm:$0xff]
    %v329 = vld [vmem:[#allocation6 + $0x728] sm:$0xff]
    %v330 = vld [vmem:[#allocation6 + $0x730] sm:$0xff]
    %v331 = vld [vmem:[#allocation6 + $0x738] sm:$0xff]
    %v332 = vld [vmem:[#allocation6 + $0x740] sm:$0xff]
    %v333 = vld [vmem:[#allocation6 + $0x748] sm:$0xff]
    %v334 = vld [vmem:[#allocation6 + $0x750] sm:$0xff]
    %v335 = vld [vmem:[#allocation6 + $0x758] sm:$0xff]
    %v336 = vld [vmem:[#allocation6 + $0x760] sm:$0xff]
    %v337 = vld [vmem:[#allocation6 + $0x768] sm:$0xff]
    %v338 = vld [vmem:[#allocation6 + $0x770] sm:$0xff]
    %v339 = vld [vmem:[#allocation6 + $0x778] sm:$0xff]
    %v340 = vld [vmem:[#allocation6 + $0x780] sm:$0xff]
    %v341 = vld [vmem:[#allocation6 + $0x788] sm:$0xff]
    %v342 = vld [vmem:[#allocation6 + $0x790] sm:$0xff]
    %v343 = vld [vmem:[#allocation6 + $0x798] sm:$0xff]
    %v344 = vld [vmem:[#allocation6 + $0x7a0] sm:$0xff]
    %v345 = vld [vmem:[#allocation6 + $0x7a8] sm:$0xff]
    %v346 = vld [vmem:[#allocation6 + $0x7b0] sm:$0xff]
    %v347 = vld [vmem:[#allocation6 + $0x7b8] sm:$0xff]
    %v348 = vld [vmem:[#allocation6 + $0x7c0] sm:$0xff]
    %v349 = vld [vmem:[#allocation6 + $0x7c8] sm:$0xff]
    %v350 = vld [vmem:[#allocation6 + $0x7d0] sm:$0xff]
    %v351 = vld [vmem:[#allocation6 + $0x7d8] sm:$0xff]
    %v352 = vld [vmem:[#allocation6 + $0x7e0] sm:$0xff]
    %v353 = vld [vmem:[#allocation6 + $0x7e8] sm:$0xff]
    %v354 = vld [vmem:[#allocation6 + $0x7f0] sm:$0xff]
    %v355 = vld [vmem:[#allocation6 + $0x7f8] sm:$0xff]
    %v356 = vld [vmem:[#allocation6 + $0x800] sm:$0xff]
    %v357 = vld [vmem:[#allocation6 + $0x808] sm:$0xff]
    %v358 = vld [vmem:[#allocation6 + $0x810] sm:$0xff]
    %v359 = vld [vmem:[#allocation6 + $0x818] sm:$0xff]
    %v360 = vld [vmem:[#allocation6 + $0x820] sm:$0xff]
    %v361 = vld [vmem:[#allocation6 + $0x828] sm:$0xff]
    %v362 = vld [vmem:[#allocation6 + $0x830] sm:$0xff]
    %v363 = vld [vmem:[#allocation6 + $0x838] sm:$0xff]
    %v364 = vld [vmem:[#allocation6 + $0x840] sm:$0xff]
    %v365 = vld [vmem:[#allocation6 + $0x848] sm:$0xff]
    %v366 = vld [vmem:[#allocation6 + $0x850] sm:$0xff]
    %v367 = vld [vmem:[#allocation6 + $0x858] sm:$0xff]
    %v368 = vld [vmem:[#allocation6 + $0x860] sm:$0xff]
    %v369 = vld [vmem:[#allocation6 + $0x868] sm:$0xff]
    %v370 = vld [vmem:[#allocation6 + $0x870] sm:$0xff]
    %v371 = vld [vmem:[#allocation6 + $0x878] sm:$0xff]
    %v372 = vld [vmem:[#allocation6 + $0x880] sm:$0xff]
    %v373 = vld [vmem:[#allocation6 + $0x888] sm:$0xff]
    %v374 = vld [vmem:[#allocation6 + $0x890] sm:$0xff]
    %v375 = vld [vmem:[#allocation6 + $0x898] sm:$0xff]
    %v376 = vld [vmem:[#allocation6 + $0x8a0] sm:$0xff]
    %v377 = vld [vmem:[#allocation6 + $0x8a8] sm:$0xff]
    %v378 = vld [vmem:[#allocation6 + $0x8b0] sm:$0xff]
    %v379 = vld [vmem:[#allocation6 + $0x8b8] sm:$0xff]
    %v380 = vld [vmem:[#allocation6 + $0x8c0] sm:$0xff]
    %v381 = vld [vmem:[#allocation6 + $0x8c8] sm:$0xff]
    %v382 = vld [vmem:[#allocation6 + $0x8d0] sm:$0xff]
    %v383 = vld [vmem:[#allocation6 + $0x8d8] sm:$0xff]
    %v384 = vld [vmem:[#allocation6 + $0x8e0] sm:$0xff]
    %v385 = vld [vmem:[#allocation6 + $0x8e8] sm:$0xff]
    %v386 = vld [vmem:[#allocation6 + $0x8f0] sm:$0xff]
    %v387 = vld [vmem:[#allocation6 + $0x8f8] sm:$0xff]
    %v388 = vld [vmem:[#allocation6 + $0x900] sm:$0xff]
    %v389 = vld [vmem:[#allocation6 + $0x908] sm:$0xff]
    %v390 = vld [vmem:[#allocation6 + $0x910] sm:$0xff]
    %v391 = vld [vmem:[#allocation6 + $0x918] sm:$0xff]
    %v392 = vld [vmem:[#allocation6 + $0x920] sm:$0xff]
    %v393 = vld [vmem:[#allocation6 + $0x928] sm:$0xff]
    %v394 = vld [vmem:[#allocation6 + $0x930] sm:$0xff]
    %v395 = vld [vmem:[#allocation6 + $0x938] sm:$0xff]
    %v396 = vld [vmem:[#allocation6 + $0x940] sm:$0xff]
    %v397 = vld [vmem:[#allocation6 + $0x948] sm:$0xff]
    %v398 = vld [vmem:[#allocation6 + $0x950] sm:$0xff]
    %v399 = vld [vmem:[#allocation6 + $0x958] sm:$0xff]
    %v400 = vld [vmem:[#allocation6 + $0x960] sm:$0xff]
    %v401 = vld [vmem:[#allocation6 + $0x968] sm:$0xff]
    %v402 = vld [vmem:[#allocation6 + $0x970] sm:$0xff]
    %v403 = vld [vmem:[#allocation6 + $0x978] sm:$0xff]
    %v404 = vld [vmem:[#allocation6 + $0x980] sm:$0xff]
    %v405 = vld [vmem:[#allocation6 + $0x988] sm:$0xff]
    %v406 = vld [vmem:[#allocation6 + $0x990] sm:$0xff]
    %v407 = vld [vmem:[#allocation6 + $0x998] sm:$0xff]
    %v408 = vld [vmem:[#allocation6 + $0x9a0] sm:$0xff]
    %v409 = vld [vmem:[#allocation6 + $0x9a8] sm:$0xff]
    %v410 = vld [vmem:[#allocation6 + $0x9b0] sm:$0xff]
    %v411 = vld [vmem:[#allocation6 + $0x9b8] sm:$0xff]
    %v412 = vld [vmem:[#allocation6 + $0x9c0] sm:$0xff]
    %v413 = vld [vmem:[#allocation6 + $0x9c8] sm:$0xff]
    %v414 = vld [vmem:[#allocation6 + $0x9d0] sm:$0xff]
    %v415 = vld [vmem:[#allocation6 + $0x9d8] sm:$0xff]
    %v416 = vld [vmem:[#allocation6 + $0x9e0] sm:$0xff]
    %v417 = vld [vmem:[#allocation6 + $0x9e8] sm:$0xff]
    %v418 = vld [vmem:[#allocation6 + $0x9f0] sm:$0xff]
    %v419 = vld [vmem:[#allocation6 + $0x9f8] sm:$0xff]
    %v420 = vld [vmem:[#allocation6 + $0xa00] sm:$0xff]
    %v421 = vld [vmem:[#allocation6 + $0xa08] sm:$0xff]
    %v422 = vld [vmem:[#allocation6 + $0xa10] sm:$0xff]
    %v423 = vld [vmem:[#allocation6 + $0xa18] sm:$0xff]
    %v424 = vld [vmem:[#allocation6 + $0xa20] sm:$0xff]
    %v425 = vld [vmem:[#allocation6 + $0xa28] sm:$0xff]
    %v426 = vld [vmem:[#allocation6 + $0xa30] sm:$0xff]
    %v427 = vld [vmem:[#allocation6 + $0xa38] sm:$0xff]
    %v428 = vld [vmem:[#allocation6 + $0xa40] sm:$0xff]
    %v429 = vld [vmem:[#allocation6 + $0xa48] sm:$0xff]
    %v430 = vld [vmem:[#allocation6 + $0xa50] sm:$0xff]
    %v431 = vld [vmem:[#allocation6 + $0xa58] sm:$0xff]
    %v432 = vld [vmem:[#allocation6 + $0xa60] sm:$0xff]
    %v433 = vld [vmem:[#allocation6 + $0xa68] sm:$0xff]
    %v434 = vld [vmem:[#allocation6 + $0xa70] sm:$0xff]
    %v435 = vld [vmem:[#allocation6 + $0xa78] sm:$0xff]
    %v436 = vld [vmem:[#allocation6 + $0xa80] sm:$0xff]
    %v437 = vld [vmem:[#allocation6 + $0xa88] sm:$0xff]
    %v438 = vld [vmem:[#allocation6 + $0xa90] sm:$0xff]
    %v439 = vld [vmem:[#allocation6 + $0xa98] sm:$0xff]
    %v440 = vld [vmem:[#allocation6 + $0xaa0] sm:$0xff]
    %v441 = vld [vmem:[#allocation6 + $0xaa8] sm:$0xff]
    %v442 = vld [vmem:[#allocation6 + $0xab0] sm:$0xff]
    %v443 = vld [vmem:[#allocation6 + $0xab8] sm:$0xff]
    %v444 = vld [vmem:[#allocation6 + $0xac0] sm:$0xff]
    %v445 = vld [vmem:[#allocation6 + $0xac8] sm:$0xff]
    %v446 = vld [vmem:[#allocation6 + $0xad0] sm:$0xff]
    %v447 = vld [vmem:[#allocation6 + $0xad8] sm:$0xff]
    %v448 = vld [vmem:[#allocation6 + $0xae0] sm:$0xff]
    %v449 = vld [vmem:[#allocation6 + $0xae8] sm:$0xff]
    %v450 = vld [vmem:[#allocation6 + $0xaf0] sm:$0xff]
    %v451 = vld [vmem:[#allocation6 + $0xaf8] sm:$0xff]
    %v452 = vld [vmem:[#allocation6 + $0xb00] sm:$0xff]
    %v453 = vld [vmem:[#allocation6 + $0xb08] sm:$0xff]
    %v454 = vld [vmem:[#allocation6 + $0xb10] sm:$0xff]
    %v455 = vld [vmem:[#allocation6 + $0xb18] sm:$0xff]
    %v456 = vld [vmem:[#allocation6 + $0xb20] sm:$0xff]
    %v457 = vld [vmem:[#allocation6 + $0xb28] sm:$0xff]
    %v458 = vld [vmem:[#allocation6 + $0xb30] sm:$0xff]
    %v459 = vld [vmem:[#allocation6 + $0xb38] sm:$0xff]
    %v460 = vld [vmem:[#allocation6 + $0xb40] sm:$0xff]
    %v461 = vld [vmem:[#allocation6 + $0xb48] sm:$0xff]
    %v462 = vld [vmem:[#allocation6 + $0xb50] sm:$0xff]
    %v463 = vld [vmem:[#allocation6 + $0xb58] sm:$0xff]
    %v464 = vld [vmem:[#allocation6 + $0xb60] sm:$0xff]
    %v465 = vld [vmem:[#allocation6 + $0xb68] sm:$0xff]
    %v466 = vld [vmem:[#allocation6 + $0xb70] sm:$0xff]
    %v467 = vld [vmem:[#allocation6 + $0xb78] sm:$0xff]
    %v468 = vld [vmem:[#allocation6 + $0xb80] sm:$0xff]
    %v469 = vld [vmem:[#allocation6 + $0xb88] sm:$0xff]
    %v470 = vld [vmem:[#allocation6 + $0xb90] sm:$0xff]
    %v471 = vld [vmem:[#allocation6 + $0xb98] sm:$0xff]
    %v472 = vld [vmem:[#allocation6 + $0xba0] sm:$0xff]
    %v473 = vld [vmem:[#allocation6 + $0xba8] sm:$0xff]
    %v474 = vld [vmem:[#allocation6 + $0xbb0] sm:$0xff]
    %v475 = vld [vmem:[#allocation6 + $0xbb8] sm:$0xff]
    %v476 = vld [vmem:[#allocation6 + $0xbc0] sm:$0xff]
    %v477 = vld [vmem:[#allocation6 + $0xbc8] sm:$0xff]
    %v478 = vld [vmem:[#allocation6 + $0xbd0] sm:$0xff]
    %v479 = vld [vmem:[#allocation6 + $0xbd8] sm:$0xff]
    %v480 = vld [vmem:[#allocation6 + $0xbe0] sm:$0xff]
    %v481 = vld [vmem:[#allocation6 + $0xbe8] sm:$0xff]
    %v482 = vld [vmem:[#allocation6 + $0xbf0] sm:$0xff]
    %v483 = vld [vmem:[#allocation6 + $0xbf8] sm:$0xff]
    %v484 = vld [vmem:[#allocation8] sm:$0x1]
    %v486 = vlaneseq
    %v487 = vshrl.u32 %v486, 7
    %v488 = vsub.s32 0, %v487
    %v489 = vrot.slane %v484, %v488
    %v503 = vcombine.high %v88, %v88
    %v504 = vcombine.high %v89, %v89
    %v505 = vcombine.high %v90, %v90
    %v506 = vcombine.high %v91, %v91
    %v507 = vcombine.high %v92, %v92
    %v508 = vcombine.high %v93, %v93
    %v509 = vcombine.high %v94, %v94
    %v510 = vcombine.high %v95, %v95
    %v511 = vcombine.high %v96, %v96
    %v512 = vcombine.high %v97, %v97
    %v513 = vcombine.high %v98, %v98
    %v514 = vcombine.high %v99, %v99
    %527 = vmatprep.subr.mxu0 0.0
    %528 = vmatpush1.msra.mxu0 %v100
    %529 = vmatprep.subr.mxu0 0.0
    %530 = vmatpush1.msra.mxu0 %v101
    %531 = vmatprep.subr.mxu0 0.0
    %532 = vmatpush1.msra.mxu0 %v102
    %533 = vmatprep.subr.mxu0 0.0
    %534 = vmatpush1.msra.mxu0 %v103
    %535 = vmatprep.subr.mxu0 0.0
    %536 = vmatpush1.msra.mxu0 %v104
    %537 = vmatprep.subr.mxu0 0.0
    %538 = vmatpush1.msra.mxu0 %v105
    %539 = vmatprep.subr.mxu0 0.0
    %540 = vmatpush1.msra.mxu0 %v106
    %541 = vmatprep.subr.mxu0 0.0
    %542 = vmatpush1.msra.mxu0 %v107
    %543 = vmatprep.subr.mxu0 0.0
    %544 = vmatpush1.msra.mxu0 %v108
    %545 = vmatprep.subr.mxu0 0.0
    %546 = vmatpush1.msra.mxu0 %v109
    %547 = vmatprep.subr.mxu0 0.0
    %548 = vmatpush1.msra.mxu0 %v110
    %549 = vmatprep.subr.mxu0 0.0
    %550 = vmatpush1.msra.mxu0 %v111
    %551 = vmatprep.subr.mxu0 0.0
    %552 = vmatpush1.msra.mxu0 %v112
    %553 = vmatprep.subr.mxu0 0.0
    %554 = vmatpush1.msra.mxu0 %v113
    %555 = vmatprep.subr.mxu0 0.0
    %556 = vmatpush1.msra.mxu0 %v114
    %557 = vmatprep.subr.mxu0 0.0
    %558 = vmatpush1.msra.mxu0 %v115
    %559 = vmatprep.subr.mxu0 0.0
    %560 = vmatpush1.msra.mxu0 %v116
    %561 = vmatprep.subr.mxu0 0.0
    %562 = vmatpush1.msra.mxu0 %v117
    %563 = vmatprep.subr.mxu0 0.0
    %564 = vmatpush1.msra.mxu0 %v118
    %565 = vmatprep.subr.mxu0 0.0
    %566 = vmatpush1.msra.mxu0 %v119
    %567 = vmatprep.subr.mxu0 0.0
    %568 = vmatpush1.msra.mxu0 %v120
    %569 = vmatprep.subr.mxu0 0.0
    %570 = vmatpush1.msra.mxu0 %v121
    %571 = vmatprep.subr.mxu0 0.0
    %572 = vmatpush1.msra.mxu0 %v122
    %573 = vmatprep.subr.mxu0 0.0
    %574 = vmatpush1.msra.mxu0 %v123
    %575 = vmatprep.subr.mxu0 0.0
    %576 = vmatpush1.msra.mxu0 %v124
    %577 = vmatprep.subr.mxu0 0.0
    %578 = vmatpush1.msra.mxu0 %v125
    %579 = vmatprep.subr.mxu0 0.0
    %580 = vmatpush1.msra.mxu0 %v126
    %581 = vmatprep.subr.mxu0 0.0
    %582 = vmatpush1.msra.mxu0 %v127
    %583 = vmatprep.subr.mxu0 0.0
    %584 = vmatpush1.msra.mxu0 %v128
    %585 = vmatprep.subr.mxu0 0.0
    %586 = vmatpush1.msra.mxu0 %v129
    %587 = vmatprep.subr.mxu0 0.0
    %588 = vmatpush1.msra.mxu0 %v130
    %589 = vmatprep.subr.mxu0 0.0
    %590 = vmatpush1.msra.mxu0 %v131
    %591 = vmatprep.mubr.f32.mxu0 %v503
    %592 = vmatmul.mubr.f32.gmra.mrb[0].mxu0 %v88
    %v593 = vpop.f32.mrb[0].mxu0
    %v594 = vadd.f32 %v489, %v593
    %v595 = vpop.f32.mrb[0].mxu0
    %596 = vdwg.mxu0
    %597 = vmatprep.subr.mxu0 0.0
    %598 = vmatpush1.msra.mxu0 %v132
    %599 = vmatprep.subr.mxu0 0.0
    %600 = vmatpush1.msra.mxu0 %v133
    %601 = vmatprep.subr.mxu0 0.0
    %602 = vmatpush1.msra.mxu0 %v134
    %603 = vmatprep.subr.mxu0 0.0
    %604 = vmatpush1.msra.mxu0 %v135
    %605 = vmatprep.subr.mxu0 0.0
    %606 = vmatpush1.msra.mxu0 %v136
    %607 = vmatprep.subr.mxu0 0.0
    %608 = vmatpush1.msra.mxu0 %v137
    %609 = vmatprep.subr.mxu0 0.0
    %610 = vmatpush1.msra.mxu0 %v138
    %611 = vmatprep.subr.mxu0 0.0
    %612 = vmatpush1.msra.mxu0 %v139
    %613 = vmatprep.subr.mxu0 0.0
    %614 = vmatpush1.msra.mxu0 %v140
    %615 = vmatprep.subr.mxu0 0.0
    %616 = vmatpush1.msra.mxu0 %v141
    %617 = vmatprep.subr.mxu0 0.0
    %618 = vmatpush1.msra.mxu0 %v142
    %619 = vmatprep.subr.mxu0 0.0
    %620 = vmatpush1.msra.mxu0 %v143
    %621 = vmatprep.subr.mxu0 0.0
    %622 = vmatpush1.msra.mxu0 %v144
    %623 = vmatprep.subr.mxu0 0.0
    %624 = vmatpush1.msra.mxu0 %v145
    %625 = vmatprep.subr.mxu0 0.0
    %626 = vmatpush1.msra.mxu0 %v146
    %627 = vmatprep.subr.mxu0 0.0
    %628 = vmatpush1.msra.mxu0 %v147
    %629 = vmatprep.subr.mxu0 0.0
    %630 = vmatpush1.msra.mxu0 %v148
    %631 = vmatprep.subr.mxu0 0.0
    %632 = vmatpush1.msra.mxu0 %v149
    %633 = vmatprep.subr.mxu0 0.0
    %634 = vmatpush1.msra.mxu0 %v150
    %635 = vmatprep.subr.mxu0 0.0
    %636 = vmatpush1.msra.mxu0 %v151
    %637 = vmatprep.subr.mxu0 0.0
    %638 = vmatpush1.msra.mxu0 %v152
    %639 = vmatprep.subr.mxu0 0.0
    %640 = vmatpush1.msra.mxu0 %v153
    %641 = vmatprep.subr.mxu0 0.0
    %642 = vmatpush1.msra.mxu0 %v154
    %643 = vmatprep.subr.mxu0 0.0
    %644 = vmatpush1.msra.mxu0 %v155
    %645 = vmatprep.subr.mxu0 0.0
    %646 = vmatpush1.msra.mxu0 %v156
    %647 = vmatprep.subr.mxu0 0.0
    %648 = vmatpush1.msra.mxu0 %v157
    %649 = vmatprep.subr.mxu0 0.0
    %650 = vmatpush1.msra.mxu0 %v158
    %651 = vmatprep.subr.mxu0 0.0
    %652 = vmatpush1.msra.mxu0 %v159
    %653 = vmatprep.subr.mxu0 0.0
    %654 = vmatpush1.msra.mxu0 %v160
    %655 = vmatprep.subr.mxu0 0.0
    %656 = vmatpush1.msra.mxu0 %v161
    %657 = vmatprep.subr.mxu0 0.0
    %658 = vmatpush1.msra.mxu0 %v162
    %659 = vmatprep.subr.mxu0 0.0
    %660 = vmatpush1.msra.mxu0 %v163
    %661 = vmatprep.mubr.f32.mxu0 %v504
    %662 = vmatmul.mubr.f32.gmra.mrb[0].mxu0 %v89
    %v663 = vpop.f32.mrb[0].mxu0
    %v664 = vadd.f32 %v594, %v663
    %v665 = vpop.f32.mrb[0].mxu0
    %666 = vdwg.mxu0
    %667 = vmatprep.subr.mxu0 0.0
    %668 = vmatpush1.msra.mxu0 %v164
    %669 = vmatprep.subr.mxu0 0.0
    %670 = vmatpush1.msra.mxu0 %v165
    %671 = vmatprep.subr.mxu0 0.0
    %672 = vmatpush1.msra.mxu0 %v166
    %673 = vmatprep.subr.mxu0 0.0
    %674 = vmatpush1.msra.mxu0 %v167
    %675 = vmatprep.subr.mxu0 0.0
    %676 = vmatpush1.msra.mxu0 %v168
    %677 = vmatprep.subr.mxu0 0.0
    %678 = vmatpush1.msra.mxu0 %v169
    %679 = vmatprep.subr.mxu0 0.0
    %680 = vmatpush1.msra.mxu0 %v170
    %681 = vmatprep.subr.mxu0 0.0
    %682 = vmatpush1.msra.mxu0 %v171
    %683 = vmatprep.subr.mxu0 0.0
    %684 = vmatpush1.msra.mxu0 %v172
    %685 = vmatprep.subr.mxu0 0.0
    %686 = vmatpush1.msra.mxu0 %v173
    %687 = vmatprep.subr.mxu0 0.0
    %688 = vmatpush1.msra.mxu0 %v174
    %689 = vmatprep.subr.mxu0 0.0
    %690 = vmatpush1.msra.mxu0 %v175
    %691 = vmatprep.subr.mxu0 0.0
    %692 = vmatpush1.msra.mxu0 %v176
    %693 = vmatprep.subr.mxu0 0.0
    %694 = vmatpush1.msra.mxu0 %v177
    %695 = vmatprep.subr.mxu0 0.0
    %696 = vmatpush1.msra.mxu0 %v178
    %697 = vmatprep.subr.mxu0 0.0
    %698 = vmatpush1.msra.mxu0 %v179
    %699 = vmatprep.subr.mxu0 0.0
    %700 = vmatpush1.msra.mxu0 %v180
    %701 = vmatprep.subr.mxu0 0.0
    %702 = vmatpush1.msra.mxu0 %v181
    %703 = vmatprep.subr.mxu0 0.0
    %704 = vmatpush1.msra.mxu0 %v182
    %705 = vmatprep.subr.mxu0 0.0
    %706 = vmatpush1.msra.mxu0 %v183
    %707 = vmatprep.subr.mxu0 0.0
    %708 = vmatpush1.msra.mxu0 %v184
    %709 = vmatprep.subr.mxu0 0.0
    %710 = vmatpush1.msra.mxu0 %v185
    %711 = vmatprep.subr.mxu0 0.0
    %712 = vmatpush1.msra.mxu0 %v186
    %713 = vmatprep.subr.mxu0 0.0
    %714 = vmatpush1.msra.mxu0 %v187
    %715 = vmatprep.subr.mxu0 0.0
    %716 = vmatpush1.msra.mxu0 %v188
    %717 = vmatprep.subr.mxu0 0.0
    %718 = vmatpush1.msra.mxu0 %v189
    %719 = vmatprep.subr.mxu0 0.0
    %720 = vmatpush1.msra.mxu0 %v190
    %721 = vmatprep.subr.mxu0 0.0
    %722 = vmatpush1.msra.mxu0 %v191
    %723 = vmatprep.subr.mxu0 0.0
    %724 = vmatpush1.msra.mxu0 %v192
    %725 = vmatprep.subr.mxu0 0.0
    %726 = vmatpush1.msra.mxu0 %v193
    %727 = vmatprep.subr.mxu0 0.0
    %728 = vmatpush1.msra.mxu0 %v194
    %729 = vmatprep.subr.mxu0 0.0
    %730 = vmatpush1.msra.mxu0 %v195
    %731 = vmatprep.mubr.f32.mxu0 %v505
    %732 = vmatmul.mubr.f32.gmra.mrb[0].mxu0 %v90
    %v733 = vpop.f32.mrb[0].mxu0
    %v734 = vadd.f32 %v664, %v733
    %v735 = vpop.f32.mrb[0].mxu0
    %736 = vdwg.mxu0
    %737 = vmatprep.subr.mxu0 0.0
    %738 = vmatpush1.msra.mxu0 %v196
    %739 = vmatprep.subr.mxu0 0.0
    %740 = vmatpush1.msra.mxu0 %v197
    %741 = vmatprep.subr.mxu0 0.0
    %742 = vmatpush1.msra.mxu0 %v198
    %743 = vmatprep.subr.mxu0 0.0
    %744 = vmatpush1.msra.mxu0 %v199
    %745 = vmatprep.subr.mxu0 0.0
    %746 = vmatpush1.msra.mxu0 %v200
    %747 = vmatprep.subr.mxu0 0.0
    %748 = vmatpush1.msra.mxu0 %v201
    %749 = vmatprep.subr.mxu0 0.0
    %750 = vmatpush1.msra.mxu0 %v202
    %751 = vmatprep.subr.mxu0 0.0
    %752 = vmatpush1.msra.mxu0 %v203
    %753 = vmatprep.subr.mxu0 0.0
    %754 = vmatpush1.msra.mxu0 %v204
    %755 = vmatprep.subr.mxu0 0.0
    %756 = vmatpush1.msra.mxu0 %v205
    %757 = vmatprep.subr.mxu0 0.0
    %758 = vmatpush1.msra.mxu0 %v206
    %759 = vmatprep.subr.mxu0 0.0
    %760 = vmatpush1.msra.mxu0 %v207
    %761 = vmatprep.subr.mxu0 0.0
    %762 = vmatpush1.msra.mxu0 %v208
    %763 = vmatprep.subr.mxu0 0.0
    %764 = vmatpush1.msra.mxu0 %v209
    %765 = vmatprep.subr.mxu0 0.0
    %766 = vmatpush1.msra.mxu0 %v210
    %767 = vmatprep.subr.mxu0 0.0
    %768 = vmatpush1.msra.mxu0 %v211
    %769 = vmatprep.subr.mxu0 0.0
    %770 = vmatpush1.msra.mxu0 %v212
    %771 = vmatprep.subr.mxu0 0.0
    %772 = vmatpush1.msra.mxu0 %v213
    %773 = vmatprep.subr.mxu0 0.0
    %774 = vmatpush1.msra.mxu0 %v214
    %775 = vmatprep.subr.mxu0 0.0
    %776 = vmatpush1.msra.mxu0 %v215
    %777 = vmatprep.subr.mxu0 0.0
    %778 = vmatpush1.msra.mxu0 %v216
    %779 = vmatprep.subr.mxu0 0.0
    %780 = vmatpush1.msra.mxu0 %v217
    %781 = vmatprep.subr.mxu0 0.0
    %782 = vmatpush1.msra.mxu0 %v218
    %783 = vmatprep.subr.mxu0 0.0
    %784 = vmatpush1.msra.mxu0 %v219
    %785 = vmatprep.subr.mxu0 0.0
    %786 = vmatpush1.msra.mxu0 %v220
    %787 = vmatprep.subr.mxu0 0.0
    %788 = vmatpush1.msra.mxu0 %v221
    %789 = vmatprep.subr.mxu0 0.0
    %790 = vmatpush1.msra.mxu0 %v222
    %791 = vmatprep.subr.mxu0 0.0
    %792 = vmatpush1.msra.mxu0 %v223
    %793 = vmatprep.subr.mxu0 0.0
    %794 = vmatpush1.msra.mxu0 %v224
    %795 = vmatprep.subr.mxu0 0.0
    %796 = vmatpush1.msra.mxu0 %v225
    %797 = vmatprep.subr.mxu0 0.0
    %798 = vmatpush1.msra.mxu0 %v226
    %799 = vmatprep.subr.mxu0 0.0
    %800 = vmatpush1.msra.mxu0 %v227
    %801 = vmatprep.mubr.f32.mxu0 %v506
    %802 = vmatmul.mubr.f32.gmra.mrb[0].mxu0 %v91
    %v803 = vpop.f32.mrb[0].mxu0
    %v804 = vadd.f32 %v734, %v803
    %v805 = vpop.f32.mrb[0].mxu0
    %806 = vdwg.mxu0
    %807 = vmatprep.subr.mxu0 0.0
    %808 = vmatpush1.msra.mxu0 %v228
    %809 = vmatprep.subr.mxu0 0.0
    %810 = vmatpush1.msra.mxu0 %v229
    %811 = vmatprep.subr.mxu0 0.0
    %812 = vmatpush1.msra.mxu0 %v230
    %813 = vmatprep.subr.mxu0 0.0
    %814 = vmatpush1.msra.mxu0 %v231
    %815 = vmatprep.subr.mxu0 0.0
    %816 = vmatpush1.msra.mxu0 %v232
    %817 = vmatprep.subr.mxu0 0.0
    %818 = vmatpush1.msra.mxu0 %v233
    %819 = vmatprep.subr.mxu0 0.0
    %820 = vmatpush1.msra.mxu0 %v234
    %821 = vmatprep.subr.mxu0 0.0
    %822 = vmatpush1.msra.mxu0 %v235
    %823 = vmatprep.subr.mxu0 0.0
    %824 = vmatpush1.msra.mxu0 %v236
    %825 = vmatprep.subr.mxu0 0.0
    %826 = vmatpush1.msra.mxu0 %v237
    %827 = vmatprep.subr.mxu0 0.0
    %828 = vmatpush1.msra.mxu0 %v238
    %829 = vmatprep.subr.mxu0 0.0
    %830 = vmatpush1.msra.mxu0 %v239
    %831 = vmatprep.subr.mxu0 0.0
    %832 = vmatpush1.msra.mxu0 %v240
    %833 = vmatprep.subr.mxu0 0.0
    %834 = vmatpush1.msra.mxu0 %v241
    %835 = vmatprep.subr.mxu0 0.0
    %836 = vmatpush1.msra.mxu0 %v242
    %837 = vmatprep.subr.mxu0 0.0
    %838 = vmatpush1.msra.mxu0 %v243
    %839 = vmatprep.subr.mxu0 0.0
    %840 = vmatpush1.msra.mxu0 %v244
    %841 = vmatprep.subr.mxu0 0.0
    %842 = vmatpush1.msra.mxu0 %v245
    %843 = vmatprep.subr.mxu0 0.0
    %844 = vmatpush1.msra.mxu0 %v246
    %845 = vmatprep.subr.mxu0 0.0
    %846 = vmatpush1.msra.mxu0 %v247
    %847 = vmatprep.subr.mxu0 0.0
    %848 = vmatpush1.msra.mxu0 %v248
    %849 = vmatprep.subr.mxu0 0.0
    %850 = vmatpush1.msra.mxu0 %v249
    %851 = vmatprep.subr.mxu0 0.0
    %852 = vmatpush1.msra.mxu0 %v250
    %853 = vmatprep.subr.mxu0 0.0
    %854 = vmatpush1.msra.mxu0 %v251
    %855 = vmatprep.subr.mxu0 0.0
    %856 = vmatpush1.msra.mxu0 %v252
    %857 = vmatprep.subr.mxu0 0.0
    %858 = vmatpush1.msra.mxu0 %v253
    %859 = vmatprep.subr.mxu0 0.0
    %860 = vmatpush1.msra.mxu0 %v254
    %861 = vmatprep.subr.mxu0 0.0
    %862 = vmatpush1.msra.mxu0 %v255
    %863 = vmatprep.subr.mxu0 0.0
    %864 = vmatpush1.msra.mxu0 %v256
    %865 = vmatprep.subr.mxu0 0.0
    %866 = vmatpush1.msra.mxu0 %v257
    %867 = vmatprep.subr.mxu0 0.0
    %868 = vmatpush1.msra.mxu0 %v258
    %869 = vmatprep.subr.mxu0 0.0
    %870 = vmatpush1.msra.mxu0 %v259
    %871 = vmatprep.mubr.f32.mxu0 %v507
    %872 = vmatmul.mubr.f32.gmra.mrb[0].mxu0 %v92
    %v873 = vpop.f32.mrb[0].mxu0
    %v874 = vadd.f32 %v804, %v873
    %v875 = vpop.f32.mrb[0].mxu0
    %876 = vdwg.mxu0
    %877 = vmatprep.subr.mxu0 0.0
    %878 = vmatpush1.msra.mxu0 %v260
    %879 = vmatprep.subr.mxu0 0.0
    %880 = vmatpush1.msra.mxu0 %v261
    %881 = vmatprep.subr.mxu0 0.0
    %882 = vmatpush1.msra.mxu0 %v262
    %883 = vmatprep.subr.mxu0 0.0
    %884 = vmatpush1.msra.mxu0 %v263
    %885 = vmatprep.subr.mxu0 0.0
    %886 = vmatpush1.msra.mxu0 %v264
    %887 = vmatprep.subr.mxu0 0.0
    %888 = vmatpush1.msra.mxu0 %v265
    %889 = vmatprep.subr.mxu0 0.0
    %890 = vmatpush1.msra.mxu0 %v266
    %891 = vmatprep.subr.mxu0 0.0
    %892 = vmatpush1.msra.mxu0 %v267
    %893 = vmatprep.subr.mxu0 0.0
    %894 = vmatpush1.msra.mxu0 %v268
    %895 = vmatprep.subr.mxu0 0.0
    %896 = vmatpush1.msra.mxu0 %v269
    %897 = vmatprep.subr.mxu0 0.0
    %898 = vmatpush1.msra.mxu0 %v270
    %899 = vmatprep.subr.mxu0 0.0
    %900 = vmatpush1.msra.mxu0 %v271
    %901 = vmatprep.subr.mxu0 0.0
    %902 = vmatpush1.msra.mxu0 %v272
    %903 = vmatprep.subr.mxu0 0.0
    %904 = vmatpush1.msra.mxu0 %v273
    %905 = vmatprep.subr.mxu0 0.0
    %906 = vmatpush1.msra.mxu0 %v274
    %907 = vmatprep.subr.mxu0 0.0
    %908 = vmatpush1.msra.mxu0 %v275
    %909 = vmatprep.subr.mxu0 0.0
    %910 = vmatpush1.msra.mxu0 %v276
    %911 = vmatprep.subr.mxu0 0.0
    %912 = vmatpush1.msra.mxu0 %v277
    %913 = vmatprep.subr.mxu0 0.0
    %914 = vmatpush1.msra.mxu0 %v278
    %915 = vmatprep.subr.mxu0 0.0
    %916 = vmatpush1.msra.mxu0 %v279
    %917 = vmatprep.subr.mxu0 0.0
    %918 = vmatpush1.msra.mxu0 %v280
    %919 = vmatprep.subr.mxu0 0.0
    %920 = vmatpush1.msra.mxu0 %v281
    %921 = vmatprep.subr.mxu0 0.0
    %922 = vmatpush1.msra.mxu0 %v282
    %923 = vmatprep.subr.mxu0 0.0
    %924 = vmatpush1.msra.mxu0 %v283
    %925 = vmatprep.subr.mxu0 0.0
    %926 = vmatpush1.msra.mxu0 %v284
    %927 = vmatprep.subr.mxu0 0.0
    %928 = vmatpush1.msra.mxu0 %v285
    %929 = vmatprep.subr.mxu0 0.0
    %930 = vmatpush1.msra.mxu0 %v286
    %931 = vmatprep.subr.mxu0 0.0
    %932 = vmatpush1.msra.mxu0 %v287
    %933 = vmatprep.subr.mxu0 0.0
    %934 = vmatpush1.msra.mxu0 %v288
    %935 = vmatprep.subr.mxu0 0.0
    %936 = vmatpush1.msra.mxu0 %v289
    %937 = vmatprep.subr.mxu0 0.0
    %938 = vmatpush1.msra.mxu0 %v290
    %939 = vmatprep.subr.mxu0 0.0
    %940 = vmatpush1.msra.mxu0 %v291
    %941 = vmatprep.mubr.f32.mxu0 %v508
    %942 = vmatmul.mubr.f32.gmra.mrb[0].mxu0 %v93
    %v943 = vpop.f32.mrb[0].mxu0
    %v944 = vadd.f32 %v874, %v943
    %v945 = vpop.f32.mrb[0].mxu0
    %946 = vdwg.mxu0
    %947 = vmatprep.subr.mxu0 0.0
    %948 = vmatpush1.msra.mxu0 %v292
    %949 = vmatprep.subr.mxu0 0.0
    %950 = vmatpush1.msra.mxu0 %v293
    %951 = vmatprep.subr.mxu0 0.0
    %952 = vmatpush1.msra.mxu0 %v294
    %953 = vmatprep.subr.mxu0 0.0
    %954 = vmatpush1.msra.mxu0 %v295
    %955 = vmatprep.subr.mxu0 0.0
    %956 = vmatpush1.msra.mxu0 %v296
    %957 = vmatprep.subr.mxu0 0.0
    %958 = vmatpush1.msra.mxu0 %v297
    %959 = vmatprep.subr.mxu0 0.0
    %960 = vmatpush1.msra.mxu0 %v298
    %961 = vmatprep.subr.mxu0 0.0
    %962 = vmatpush1.msra.mxu0 %v299
    %963 = vmatprep.subr.mxu0 0.0
    %964 = vmatpush1.msra.mxu0 %v300
    %965 = vmatprep.subr.mxu0 0.0
    %966 = vmatpush1.msra.mxu0 %v301
    %967 = vmatprep.subr.mxu0 0.0
    %968 = vmatpush1.msra.mxu0 %v302
    %969 = vmatprep.subr.mxu0 0.0
    %970 = vmatpush1.msra.mxu0 %v303
    %971 = vmatprep.subr.mxu0 0.0
    %972 = vmatpush1.msra.mxu0 %v304
    %973 = vmatprep.subr.mxu0 0.0
    %974 = vmatpush1.msra.mxu0 %v305
    %975 = vmatprep.subr.mxu0 0.0
    %976 = vmatpush1.msra.mxu0 %v306
    %977 = vmatprep.subr.mxu0 0.0
    %978 = vmatpush1.msra.mxu0 %v307
    %979 = vmatprep.subr.mxu0 0.0
    %980 = vmatpush1.msra.mxu0 %v308
    %981 = vmatprep.subr.mxu0 0.0
    %982 = vmatpush1.msra.mxu0 %v309
    %983 = vmatprep.subr.mxu0 0.0
    %984 = vmatpush1.msra.mxu0 %v310
    %985 = vmatprep.subr.mxu0 0.0
    %986 = vmatpush1.msra.mxu0 %v311
    %987 = vmatprep.subr.mxu0 0.0
    %988 = vmatpush1.msra.mxu0 %v312
    %989 = vmatprep.subr.mxu0 0.0
    %990 = vmatpush1.msra.mxu0 %v313
    %991 = vmatprep.subr.mxu0 0.0
    %992 = vmatpush1.msra.mxu0 %v314
    %993 = vmatprep.subr.mxu0 0.0
    %994 = vmatpush1.msra.mxu0 %v315
    %995 = vmatprep.subr.mxu0 0.0
    %996 = vmatpush1.msra.mxu0 %v316
    %997 = vmatprep.subr.mxu0 0.0
    %998 = vmatpush1.msra.mxu0 %v317
    %999 = vmatprep.subr.mxu0 0.0
    %1000 = vmatpush1.msra.mxu0 %v318
    %1001 = vmatprep.subr.mxu0 0.0
    %1002 = vmatpush1.msra.mxu0 %v319
    %1003 = vmatprep.subr.mxu0 0.0
    %1004 = vmatpush1.msra.mxu0 %v320
    %1005 = vmatprep.subr.mxu0 0.0
    %1006 = vmatpush1.msra.mxu0 %v321
    %1007 = vmatprep.subr.mxu0 0.0
    %1008 = vmatpush1.msra.mxu0 %v322
    %1009 = vmatprep.subr.mxu0 0.0
    %1010 = vmatpush1.msra.mxu0 %v323
    %1011 = vmatprep.mubr.f32.mxu0 %v509
    %1012 = vmatmul.mubr.f32.gmra.mrb[0].mxu0 %v94
    %v1013 = vpop.f32.mrb[0].mxu0
    %v1014 = vadd.f32 %v944, %v1013
    %v1015 = vpop.f32.mrb[0].mxu0
    %1016 = vdwg.mxu0
    %1017 = vmatprep.subr.mxu0 0.0
    %1018 = vmatpush1.msra.mxu0 %v324
    %1019 = vmatprep.subr.mxu0 0.0
    %1020 = vmatpush1.msra.mxu0 %v325
    %1021 = vmatprep.subr.mxu0 0.0
    %1022 = vmatpush1.msra.mxu0 %v326
    %1023 = vmatprep.subr.mxu0 0.0
    %1024 = vmatpush1.msra.mxu0 %v327
    %1025 = vmatprep.subr.mxu0 0.0
    %1026 = vmatpush1.msra.mxu0 %v328
    %1027 = vmatprep.subr.mxu0 0.0
    %1028 = vmatpush1.msra.mxu0 %v329
    %1029 = vmatprep.subr.mxu0 0.0
    %1030 = vmatpush1.msra.mxu0 %v330
    %1031 = vmatprep.subr.mxu0 0.0
    %1032 = vmatpush1.msra.mxu0 %v331
    %1033 = vmatprep.subr.mxu0 0.0
    %1034 = vmatpush1.msra.mxu0 %v332
    %1035 = vmatprep.subr.mxu0 0.0
    %1036 = vmatpush1.msra.mxu0 %v333
    %1037 = vmatprep.subr.mxu0 0.0
    %1038 = vmatpush1.msra.mxu0 %v334
    %1039 = vmatprep.subr.mxu0 0.0
    %1040 = vmatpush1.msra.mxu0 %v335
    %1041 = vmatprep.subr.mxu0 0.0
    %1042 = vmatpush1.msra.mxu0 %v336
    %1043 = vmatprep.subr.mxu0 0.0
    %1044 = vmatpush1.msra.mxu0 %v337
    %1045 = vmatprep.subr.mxu0 0.0
    %1046 = vmatpush1.msra.mxu0 %v338
    %1047 = vmatprep.subr.mxu0 0.0
    %1048 = vmatpush1.msra.mxu0 %v339
    %1049 = vmatprep.subr.mxu0 0.0
    %1050 = vmatpush1.msra.mxu0 %v340
    %1051 = vmatprep.subr.mxu0 0.0
    %1052 = vmatpush1.msra.mxu0 %v341
    %1053 = vmatprep.subr.mxu0 0.0
    %1054 = vmatpush1.msra.mxu0 %v342
    %1055 = vmatprep.subr.mxu0 0.0
    %1056 = vmatpush1.msra.mxu0 %v343
    %1057 = vmatprep.subr.mxu0 0.0
    %1058 = vmatpush1.msra.mxu0 %v344
    %1059 = vmatprep.subr.mxu0 0.0
    %1060 = vmatpush1.msra.mxu0 %v345
    %1061 = vmatprep.subr.mxu0 0.0
    %1062 = vmatpush1.msra.mxu0 %v346
    %1063 = vmatprep.subr.mxu0 0.0
    %1064 = vmatpush1.msra.mxu0 %v347
    %1065 = vmatprep.subr.mxu0 0.0
    %1066 = vmatpush1.msra.mxu0 %v348
    %1067 = vmatprep.subr.mxu0 0.0
    %1068 = vmatpush1.msra.mxu0 %v349
    %1069 = vmatprep.subr.mxu0 0.0
    %1070 = vmatpush1.msra.mxu0 %v350
    %1071 = vmatprep.subr.mxu0 0.0
    %1072 = vmatpush1.msra.mxu0 %v351
    %1073 = vmatprep.subr.mxu0 0.0
    %1074 = vmatpush1.msra.mxu0 %v352
    %1075 = vmatprep.subr.mxu0 0.0
    %1076 = vmatpush1.msra.mxu0 %v353
    %1077 = vmatprep.subr.mxu0 0.0
    %1078 = vmatpush1.msra.mxu0 %v354
    %1079 = vmatprep.subr.mxu0 0.0
    %1080 = vmatpush1.msra.mxu0 %v355
    %1081 = vmatprep.mubr.f32.mxu0 %v510
    %1082 = vmatmul.mubr.f32.gmra.mrb[0].mxu0 %v95
    %v1083 = vpop.f32.mrb[0].mxu0
    %v1084 = vadd.f32 %v1014, %v1083
    %v1085 = vpop.f32.mrb[0].mxu0
    %1086 = vdwg.mxu0
    %1087 = vmatprep.subr.mxu0 0.0
    %1088 = vmatpush1.msra.mxu0 %v356
    %1089 = vmatprep.subr.mxu0 0.0
    %1090 = vmatpush1.msra.mxu0 %v357
    %1091 = vmatprep.subr.mxu0 0.0
    %1092 = vmatpush1.msra.mxu0 %v358
    %1093 = vmatprep.subr.mxu0 0.0
    %1094 = vmatpush1.msra.mxu0 %v359
    %1095 = vmatprep.subr.mxu0 0.0
    %1096 = vmatpush1.msra.mxu0 %v360
    %1097 = vmatprep.subr.mxu0 0.0
    %1098 = vmatpush1.msra.mxu0 %v361
    %1099 = vmatprep.subr.mxu0 0.0
    %1100 = vmatpush1.msra.mxu0 %v362
    %1101 = vmatprep.subr.mxu0 0.0
    %1102 = vmatpush1.msra.mxu0 %v363
    %1103 = vmatprep.subr.mxu0 0.0
    %1104 = vmatpush1.msra.mxu0 %v364
    %1105 = vmatprep.subr.mxu0 0.0
    %1106 = vmatpush1.msra.mxu0 %v365
    %1107 = vmatprep.subr.mxu0 0.0
    %1108 = vmatpush1.msra.mxu0 %v366
    %1109 = vmatprep.subr.mxu0 0.0
    %1110 = vmatpush1.msra.mxu0 %v367
    %1111 = vmatprep.subr.mxu0 0.0
    %1112 = vmatpush1.msra.mxu0 %v368
    %1113 = vmatprep.subr.mxu0 0.0
    %1114 = vmatpush1.msra.mxu0 %v369
    %1115 = vmatprep.subr.mxu0 0.0
    %1116 = vmatpush1.msra.mxu0 %v370
    %1117 = vmatprep.subr.mxu0 0.0
    %1118 = vmatpush1.msra.mxu0 %v371
    %1119 = vmatprep.subr.mxu0 0.0
    %1120 = vmatpush1.msra.mxu0 %v372
    %1121 = vmatprep.subr.mxu0 0.0
    %1122 = vmatpush1.msra.mxu0 %v373
    %1123 = vmatprep.subr.mxu0 0.0
    %1124 = vmatpush1.msra.mxu0 %v374
    %1125 = vmatprep.subr.mxu0 0.0
    %1126 = vmatpush1.msra.mxu0 %v375
    %1127 = vmatprep.subr.mxu0 0.0
    %1128 = vmatpush1.msra.mxu0 %v376
    %1129 = vmatprep.subr.mxu0 0.0
    %1130 = vmatpush1.msra.mxu0 %v377
    %1131 = vmatprep.subr.mxu0 0.0
    %1132 = vmatpush1.msra.mxu0 %v378
    %1133 = vmatprep.subr.mxu0 0.0
    %1134 = vmatpush1.msra.mxu0 %v379
    %1135 = vmatprep.subr.mxu0 0.0
    %1136 = vmatpush1.msra.mxu0 %v380
    %1137 = vmatprep.subr.mxu0 0.0
    %1138 = vmatpush1.msra.mxu0 %v381
    %1139 = vmatprep.subr.mxu0 0.0
    %1140 = vmatpush1.msra.mxu0 %v382
    %1141 = vmatprep.subr.mxu0 0.0
    %1142 = vmatpush1.msra.mxu0 %v383
    %1143 = vmatprep.subr.mxu0 0.0
    %1144 = vmatpush1.msra.mxu0 %v384
    %1145 = vmatprep.subr.mxu0 0.0
    %1146 = vmatpush1.msra.mxu0 %v385
    %1147 = vmatprep.subr.mxu0 0.0
    %1148 = vmatpush1.msra.mxu0 %v386
    %1149 = vmatprep.subr.mxu0 0.0
    %1150 = vmatpush1.msra.mxu0 %v387
    %1151 = vmatprep.mubr.f32.mxu0 %v511
    %1152 = vmatmul.mubr.f32.gmra.mrb[0].mxu0 %v96
    %v1153 = vpop.f32.mrb[0].mxu0
    %v1154 = vadd.f32 %v1084, %v1153
    %v1155 = vpop.f32.mrb[0].mxu0
    %1156 = vdwg.mxu0
    %1157 = vmatprep.subr.mxu0 0.0
    %1158 = vmatpush1.msra.mxu0 %v388
    %1159 = vmatprep.subr.mxu0 0.0
    %1160 = vmatpush1.msra.mxu0 %v389
    %1161 = vmatprep.subr.mxu0 0.0
    %1162 = vmatpush1.msra.mxu0 %v390
    %1163 = vmatprep.subr.mxu0 0.0
    %1164 = vmatpush1.msra.mxu0 %v391
    %1165 = vmatprep.subr.mxu0 0.0
    %1166 = vmatpush1.msra.mxu0 %v392
    %1167 = vmatprep.subr.mxu0 0.0
    %1168 = vmatpush1.msra.mxu0 %v393
    %1169 = vmatprep.subr.mxu0 0.0
    %1170 = vmatpush1.msra.mxu0 %v394
    %1171 = vmatprep.subr.mxu0 0.0
    %1172 = vmatpush1.msra.mxu0 %v395
    %1173 = vmatprep.subr.mxu0 0.0
    %1174 = vmatpush1.msra.mxu0 %v396
    %1175 = vmatprep.subr.mxu0 0.0
    %1176 = vmatpush1.msra.mxu0 %v397
    %1177 = vmatprep.subr.mxu0 0.0
    %1178 = vmatpush1.msra.mxu0 %v398
    %1179 = vmatprep.subr.mxu0 0.0
    %1180 = vmatpush1.msra.mxu0 %v399
    %1181 = vmatprep.subr.mxu0 0.0
    %1182 = vmatpush1.msra.mxu0 %v400
    %1183 = vmatprep.subr.mxu0 0.0
    %1184 = vmatpush1.msra.mxu0 %v401
    %1185 = vmatprep.subr.mxu0 0.0
    %1186 = vmatpush1.msra.mxu0 %v402
    %1187 = vmatprep.subr.mxu0 0.0
    %1188 = vmatpush1.msra.mxu0 %v403
    %1189 = vmatprep.subr.mxu0 0.0
    %1190 = vmatpush1.msra.mxu0 %v404
    %1191 = vmatprep.subr.mxu0 0.0
    %1192 = vmatpush1.msra.mxu0 %v405
    %1193 = vmatprep.subr.mxu0 0.0
    %1194 = vmatpush1.msra.mxu0 %v406
    %1195 = vmatprep.subr.mxu0 0.0
    %1196 = vmatpush1.msra.mxu0 %v407
    %1197 = vmatprep.subr.mxu0 0.0
    %1198 = vmatpush1.msra.mxu0 %v408
    %1199 = vmatprep.subr.mxu0 0.0
    %1200 = vmatpush1.msra.mxu0 %v409
    %1201 = vmatprep.subr.mxu0 0.0
    %1202 = vmatpush1.msra.mxu0 %v410
    %1203 = vmatprep.subr.mxu0 0.0
    %1204 = vmatpush1.msra.mxu0 %v411
    %1205 = vmatprep.subr.mxu0 0.0
    %1206 = vmatpush1.msra.mxu0 %v412
    %1207 = vmatprep.subr.mxu0 0.0
    %1208 = vmatpush1.msra.mxu0 %v413
    %1209 = vmatprep.subr.mxu0 0.0
    %1210 = vmatpush1.msra.mxu0 %v414
    %1211 = vmatprep.subr.mxu0 0.0
    %1212 = vmatpush1.msra.mxu0 %v415
    %1213 = vmatprep.subr.mxu0 0.0
    %1214 = vmatpush1.msra.mxu0 %v416
    %1215 = vmatprep.subr.mxu0 0.0
    %1216 = vmatpush1.msra.mxu0 %v417
    %1217 = vmatprep.subr.mxu0 0.0
    %1218 = vmatpush1.msra.mxu0 %v418
    %1219 = vmatprep.subr.mxu0 0.0
    %1220 = vmatpush1.msra.mxu0 %v419
    %1221 = vmatprep.mubr.f32.mxu0 %v512
    %1222 = vmatmul.mubr.f32.gmra.mrb[0].mxu0 %v97
    %v1223 = vpop.f32.mrb[0].mxu0
    %v1224 = vadd.f32 %v1154, %v1223
    %v1225 = vpop.f32.mrb[0].mxu0
    %1226 = vdwg.mxu0
    %1227 = vmatprep.subr.mxu0 0.0
    %1228 = vmatpush1.msra.mxu0 %v420
    %1229 = vmatprep.subr.mxu0 0.0
    %1230 = vmatpush1.msra.mxu0 %v421
    %1231 = vmatprep.subr.mxu0 0.0
    %1232 = vmatpush1.msra.mxu0 %v422
    %1233 = vmatprep.subr.mxu0 0.0
    %1234 = vmatpush1.msra.mxu0 %v423
    %1235 = vmatprep.subr.mxu0 0.0
    %1236 = vmatpush1.msra.mxu0 %v424
    %1237 = vmatprep.subr.mxu0 0.0
    %1238 = vmatpush1.msra.mxu0 %v425
    %1239 = vmatprep.subr.mxu0 0.0
    %1240 = vmatpush1.msra.mxu0 %v426
    %1241 = vmatprep.subr.mxu0 0.0
    %1242 = vmatpush1.msra.mxu0 %v427
    %1243 = vmatprep.subr.mxu0 0.0
    %1244 = vmatpush1.msra.mxu0 %v428
    %1245 = vmatprep.subr.mxu0 0.0
    %1246 = vmatpush1.msra.mxu0 %v429
    %1247 = vmatprep.subr.mxu0 0.0
    %1248 = vmatpush1.msra.mxu0 %v430
    %1249 = vmatprep.subr.mxu0 0.0
    %1250 = vmatpush1.msra.mxu0 %v431
    %1251 = vmatprep.subr.mxu0 0.0
    %1252 = vmatpush1.msra.mxu0 %v432
    %1253 = vmatprep.subr.mxu0 0.0
    %1254 = vmatpush1.msra.mxu0 %v433
    %1255 = vmatprep.subr.mxu0 0.0
    %1256 = vmatpush1.msra.mxu0 %v434
    %1257 = vmatprep.subr.mxu0 0.0
    %1258 = vmatpush1.msra.mxu0 %v435
    %1259 = vmatprep.subr.mxu0 0.0
    %1260 = vmatpush1.msra.mxu0 %v436
    %1261 = vmatprep.subr.mxu0 0.0
    %1262 = vmatpush1.msra.mxu0 %v437
    %1263 = vmatprep.subr.mxu0 0.0
    %1264 = vmatpush1.msra.mxu0 %v438
    %1265 = vmatprep.subr.mxu0 0.0
    %1266 = vmatpush1.msra.mxu0 %v439
    %1267 = vmatprep.subr.mxu0 0.0
    %1268 = vmatpush1.msra.mxu0 %v440
    %1269 = vmatprep.subr.mxu0 0.0
    %1270 = vmatpush1.msra.mxu0 %v441
    %1271 = vmatprep.subr.mxu0 0.0
    %1272 = vmatpush1.msra.mxu0 %v442
    %1273 = vmatprep.subr.mxu0 0.0
    %1274 = vmatpush1.msra.mxu0 %v443
    %1275 = vmatprep.subr.mxu0 0.0
    %1276 = vmatpush1.msra.mxu0 %v444
    %1277 = vmatprep.subr.mxu0 0.0
    %1278 = vmatpush1.msra.mxu0 %v445
    %1279 = vmatprep.subr.mxu0 0.0
    %1280 = vmatpush1.msra.mxu0 %v446
    %1281 = vmatprep.subr.mxu0 0.0
    %1282 = vmatpush1.msra.mxu0 %v447
    %1283 = vmatprep.subr.mxu0 0.0
    %1284 = vmatpush1.msra.mxu0 %v448
    %1285 = vmatprep.subr.mxu0 0.0
    %1286 = vmatpush1.msra.mxu0 %v449
    %1287 = vmatprep.subr.mxu0 0.0
    %1288 = vmatpush1.msra.mxu0 %v450
    %1289 = vmatprep.subr.mxu0 0.0
    %1290 = vmatpush1.msra.mxu0 %v451
    %1291 = vmatprep.mubr.f32.mxu0 %v513
    %1292 = vmatmul.mubr.f32.gmra.mrb[0].mxu0 %v98
    %v1293 = vpop.f32.mrb[0].mxu0
    %v1294 = vadd.f32 %v1224, %v1293
    %v1295 = vpop.f32.mrb[0].mxu0
    %1296 = vdwg.mxu0
    %1297 = vmatprep.subr.mxu0 0.0
    %1298 = vmatpush1.msra.mxu0 %v452
    %1299 = vmatprep.subr.mxu0 0.0
    %1300 = vmatpush1.msra.mxu0 %v453
    %1301 = vmatprep.subr.mxu0 0.0
    %1302 = vmatpush1.msra.mxu0 %v454
    %1303 = vmatprep.subr.mxu0 0.0
    %1304 = vmatpush1.msra.mxu0 %v455
    %1305 = vmatprep.subr.mxu0 0.0
    %1306 = vmatpush1.msra.mxu0 %v456
    %1307 = vmatprep.subr.mxu0 0.0
    %1308 = vmatpush1.msra.mxu0 %v457
    %1309 = vmatprep.subr.mxu0 0.0
    %1310 = vmatpush1.msra.mxu0 %v458
    %1311 = vmatprep.subr.mxu0 0.0
    %1312 = vmatpush1.msra.mxu0 %v459
    %1313 = vmatprep.subr.mxu0 0.0
    %1314 = vmatpush1.msra.mxu0 %v460
    %1315 = vmatprep.subr.mxu0 0.0
    %1316 = vmatpush1.msra.mxu0 %v461
    %1317 = vmatprep.subr.mxu0 0.0
    %1318 = vmatpush1.msra.mxu0 %v462
    %1319 = vmatprep.subr.mxu0 0.0
    %1320 = vmatpush1.msra.mxu0 %v463
    %1321 = vmatprep.subr.mxu0 0.0
    %1322 = vmatpush1.msra.mxu0 %v464
    %1323 = vmatprep.subr.mxu0 0.0
    %1324 = vmatpush1.msra.mxu0 %v465
    %1325 = vmatprep.subr.mxu0 0.0
    %1326 = vmatpush1.msra.mxu0 %v466
    %1327 = vmatprep.subr.mxu0 0.0
    %1328 = vmatpush1.msra.mxu0 %v467
    %1329 = vmatprep.subr.mxu0 0.0
    %1330 = vmatpush1.msra.mxu0 %v468
    %1331 = vmatprep.subr.mxu0 0.0
    %1332 = vmatpush1.msra.mxu0 %v469
    %1333 = vmatprep.subr.mxu0 0.0
    %1334 = vmatpush1.msra.mxu0 %v470
    %1335 = vmatprep.subr.mxu0 0.0
    %1336 = vmatpush1.msra.mxu0 %v471
    %1337 = vmatprep.subr.mxu0 0.0
    %1338 = vmatpush1.msra.mxu0 %v472
    %1339 = vmatprep.subr.mxu0 0.0
    %1340 = vmatpush1.msra.mxu0 %v473
    %1341 = vmatprep.subr.mxu0 0.0
    %1342 = vmatpush1.msra.mxu0 %v474
    %1343 = vmatprep.subr.mxu0 0.0
    %1344 = vmatpush1.msra.mxu0 %v475
    %1345 = vmatprep.subr.mxu0 0.0
    %1346 = vmatpush1.msra.mxu0 %v476
    %1347 = vmatprep.subr.mxu0 0.0
    %1348 = vmatpush1.msra.mxu0 %v477
    %1349 = vmatprep.subr.mxu0 0.0
    %1350 = vmatpush1.msra.mxu0 %v478
    %1351 = vmatprep.subr.mxu0 0.0
    %1352 = vmatpush1.msra.mxu0 %v479
    %1353 = vmatprep.subr.mxu0 0.0
    %1354 = vmatpush1.msra.mxu0 %v480
    %1355 = vmatprep.subr.mxu0 0.0
    %1356 = vmatpush1.msra.mxu0 %v481
    %1357 = vmatprep.subr.mxu0 0.0
    %1358 = vmatpush1.msra.mxu0 %v482
    %1359 = vmatprep.subr.mxu0 0.0
    %1360 = vmatpush1.msra.mxu0 %v483
    %1361 = vmatprep.mubr.f32.mxu0 %v514
    %1362 = vmatmul.mubr.f32.gmra.mrb[0].mxu0 %v99
    %v1363 = vpop.f32.mrb[0].mxu0
    %v1364 = vadd.f32 %v1294, %v1363
    %v1365 = vpop.f32.mrb[0].mxu0
    %1366 = vdwg.mxu0
    %v1367 = vmax.f32 %v1364, 0.0
    %v1368 = vld [vmem:[#allocation2] sm:$0xf]
    %v1369 = vld [vmem:[#allocation9] sm:$0xff]
    %v1370 = vld [vmem:[#allocation9 + $0x8] sm:$0xff]
    %v1371 = vld [vmem:[#allocation9 + $0x10] sm:$0xff]
    %v1372 = vld [vmem:[#allocation9 + $0x18] sm:$0xff]
    %v1373 = vld [vmem:[#allocation9 + $0x20] sm:$0xff]
    %v1374 = vld [vmem:[#allocation9 + $0x28] sm:$0xff]
    %v1375 = vld [vmem:[#allocation9 + $0x30] sm:$0xff]
    %v1376 = vld [vmem:[#allocation9 + $0x38] sm:$0xff]
    %v1377 = vld [vmem:[#allocation9 + $0x40] sm:$0xff]
    %v1378 = vld [vmem:[#allocation9 + $0x48] sm:$0xff]
    %v1379 = vld [vmem:[#allocation9 + $0x50] sm:$0xff]
    %v1380 = vld [vmem:[#allocation9 + $0x58] sm:$0xff]
    %v1381 = vld [vmem:[#allocation9 + $0x60] sm:$0xff]
    %v1382 = vld [vmem:[#allocation9 + $0x68] sm:$0xff]
    %v1383 = vld [vmem:[#allocation9 + $0x70] sm:$0xff]
    %v1384 = vld [vmem:[#allocation9 + $0x78] sm:$0xff]
    %1385 = vmatprep.subr.mxu0 0.0
    %1386 = vmatpush1.msra.mxu0 %v1369
    %1387 = vmatprep.subr.mxu0 0.0
    %1388 = vmatpush1.msra.mxu0 %v1370
    %1389 = vmatprep.subr.mxu0 0.0
    %1390 = vmatpush1.msra.mxu0 %v1371
    %1391 = vmatprep.subr.mxu0 0.0
    %1392 = vmatpush1.msra.mxu0 %v1372
    %1393 = vmatprep.subr.mxu0 0.0
    %1394 = vmatpush1.msra.mxu0 %v1373
    %1395 = vmatprep.subr.mxu0 0.0
    %1396 = vmatpush1.msra.mxu0 %v1374
    %1397 = vmatprep.subr.mxu0 0.0
    %1398 = vmatpush1.msra.mxu0 %v1375
    %1399 = vmatprep.subr.mxu0 0.0
    %1400 = vmatpush1.msra.mxu0 %v1376
    %1401 = vmatprep.subr.mxu0 0.0
    %1402 = vmatpush1.msra.mxu0 %v1377
    %1403 = vmatprep.subr.mxu0 0.0
    %1404 = vmatpush1.msra.mxu0 %v1378
    %1405 = vmatprep.subr.mxu0 0.0
    %1406 = vmatpush1.msra.mxu0 %v1379
    %1407 = vmatprep.subr.mxu0 0.0
    %1408 = vmatpush1.msra.mxu0 %v1380
    %1409 = vmatprep.subr.mxu0 0.0
    %1410 = vmatpush1.msra.mxu0 %v1381
    %1411 = vmatprep.subr.mxu0 0.0
    %1412 = vmatpush1.msra.mxu0 %v1382
    %1413 = vmatprep.subr.mxu0 0.0
    %1414 = vmatpush1.msra.mxu0 %v1383
    %1415 = vmatprep.subr.mxu0 0.0
    %1416 = vmatpush1.msra.mxu0 %v1384
    %1417 = vmatprep.subr.mxu0 0.0
    %1418 = vmatpush1.msra.mxu0 0.0
    %1419 = vmatprep.subr.mxu0 0.0
    %1420 = vmatpush1.msra.mxu0 0.0
    %1421 = vmatprep.subr.mxu0 0.0
    %1422 = vmatpush1.msra.mxu0 0.0
    %1423 = vmatprep.subr.mxu0 0.0
    %1424 = vmatpush1.msra.mxu0 0.0
    %1425 = vmatprep.subr.mxu0 0.0
    %1426 = vmatpush1.msra.mxu0 0.0
    %1427 = vmatprep.subr.mxu0 0.0
    %1428 = vmatpush1.msra.mxu0 0.0
    %1429 = vmatprep.subr.mxu0 0.0
    %1430 = vmatpush1.msra.mxu0 0.0
    %1431 = vmatprep.subr.mxu0 0.0
    %1432 = vmatpush1.msra.mxu0 0.0
    %1433 = vmatprep.subr.mxu0 0.0
    %1434 = vmatpush1.msra.mxu0 0.0
    %1435 = vmatprep.subr.mxu0 0.0
    %1436 = vmatpush1.msra.mxu0 0.0
    %1437 = vmatprep.subr.mxu0 0.0
    %1438 = vmatpush1.msra.mxu0 0.0
    %1439 = vmatprep.subr.mxu0 0.0
    %1440 = vmatpush1.msra.mxu0 0.0
    %1441 = vmatprep.subr.mxu0 0.0
    %1442 = vmatpush1.msra.mxu0 0.0
    %1443 = vmatprep.subr.mxu0 0.0
    %1444 = vmatpush1.msra.mxu0 0.0
    %1445 = vmatprep.subr.mxu0 0.0
    %1446 = vmatpush1.msra.mxu0 0.0
    %1447 = vmatprep.subr.mxu0 0.0
    %1448 = vmatpush1.msra.mxu0 0.0
    %1449 = vmatprep.mubr.f32.mxu0 0.0
    %1450 = vmatmul.mubr.f32.gmra.mrb[0].mxu0 %v1367
    %v1451 = vpop.f32.mrb[0].mxu0
    %v1452 = vadd.f32 0.0, %v1451
    %v1453 = vpop.f32.mrb[0].mxu0
    %1454 = vdwg.mxu0
    %v1455 = vadd.f32 %v1368, %v1452
    %1456 = vst [vmem:[#allocation2] sm:$0xf] %v1455
    // Predicated region
    $region46: #{tpu_custom_call.1} parent=1 // pred_check
      %p1457 = pneg %p83
    $region47: #{tpu_custom_call.1} parent=1 // pred_check_branch
      %1459 = sbr.rel (%p1457) target = $region49
    $region48: #{tpu_custom_call.1} parent=1 // pred_region
      %v1460 = vld [vmem:[#allocation2] sm:$0xf]
      %v1461 = vld [vmem:[#allocation11] sm:$0x1]
      %v1463 = vlaneseq
      %v1464 = vshrl.u32 %v1463, 7
      %v1465 = vsub.s32 0, %v1464
      %v1466 = vrot.slane %v1461, %v1465
      %v1468 = vadd.f32 %v1460, %v1466
      %1469 = vst [vmem:[#allocation12] sm:$0xf] %v1468
    $region49: #{tpu_custom_call.1} parent=1 // pred_fallthru
      _
    // Predicated region
    $region50: #{tpu_custom_call.1} parent=1 // pred_check
      _
    $region51: #{tpu_custom_call.1} parent=1 // pred_check_branch
      %1471 = sbr.rel (0) target = $region53
    $region52: #{tpu_custom_call.1} parent=1 // pred_region
      %s1473 = ssub.s32 64, 64
      %1474 = vsyncadd [#allocation5], %s1473
      %s1476 = sshll.u32 [#allocation12], 4
      %s1477 = int_to_ptr.vmem [resolvable:$true] %s1476
      %1479 = dma.vmem_to_hbm [thread:$0]  %s1477, 64, %s5, [#allocation5]
    $region53: #{tpu_custom_call.1} parent=1 // pred_fallthru
      _
    // Predicated region
    $region54: #{tpu_custom_call.1} parent=1 // pred_check
      _
    $region55: #{tpu_custom_call.1} parent=1 // pred_check_branch
      %1481 = sbr.rel (0) target = $region57
    $region56: #{tpu_custom_call.1} parent=1 // pred_region
      %1482 = dma.done [#allocation5], 64
    $region57: #{tpu_custom_call.1} parent=1 // pred_fallthru
      _
    %1483 = vsyncpa [#allocation4], 1
    %1484 = vsyncpa [#allocation7], 1
    %1485 = vsyncpa [#allocation10], 1
    %1486 = vsyncpa [#allocation5], 1

// kernel: tpu_custom_call.1
$region0: #{tpu_custom_call.1}
  #allocation0 [shape = 'u32[]', space=smem, size = 0x4, offset = 0x4, fixed_abs, tag = 'smem constant byte address 0x4 - core index']
  #allocation1 [shape = 'u32[144,128]{1,0:T(1,128)}', space=vmem, size = 0x12000, scoped, tag = 'internal scratch']
  #allocation2 [shape = 'f32[4,128]{1,0:T(4,128)}', space=vmem, size = 0x800, scoped, tag = 'scratch operand']
  %s0 = inlined_call_operand.hbm [shape: f32[4,3072], index: 0, kind: input, shape index: {}]
  %s1 = inlined_call_operand.hbm [shape: f32[3072,128], index: 1, kind: input, shape index: {}]
  %s2 = inlined_call_operand.hbm [shape: f32[1,128], index: 2, kind: input, shape index: {}]
  %s3 = inlined_call_operand.hbm [shape: f32[128,128], index: 3, kind: input, shape index: {}]
  %s4 = inlined_call_operand.hbm [shape: f32[1,128], index: 4, kind: input, shape index: {}]
  %s5 = inlined_call_operand.hbm [shape: f32[4,128], index: 5, kind: output, shape index: {}]
  %s6 = sld [smem:[#allocation0]]
  $region58: #{tpu_custom_call.1} parent=0
    _
  %s8 = ssub.s32 1, %s6
  %s9 = scalar_select 0, %s8, %s6
  $region1: #{tpu_custom_call.1} parent=0
    #allocation3 [shape = 'u8[49152]{0}', space=vmem, size = 0xc000, scoped, tag = 'input window, operand 0, single buffered']
    #allocation4 [shape = 's32[1]{0}', space=sflag, size = 0x4, scoped, tag = 'scoped memory for tpu_custom_call.1']
    #allocation5 [shape = 's32[1]{0}', space=sflag, size = 0x4, scoped, tag = 'scoped memory for tpu_custom_call.1']
    #allocation6 [shape = 'u8[1572864]{0}', space=vmem, size = 0x180000, scoped, tag = 'input window, operand 1, single buffered']
    #allocation7 [shape = 's32[1]{0}', space=sflag, size = 0x4, scoped, tag = 'scoped memory for tpu_custom_call.1']
    #allocation8 [shape = 'u8[512]{0}', space=vmem, size = 0x400, scoped, tag = 'input window, operand 2, single buffered']
    #allocation9 [shape = 'u8[65536]{0}', space=vmem, size = 0x10000, scoped, tag = 'input window, operand 3, single buffered']
    #allocation10 [shape = 's32[1]{0}', space=sflag, size = 0x4, scoped, tag = 'scoped memory for tpu_custom_call.1']
    #allocation11 [shape = 'u8[512]{0}', space=vmem, size = 0x400, scoped, tag = 'input window, operand 4, single buffered']
    #allocation12 [shape = 'u8[2048]{0}', space=vmem, size = 0x800, scoped, tag = 'output window, operand 0, single buffered']
    %10 = vsyncpa [#allocation4], 0
    %11 = vsyncpa [#allocation7], 0
    %12 = vsyncpa [#allocation10], 0
    %13 = vsyncpa [#allocation5], 0
    // Predicated region
    $region2: #{tpu_custom_call.1} parent=1 // pred_check
      _
    $region3: #{tpu_custom_call.1} parent=1 // pred_check_branch
      %15 = sbr.rel (0) target = $region5
    $region4: #{tpu_custom_call.1} parent=1 // pred_region
      %s17 = ssub.s32 1536, 1536
      %18 = vsyncadd [#allocation4], %s17
      %s20 = sshll.u32 [#allocation3], 4
      %s21 = int_to_ptr.vmem [resolvable:$true] %s20
      %23 = dma.hbm_to_vmem [thread:$0]  %s0, 1536, %s21, [#allocation4]
    $region5: #{tpu_custom_call.1} parent=1 // pred_fallthru
      _
    // Predicated region
    $region6: #{tpu_custom_call.1} parent=1 // pred_check
      _
    $region7: #{tpu_custom_call.1} parent=1 // pred_check_branch
      %25 = sbr.rel (0) target = $region9
    $region8: #{tpu_custom_call.1} parent=1 // pred_region
      %s27 = ssub.s32 49152, 49152
      %28 = vsyncadd [#allocation7], %s27
      %s29 = sshll.u32 [#allocation6], 4
      %s30 = int_to_ptr.vmem [resolvable:$true] %s29
      %35 = dma.hbm_to_vmem [thread:$0]  %s1, 49152, %s30, [#allocation7], 128, 128, 8
    $region9: #{tpu_custom_call.1} parent=1 // pred_fallthru
      _
    // Predicated region
    $region10: #{tpu_custom_call.1} parent=1 // pred_check
      _
    $region11: #{tpu_custom_call.1} parent=1 // pred_check_branch
      %37 = sbr.rel (0) target = $region13
    $region12: #{tpu_custom_call.1} parent=1 // pred_region
      %s39 = ssub.s32 16, 16
      %40 = vsyncadd [#allocation7], %s39
      %s42 = sshll.u32 [#allocation8], 4
      %s43 = int_to_ptr.vmem [resolvable:$true] %s42
      %45 = dma.hbm_to_vmem [thread:$0]  %s2, 16, %s43, [#allocation7]
    $region13: #{tpu_custom_call.1} parent=1 // pred_fallthru
      _
    // Predicated region
    $region14: #{tpu_custom_call.1} parent=1 // pred_check
      _
    $region15: #{tpu_custom_call.1} parent=1 // pred_check_branch
      %47 = sbr.rel (0) target = $region17
    $region16: #{tpu_custom_call.1} parent=1 // pred_region
      %s49 = ssub.s32 2048, 2048
      %50 = vsyncadd [#allocation10], %s49
      %s51 = sshll.u32 [#allocation9], 4
      %s52 = int_to_ptr.vmem [resolvable:$true] %s51
      %57 = dma.hbm_to_vmem [thread:$0]  %s3, 2048, %s52, [#allocation10], 128, 128, 8
    $region17: #{tpu_custom_call.1} parent=1 // pred_fallthru
      _
    // Predicated region
    $region18: #{tpu_custom_call.1} parent=1 // pred_check
      _
    $region19: #{tpu_custom_call.1} parent=1 // pred_check_branch
      %59 = sbr.rel (0) target = $region21
    $region20: #{tpu_custom_call.1} parent=1 // pred_region
      %s61 = ssub.s32 16, 16
      %62 = vsyncadd [#allocation10], %s61
      %s64 = sshll.u32 [#allocation11], 4
      %s65 = int_to_ptr.vmem [resolvable:$true] %s64
      %67 = dma.hbm_to_vmem [thread:$0]  %s4, 16, %s65, [#allocation10]
    $region21: #{tpu_custom_call.1} parent=1 // pred_fallthru
      _
    // Predicated region
    $region22: #{tpu_custom_call.1} parent=1 // pred_check
      _
    $region23: #{tpu_custom_call.1} parent=1 // pred_check_branch
      %69 = sbr.rel (0) target = $region25
    $region24: #{tpu_custom_call.1} parent=1 // pred_region
      %70 = dma.done [#allocation4], 1536
    $region25: #{tpu_custom_call.1} parent=1 // pred_fallthru
      _
    // Predicated region
    $region26: #{tpu_custom_call.1} parent=1 // pred_check
      _
    $region27: #{tpu_custom_call.1} parent=1 // pred_check_branch
      %72 = sbr.rel (0) target = $region29
    $region28: #{tpu_custom_call.1} parent=1 // pred_region
      %73 = dma.done [#allocation7], 49152
    $region29: #{tpu_custom_call.1} parent=1 // pred_fallthru
      _
    // Predicated region
    $region30: #{tpu_custom_call.1} parent=1 // pred_check
      _
    $region31: #{tpu_custom_call.1} parent=1 // pred_check_branch
      %75 = sbr.rel (0) target = $region33
    $region32: #{tpu_custom_call.1} parent=1 // pred_region
      %76 = dma.done [#allocation7], 16
    $region33: #{tpu_custom_call.1} parent=1 // pred_fallthru
      _
    // Predicated region
    $region34: #{tpu_custom_call.1} parent=1 // pred_check
      _
    $region35: #{tpu_custom_call.1} parent=1 // pred_check_branch
      %78 = sbr.rel (0) target = $region37
    $region36: #{tpu_custom_call.1} parent=1 // pred_region
      %79 = dma.done [#allocation10], 2048
    $region37: #{tpu_custom_call.1} parent=1 // pred_fallthru
      _
    // Predicated region
    $region38: #{tpu_custom_call.1} parent=1 // pred_check
      _
    $region39: #{tpu_custom_call.1} parent=1 // pred_check_branch
      %81 = sbr.rel (0) target = $region41
    $region40: #{tpu_custom_call.1} parent=1 // pred_region
      %82 = dma.done [#allocation10], 16
    $region41: #{tpu_custom_call.1} parent=1 // pred_fallthru
      _
    %p83 = scmp.eq.s32.totalorder 0, 0
    // Predicated region
    $region42: #{tpu_custom_call.1} parent=1 // pred_check
      %p84 = pneg %p83
    $region43: #{tpu_custom_call.1} parent=1 // pred_check_branch
      %86 = sbr.rel (%p84) target = $region45
    $region44: #{tpu_custom_call.1} parent=1 // pred_region
      %87 = vst [vmem:[#allocation2] sm:$0xf] 0.0
    $region45: #{tpu_custom_call.1} parent=1 // pred_fallthru
      _
    %v88 = vld [vmem:[#allocation3] sm:$0xff]
    %v89 = vld [vmem:[#allocation3 + $0x8] sm:$0xff]
    %v90 = vld [vmem:[#allocation3 + $0x10] sm:$0xff]
    %v91 = vld [vmem:[#allocation3 + $0x18] sm:$0xff]
    %v92 = vld [vmem:[#allocation3 + $0x20] sm:$0xff]
    %v93 = vld [vmem:[#allocation3 + $0x28] sm:$0xff]
    %v94 = vld [vmem:[#allocation3 + $0x30] sm:$0xff]
    %v95 = vld [vmem:[#allocation3 + $0x38] sm:$0xff]
    %v96 = vld [vmem:[#allocation3 + $0x40] sm:$0xff]
    %v97 = vld [vmem:[#allocation3 + $0x48] sm:$0xff]
    %v98 = vld [vmem:[#allocation3 + $0x50] sm:$0xff]
    %v99 = vld [vmem:[#allocation3 + $0x58] sm:$0xff]
    %v100 = vld [vmem:[#allocation6] sm:$0xff]
    %v101 = vld [vmem:[#allocation6 + $0x8] sm:$0xff]
    %v102 = vld [vmem:[#allocation6 + $0x10] sm:$0xff]
    %v103 = vld [vmem:[#allocation6 + $0x18] sm:$0xff]
    %v104 = vld [vmem:[#allocation6 + $0x20] sm:$0xff]
    %v105 = vld [vmem:[#allocation6 + $0x28] sm:$0xff]
    %v106 = vld [vmem:[#allocation6 + $0x30] sm:$0xff]
    %v107 = vld [vmem:[#allocation6 + $0x38] sm:$0xff]
    %v108 = vld [vmem:[#allocation6 + $0x40] sm:$0xff]
    %v109 = vld [vmem:[#allocation6 + $0x48] sm:$0xff]
    %v110 = vld [vmem:[#allocation6 + $0x50] sm:$0xff]
    %v111 = vld [vmem:[#allocation6 + $0x58] sm:$0xff]
    %v112 = vld [vmem:[#allocation6 + $0x60] sm:$0xff]
    %v113 = vld [vmem:[#allocation6 + $0x68] sm:$0xff]
    %v114 = vld [vmem:[#allocation6 + $0x70] sm:$0xff]
    %v115 = vld [vmem:[#allocation6 + $0x78] sm:$0xff]
    %v116 = vld [vmem:[#allocation6 + $0x80] sm:$0xff]
    %v117 = vld [vmem:[#allocation6 + $0x88] sm:$0xff]
    %v118 = vld [vmem:[#allocation6 + $0x90] sm:$0xff]
    %v119 = vld [vmem:[#allocation6 + $0x98] sm:$0xff]
    %v120 = vld [vmem:[#allocation6 + $0xa0] sm:$0xff]
    %v121 = vld [vmem:[#allocation6 + $0xa8] sm:$0xff]
    %v122 = vld [vmem:[#allocation6 + $0xb0] sm:$0xff]
    %v123 = vld [vmem:[#allocation6 + $0xb8] sm:$0xff]
    %v124 = vld [vmem:[#allocation6 + $0xc0] sm:$0xff]
    %v125 = vld [vmem:[#allocation6 + $0xc8] sm:$0xff]
    %v126 = vld [vmem:[#allocation6 + $0xd0] sm:$0xff]
    %v127 = vld [vmem:[#allocation6 + $0xd8] sm:$0xff]
    %v128 = vld [vmem:[#allocation6 + $0xe0] sm:$0xff]
    %v129 = vld [vmem:[#allocation6 + $0xe8] sm:$0xff]
    %v130 = vld [vmem:[#allocation6 + $0xf0] sm:$0xff]
    %v131 = vld [vmem:[#allocation6 + $0xf8] sm:$0xff]
    %v132 = vld [vmem:[#allocation6 + $0x100] sm:$0xff]
    %v133 = vld [vmem:[#allocation6 + $0x108] sm:$0xff]
    %v134 = vld [vmem:[#allocation6 + $0x110] sm:$0xff]
    %v135 = vld [vmem:[#allocation6 + $0x118] sm:$0xff]
    %v136 = vld [vmem:[#allocation6 + $0x120] sm:$0xff]
    %v137 = vld [vmem:[#allocation6 + $0x128] sm:$0xff]
    %v138 = vld [vmem:[#allocation6 + $0x130] sm:$0xff]
    %v139 = vld [vmem:[#allocation6 + $0x138] sm:$0xff]
    %v140 = vld [vmem:[#allocation6 + $0x140] sm:$0xff]
    %v141 = vld [vmem:[#allocation6 + $0x148] sm:$0xff]
    %v142 = vld [vmem:[#allocation6 + $0x150] sm:$0xff]
    %v143 = vld [vmem:[#allocation6 + $0x158] sm:$0xff]
    %v144 = vld [vmem:[#allocation6 + $0x160] sm:$0xff]
    %v145 = vld [vmem:[#allocation6 + $0x168] sm:$0xff]
    %v146 = vld [vmem:[#allocation6 + $0x170] sm:$0xff]
    %v147 = vld [vmem:[#allocation6 + $0x178] sm:$0xff]
    %v148 = vld [vmem:[#allocation6 + $0x180] sm:$0xff]
    %v149 = vld [vmem:[#allocation6 + $0x188] sm:$0xff]
    %v150 = vld [vmem:[#allocation6 + $0x190] sm:$0xff]
    %v151 = vld [vmem:[#allocation6 + $0x198] sm:$0xff]
    %v152 = vld [vmem:[#allocation6 + $0x1a0] sm:$0xff]
    %v153 = vld [vmem:[#allocation6 + $0x1a8] sm:$0xff]
    %v154 = vld [vmem:[#allocation6 + $0x1b0] sm:$0xff]
    %v155 = vld [vmem:[#allocation6 + $0x1b8] sm:$0xff]
    %v156 = vld [vmem:[#allocation6 + $0x1c0] sm:$0xff]
    %v157 = vld [vmem:[#allocation6 + $0x1c8] sm:$0xff]
    %v158 = vld [vmem:[#allocation6 + $0x1d0] sm:$0xff]
    %v159 = vld [vmem:[#allocation6 + $0x1d8] sm:$0xff]
    %v160 = vld [vmem:[#allocation6 + $0x1e0] sm:$0xff]
    %v161 = vld [vmem:[#allocation6 + $0x1e8] sm:$0xff]
    %v162 = vld [vmem:[#allocation6 + $0x1f0] sm:$0xff]
    %v163 = vld [vmem:[#allocation6 + $0x1f8] sm:$0xff]
    %v164 = vld [vmem:[#allocation6 + $0x200] sm:$0xff]
    %v165 = vld [vmem:[#allocation6 + $0x208] sm:$0xff]
    %v166 = vld [vmem:[#allocation6 + $0x210] sm:$0xff]
    %v167 = vld [vmem:[#allocation6 + $0x218] sm:$0xff]
    %v168 = vld [vmem:[#allocation6 + $0x220] sm:$0xff]
    %v169 = vld [vmem:[#allocation6 + $0x228] sm:$0xff]
    %v170 = vld [vmem:[#allocation6 + $0x230] sm:$0xff]
    %v171 = vld [vmem:[#allocation6 + $0x238] sm:$0xff]
    %v172 = vld [vmem:[#allocation6 + $0x240] sm:$0xff]
    %v173 = vld [vmem:[#allocation6 + $0x248] sm:$0xff]
    %v174 = vld [vmem:[#allocation6 + $0x250] sm:$0xff]
    %v175 = vld [vmem:[#allocation6 + $0x258] sm:$0xff]
    %v176 = vld [vmem:[#allocation6 + $0x260] sm:$0xff]
    %v177 = vld [vmem:[#allocation6 + $0x268] sm:$0xff]
    %v178 = vld [vmem:[#allocation6 + $0x270] sm:$0xff]
    %v179 = vld [vmem:[#allocation6 + $0x278] sm:$0xff]
    %v180 = vld [vmem:[#allocation6 + $0x280] sm:$0xff]
    %v181 = vld [vmem:[#allocation6 + $0x288] sm:$0xff]
    %v182 = vld [vmem:[#allocation6 + $0x290] sm:$0xff]
    %v183 = vld [vmem:[#allocation6 + $0x298] sm:$0xff]
    %v184 = vld [vmem:[#allocation6 + $0x2a0] sm:$0xff]
    %v185 = vld [vmem:[#allocation6 + $0x2a8] sm:$0xff]
    %v186 = vld [vmem:[#allocation6 + $0x2b0] sm:$0xff]
    %v187 = vld [vmem:[#allocation6 + $0x2b8] sm:$0xff]
    %v188 = vld [vmem:[#allocation6 + $0x2c0] sm:$0xff]
    %v189 = vld [vmem:[#allocation6 + $0x2c8] sm:$0xff]
    %v190 = vld [vmem:[#allocation6 + $0x2d0] sm:$0xff]
    %v191 = vld [vmem:[#allocation6 + $0x2d8] sm:$0xff]
    %v192 = vld [vmem:[#allocation6 + $0x2e0] sm:$0xff]
    %v193 = vld [vmem:[#allocation6 + $0x2e8] sm:$0xff]
    %v194 = vld [vmem:[#allocation6 + $0x2f0] sm:$0xff]
    %v195 = vld [vmem:[#allocation6 + $0x2f8] sm:$0xff]
    %v196 = vld [vmem:[#allocation6 + $0x300] sm:$0xff]
    %v197 = vld [vmem:[#allocation6 + $0x308] sm:$0xff]
    %v198 = vld [vmem:[#allocation6 + $0x310] sm:$0xff]
    %v199 = vld [vmem:[#allocation6 + $0x318] sm:$0xff]
    %v200 = vld [vmem:[#allocation6 + $0x320] sm:$0xff]
    %v201 = vld [vmem:[#allocation6 + $0x328] sm:$0xff]
    %v202 = vld [vmem:[#allocation6 + $0x330] sm:$0xff]
    %v203 = vld [vmem:[#allocation6 + $0x338] sm:$0xff]
    %v204 = vld [vmem:[#allocation6 + $0x340] sm:$0xff]
    %v205 = vld [vmem:[#allocation6 + $0x348] sm:$0xff]
    %v206 = vld [vmem:[#allocation6 + $0x350] sm:$0xff]
    %v207 = vld [vmem:[#allocation6 + $0x358] sm:$0xff]
    %v208 = vld [vmem:[#allocation6 + $0x360] sm:$0xff]
    %v209 = vld [vmem:[#allocation6 + $0x368] sm:$0xff]
    %v210 = vld [vmem:[#allocation6 + $0x370] sm:$0xff]
    %v211 = vld [vmem:[#allocation6 + $0x378] sm:$0xff]
    %v212 = vld [vmem:[#allocation6 + $0x380] sm:$0xff]
    %v213 = vld [vmem:[#allocation6 + $0x388] sm:$0xff]
    %v214 = vld [vmem:[#allocation6 + $0x390] sm:$0xff]
    %v215 = vld [vmem:[#allocation6 + $0x398] sm:$0xff]
    %v216 = vld [vmem:[#allocation6 + $0x3a0] sm:$0xff]
    %v217 = vld [vmem:[#allocation6 + $0x3a8] sm:$0xff]
    %v218 = vld [vmem:[#allocation6 + $0x3b0] sm:$0xff]
    %v219 = vld [vmem:[#allocation6 + $0x3b8] sm:$0xff]
    %v220 = vld [vmem:[#allocation6 + $0x3c0] sm:$0xff]
    %v221 = vld [vmem:[#allocation6 + $0x3c8] sm:$0xff]
    %v222 = vld [vmem:[#allocation6 + $0x3d0] sm:$0xff]
    %v223 = vld [vmem:[#allocation6 + $0x3d8] sm:$0xff]
    %v224 = vld [vmem:[#allocation6 + $0x3e0] sm:$0xff]
    %v225 = vld [vmem:[#allocation6 + $0x3e8] sm:$0xff]
    %v226 = vld [vmem:[#allocation6 + $0x3f0] sm:$0xff]
    %v227 = vld [vmem:[#allocation6 + $0x3f8] sm:$0xff]
    %v228 = vld [vmem:[#allocation6 + $0x400] sm:$0xff]
    %v229 = vld [vmem:[#allocation6 + $0x408] sm:$0xff]
    %v230 = vld [vmem:[#allocation6 + $0x410] sm:$0xff]
    %v231 = vld [vmem:[#allocation6 + $0x418] sm:$0xff]
    %v232 = vld [vmem:[#allocation6 + $0x420] sm:$0xff]
    %v233 = vld [vmem:[#allocation6 + $0x428] sm:$0xff]
    %v234 = vld [vmem:[#allocation6 + $0x430] sm:$0xff]
    %v235 = vld [vmem:[#allocation6 + $0x438] sm:$0xff]
    %v236 = vld [vmem:[#allocation6 + $0x440] sm:$0xff]
    %v237 = vld [vmem:[#allocation6 + $0x448] sm:$0xff]
    %v238 = vld [vmem:[#allocation6 + $0x450] sm:$0xff]
    %v239 = vld [vmem:[#allocation6 + $0x458] sm:$0xff]
    %v240 = vld [vmem:[#allocation6 + $0x460] sm:$0xff]
    %v241 = vld [vmem:[#allocation6 + $0x468] sm:$0xff]
    %v242 = vld [vmem:[#allocation6 + $0x470] sm:$0xff]
    %v243 = vld [vmem:[#allocation6 + $0x478] sm:$0xff]
    %v244 = vld [vmem:[#allocation6 + $0x480] sm:$0xff]
    %v245 = vld [vmem:[#allocation6 + $0x488] sm:$0xff]
    %v246 = vld [vmem:[#allocation6 + $0x490] sm:$0xff]
    %v247 = vld [vmem:[#allocation6 + $0x498] sm:$0xff]
    %v248 = vld [vmem:[#allocation6 + $0x4a0] sm:$0xff]
    %v249 = vld [vmem:[#allocation6 + $0x4a8] sm:$0xff]
    %v250 = vld [vmem:[#allocation6 + $0x4b0] sm:$0xff]
    %v251 = vld [vmem:[#allocation6 + $0x4b8] sm:$0xff]
    %v252 = vld [vmem:[#allocation6 + $0x4c0] sm:$0xff]
    %v253 = vld [vmem:[#allocation6 + $0x4c8] sm:$0xff]
    %v254 = vld [vmem:[#allocation6 + $0x4d0] sm:$0xff]
    %v255 = vld [vmem:[#allocation6 + $0x4d8] sm:$0xff]
    %v256 = vld [vmem:[#allocation6 + $0x4e0] sm:$0xff]
    %v257 = vld [vmem:[#allocation6 + $0x4e8] sm:$0xff]
    %v258 = vld [vmem:[#allocation6 + $0x4f0] sm:$0xff]
    %v259 = vld [vmem:[#allocation6 + $0x4f8] sm:$0xff]
    %v260 = vld [vmem:[#allocation6 + $0x500] sm:$0xff]
    %v261 = vld [vmem:[#allocation6 + $0x508] sm:$0xff]
    %v262 = vld [vmem:[#allocation6 + $0x510] sm:$0xff]
    %v263 = vld [vmem:[#allocation6 + $0x518] sm:$0xff]
    %v264 = vld [vmem:[#allocation6 + $0x520] sm:$0xff]
    %v265 = vld [vmem:[#allocation6 + $0x528] sm:$0xff]
    %v266 = vld [vmem:[#allocation6 + $0x530] sm:$0xff]
    %v267 = vld [vmem:[#allocation6 + $0x538] sm:$0xff]
    %v268 = vld [vmem:[#allocation6 + $0x540] sm:$0xff]
    %v269 = vld [vmem:[#allocation6 + $0x548] sm:$0xff]
    %v270 = vld [vmem:[#allocation6 + $0x550] sm:$0xff]
    %v271 = vld [vmem:[#allocation6 + $0x558] sm:$0xff]
    %v272 = vld [vmem:[#allocation6 + $0x560] sm:$0xff]
    %v273 = vld [vmem:[#allocation6 + $0x568] sm:$0xff]
    %v274 = vld [vmem:[#allocation6 + $0x570] sm:$0xff]
    %v275 = vld [vmem:[#allocation6 + $0x578] sm:$0xff]
    %v276 = vld [vmem:[#allocation6 + $0x580] sm:$0xff]
    %v277 = vld [vmem:[#allocation6 + $0x588] sm:$0xff]
    %v278 = vld [vmem:[#allocation6 + $0x590] sm:$0xff]
    %v279 = vld [vmem:[#allocation6 + $0x598] sm:$0xff]
    %v280 = vld [vmem:[#allocation6 + $0x5a0] sm:$0xff]
    %v281 = vld [vmem:[#allocation6 + $0x5a8] sm:$0xff]
    %v282 = vld [vmem:[#allocation6 + $0x5b0] sm:$0xff]
    %v283 = vld [vmem:[#allocation6 + $0x5b8] sm:$0xff]
    %v284 = vld [vmem:[#allocation6 + $0x5c0] sm:$0xff]
    %v285 = vld [vmem:[#allocation6 + $0x5c8] sm:$0xff]
    %v286 = vld [vmem:[#allocation6 + $0x5d0] sm:$0xff]
    %v287 = vld [vmem:[#allocation6 + $0x5d8] sm:$0xff]
    %v288 = vld [vmem:[#allocation6 + $0x5e0] sm:$0xff]
    %v289 = vld [vmem:[#allocation6 + $0x5e8] sm:$0xff]
    %v290 = vld [vmem:[#allocation6 + $0x5f0] sm:$0xff]
    %v291 = vld [vmem:[#allocation6 + $0x5f8] sm:$0xff]
    %v292 = vld [vmem:[#allocation6 + $0x600] sm:$0xff]
    %v293 = vld [vmem:[#allocation6 + $0x608] sm:$0xff]
    %v294 = vld [vmem:[#allocation6 + $0x610] sm:$0xff]
    %v295 = vld [vmem:[#allocation6 + $0x618] sm:$0xff]
    %v296 = vld [vmem:[#allocation6 + $0x620] sm:$0xff]
    %v297 = vld [vmem:[#allocation6 + $0x628] sm:$0xff]
    %v298 = vld [vmem:[#allocation6 + $0x630] sm:$0xff]
    %v299 = vld [vmem:[#allocation6 + $0x638] sm:$0xff]
    %v300 = vld [vmem:[#allocation6 + $0x640] sm:$0xff]
    %v301 = vld [vmem:[#allocation6 + $0x648] sm:$0xff]
    %v302 = vld [vmem:[#allocation6 + $0x650] sm:$0xff]
    %v303 = vld [vmem:[#allocation6 + $0x658] sm:$0xff]
    %v304 = vld [vmem:[#allocation6 + $0x660] sm:$0xff]
    %v305 = vld [vmem:[#allocation6 + $0x668] sm:$0xff]
    %v306 = vld [vmem:[#allocation6 + $0x670] sm:$0xff]
    %v307 = vld [vmem:[#allocation6 + $0x678] sm:$0xff]
    %v308 = vld [vmem:[#allocation6 + $0x680] sm:$0xff]
    %v309 = vld [vmem:[#allocation6 + $0x688] sm:$0xff]
    %v310 = vld [vmem:[#allocation6 + $0x690] sm:$0xff]
    %v311 = vld [vmem:[#allocation6 + $0x698] sm:$0xff]
    %v312 = vld [vmem:[#allocation6 + $0x6a0] sm:$0xff]
    %v313 = vld [vmem:[#allocation6 + $0x6a8] sm:$0xff]
    %v314 = vld [vmem:[#allocation6 + $0x6b0] sm:$0xff]
    %v315 = vld [vmem:[#allocation6 + $0x6b8] sm:$0xff]
    %v316 = vld [vmem:[#allocation6 + $0x6c0] sm:$0xff]
    %v317 = vld [vmem:[#allocation6 + $0x6c8] sm:$0xff]
    %v318 = vld [vmem:[#allocation6 + $0x6d0] sm:$0xff]
    %v319 = vld [vmem:[#allocation6 + $0x6d8] sm:$0xff]
    %v320 = vld [vmem:[#allocation6 + $0x6e0] sm:$0xff]
    %v321 = vld [vmem:[#allocation6 + $0x6e8] sm:$0xff]
    %v322 = vld [vmem:[#allocation6 + $0x6f0] sm:$0xff]
    %v323 = vld [vmem:[#allocation6 + $0x6f8] sm:$0xff]
    %v324 = vld [vmem:[#allocation6 + $0x700] sm:$0xff]
    %v325 = vld [vmem:[#allocation6 + $0x708] sm:$0xff]
    %v326 = vld [vmem:[#allocation6 + $0x710] sm:$0xff]
    %v327 = vld [vmem:[#allocation6 + $0x718] sm:$0xff]
    %v328 = vld [vmem:[#allocation6 + $0x720] sm:$0xff]
    %v329 = vld [vmem:[#allocation6 + $0x728] sm:$0xff]
    %v330 = vld [vmem:[#allocation6 + $0x730] sm:$0xff]
    %v331 = vld [vmem:[#allocation6 + $0x738] sm:$0xff]
    %v332 = vld [vmem:[#allocation6 + $0x740] sm:$0xff]
    %v333 = vld [vmem:[#allocation6 + $0x748] sm:$0xff]
    %v334 = vld [vmem:[#allocation6 + $0x750] sm:$0xff]
    %v335 = vld [vmem:[#allocation6 + $0x758] sm:$0xff]
    %v336 = vld [vmem:[#allocation6 + $0x760] sm:$0xff]
    %v337 = vld [vmem:[#allocation6 + $0x768] sm:$0xff]
    %v338 = vld [vmem:[#allocation6 + $0x770] sm:$0xff]
    %v339 = vld [vmem:[#allocation6 + $0x778] sm:$0xff]
    %v340 = vld [vmem:[#allocation6 + $0x780] sm:$0xff]
    %v341 = vld [vmem:[#allocation6 + $0x788] sm:$0xff]
    %v342 = vld [vmem:[#allocation6 + $0x790] sm:$0xff]
    %v343 = vld [vmem:[#allocation6 + $0x798] sm:$0xff]
    %v344 = vld [vmem:[#allocation6 + $0x7a0] sm:$0xff]
    %v345 = vld [vmem:[#allocation6 + $0x7a8] sm:$0xff]
    %v346 = vld [vmem:[#allocation6 + $0x7b0] sm:$0xff]
    %v347 = vld [vmem:[#allocation6 + $0x7b8] sm:$0xff]
    %v348 = vld [vmem:[#allocation6 + $0x7c0] sm:$0xff]
    %v349 = vld [vmem:[#allocation6 + $0x7c8] sm:$0xff]
    %v350 = vld [vmem:[#allocation6 + $0x7d0] sm:$0xff]
    %v351 = vld [vmem:[#allocation6 + $0x7d8] sm:$0xff]
    %v352 = vld [vmem:[#allocation6 + $0x7e0] sm:$0xff]
    %v353 = vld [vmem:[#allocation6 + $0x7e8] sm:$0xff]
    %v354 = vld [vmem:[#allocation6 + $0x7f0] sm:$0xff]
    %v355 = vld [vmem:[#allocation6 + $0x7f8] sm:$0xff]
    %v356 = vld [vmem:[#allocation6 + $0x800] sm:$0xff]
    %v357 = vld [vmem:[#allocation6 + $0x808] sm:$0xff]
    %v358 = vld [vmem:[#allocation6 + $0x810] sm:$0xff]
    %v359 = vld [vmem:[#allocation6 + $0x818] sm:$0xff]
    %v360 = vld [vmem:[#allocation6 + $0x820] sm:$0xff]
    %v361 = vld [vmem:[#allocation6 + $0x828] sm:$0xff]
    %v362 = vld [vmem:[#allocation6 + $0x830] sm:$0xff]
    %v363 = vld [vmem:[#allocation6 + $0x838] sm:$0xff]
    %v364 = vld [vmem:[#allocation6 + $0x840] sm:$0xff]
    %v365 = vld [vmem:[#allocation6 + $0x848] sm:$0xff]
    %v366 = vld [vmem:[#allocation6 + $0x850] sm:$0xff]
    %v367 = vld [vmem:[#allocation6 + $0x858] sm:$0xff]
    %v368 = vld [vmem:[#allocation6 + $0x860] sm:$0xff]
    %v369 = vld [vmem:[#allocation6 + $0x868] sm:$0xff]
    %v370 = vld [vmem:[#allocation6 + $0x870] sm:$0xff]
    %v371 = vld [vmem:[#allocation6 + $0x878] sm:$0xff]
    %v372 = vld [vmem:[#allocation6 + $0x880] sm:$0xff]
    %v373 = vld [vmem:[#allocation6 + $0x888] sm:$0xff]
    %v374 = vld [vmem:[#allocation6 + $0x890] sm:$0xff]
    %v375 = vld [vmem:[#allocation6 + $0x898] sm:$0xff]
    %v376 = vld [vmem:[#allocation6 + $0x8a0] sm:$0xff]
    %v377 = vld [vmem:[#allocation6 + $0x8a8] sm:$0xff]
    %v378 = vld [vmem:[#allocation6 + $0x8b0] sm:$0xff]
    %v379 = vld [vmem:[#allocation6 + $0x8b8] sm:$0xff]
    %v380 = vld [vmem:[#allocation6 + $0x8c0] sm:$0xff]
    %v381 = vld [vmem:[#allocation6 + $0x8c8] sm:$0xff]
    %v382 = vld [vmem:[#allocation6 + $0x8d0] sm:$0xff]
    %v383 = vld [vmem:[#allocation6 + $0x8d8] sm:$0xff]
    %v384 = vld [vmem:[#allocation6 + $0x8e0] sm:$0xff]
    %v385 = vld [vmem:[#allocation6 + $0x8e8] sm:$0xff]
    %v386 = vld [vmem:[#allocation6 + $0x8f0] sm:$0xff]
    %v387 = vld [vmem:[#allocation6 + $0x8f8] sm:$0xff]
    %v388 = vld [vmem:[#allocation6 + $0x900] sm:$0xff]
    %v389 = vld [vmem:[#allocation6 + $0x908] sm:$0xff]
    %v390 = vld [vmem:[#allocation6 + $0x910] sm:$0xff]
    %v391 = vld [vmem:[#allocation6 + $0x918] sm:$0xff]
    %v392 = vld [vmem:[#allocation6 + $0x920] sm:$0xff]
    %v393 = vld [vmem:[#allocation6 + $0x928] sm:$0xff]
    %v394 = vld [vmem:[#allocation6 + $0x930] sm:$0xff]
    %v395 = vld [vmem:[#allocation6 + $0x938] sm:$0xff]
    %v396 = vld [vmem:[#allocation6 + $0x940] sm:$0xff]
    %v397 = vld [vmem:[#allocation6 + $0x948] sm:$0xff]
    %v398 = vld [vmem:[#allocation6 + $0x950] sm:$0xff]
    %v399 = vld [vmem:[#allocation6 + $0x958] sm:$0xff]
    %v400 = vld [vmem:[#allocation6 + $0x960] sm:$0xff]
    %v401 = vld [vmem:[#allocation6 + $0x968] sm:$0xff]
    %v402 = vld [vmem:[#allocation6 + $0x970] sm:$0xff]
    %v403 = vld [vmem:[#allocation6 + $0x978] sm:$0xff]
    %v404 = vld [vmem:[#allocation6 + $0x980] sm:$0xff]
    %v405 = vld [vmem:[#allocation6 + $0x988] sm:$0xff]
    %v406 = vld [vmem:[#allocation6 + $0x990] sm:$0xff]
    %v407 = vld [vmem:[#allocation6 + $0x998] sm:$0xff]
    %v408 = vld [vmem:[#allocation6 + $0x9a0] sm:$0xff]
    %v409 = vld [vmem:[#allocation6 + $0x9a8] sm:$0xff]
    %v410 = vld [vmem:[#allocation6 + $0x9b0] sm:$0xff]
    %v411 = vld [vmem:[#allocation6 + $0x9b8] sm:$0xff]
    %v412 = vld [vmem:[#allocation6 + $0x9c0] sm:$0xff]
    %v413 = vld [vmem:[#allocation6 + $0x9c8] sm:$0xff]
    %v414 = vld [vmem:[#allocation6 + $0x9d0] sm:$0xff]
    %v415 = vld [vmem:[#allocation6 + $0x9d8] sm:$0xff]
    %v416 = vld [vmem:[#allocation6 + $0x9e0] sm:$0xff]
    %v417 = vld [vmem:[#allocation6 + $0x9e8] sm:$0xff]
    %v418 = vld [vmem:[#allocation6 + $0x9f0] sm:$0xff]
    %v419 = vld [vmem:[#allocation6 + $0x9f8] sm:$0xff]
    %v420 = vld [vmem:[#allocation6 + $0xa00] sm:$0xff]
    %v421 = vld [vmem:[#allocation6 + $0xa08] sm:$0xff]
    %v422 = vld [vmem:[#allocation6 + $0xa10] sm:$0xff]
    %v423 = vld [vmem:[#allocation6 + $0xa18] sm:$0xff]
    %v424 = vld [vmem:[#allocation6 + $0xa20] sm:$0xff]
    %v425 = vld [vmem:[#allocation6 + $0xa28] sm:$0xff]
    %v426 = vld [vmem:[#allocation6 + $0xa30] sm:$0xff]
    %v427 = vld [vmem:[#allocation6 + $0xa38] sm:$0xff]
    %v428 = vld [vmem:[#allocation6 + $0xa40] sm:$0xff]
    %v429 = vld [vmem:[#allocation6 + $0xa48] sm:$0xff]
    %v430 = vld [vmem:[#allocation6 + $0xa50] sm:$0xff]
    %v431 = vld [vmem:[#allocation6 + $0xa58] sm:$0xff]
    %v432 = vld [vmem:[#allocation6 + $0xa60] sm:$0xff]
    %v433 = vld [vmem:[#allocation6 + $0xa68] sm:$0xff]
    %v434 = vld [vmem:[#allocation6 + $0xa70] sm:$0xff]
    %v435 = vld [vmem:[#allocation6 + $0xa78] sm:$0xff]
    %v436 = vld [vmem:[#allocation6 + $0xa80] sm:$0xff]
    %v437 = vld [vmem:[#allocation6 + $0xa88] sm:$0xff]
    %v438 = vld [vmem:[#allocation6 + $0xa90] sm:$0xff]
    %v439 = vld [vmem:[#allocation6 + $0xa98] sm:$0xff]
    %v440 = vld [vmem:[#allocation6 + $0xaa0] sm:$0xff]
    %v441 = vld [vmem:[#allocation6 + $0xaa8] sm:$0xff]
    %v442 = vld [vmem:[#allocation6 + $0xab0] sm:$0xff]
    %v443 = vld [vmem:[#allocation6 + $0xab8] sm:$0xff]
    %v444 = vld [vmem:[#allocation6 + $0xac0] sm:$0xff]
    %v445 = vld [vmem:[#allocation6 + $0xac8] sm:$0xff]
    %v446 = vld [vmem:[#allocation6 + $0xad0] sm:$0xff]
    %v447 = vld [vmem:[#allocation6 + $0xad8] sm:$0xff]
    %v448 = vld [vmem:[#allocation6 + $0xae0] sm:$0xff]
    %v449 = vld [vmem:[#allocation6 + $0xae8] sm:$0xff]
    %v450 = vld [vmem:[#allocation6 + $0xaf0] sm:$0xff]
    %v451 = vld [vmem:[#allocation6 + $0xaf8] sm:$0xff]
    %v452 = vld [vmem:[#allocation6 + $0xb00] sm:$0xff]
    %v453 = vld [vmem:[#allocation6 + $0xb08] sm:$0xff]
    %v454 = vld [vmem:[#allocation6 + $0xb10] sm:$0xff]
    %v455 = vld [vmem:[#allocation6 + $0xb18] sm:$0xff]
    %v456 = vld [vmem:[#allocation6 + $0xb20] sm:$0xff]
    %v457 = vld [vmem:[#allocation6 + $0xb28] sm:$0xff]
    %v458 = vld [vmem:[#allocation6 + $0xb30] sm:$0xff]
    %v459 = vld [vmem:[#allocation6 + $0xb38] sm:$0xff]
    %v460 = vld [vmem:[#allocation6 + $0xb40] sm:$0xff]
    %v461 = vld [vmem:[#allocation6 + $0xb48] sm:$0xff]
    %v462 = vld [vmem:[#allocation6 + $0xb50] sm:$0xff]
    %v463 = vld [vmem:[#allocation6 + $0xb58] sm:$0xff]
    %v464 = vld [vmem:[#allocation6 + $0xb60] sm:$0xff]
    %v465 = vld [vmem:[#allocation6 + $0xb68] sm:$0xff]
    %v466 = vld [vmem:[#allocation6 + $0xb70] sm:$0xff]
    %v467 = vld [vmem:[#allocation6 + $0xb78] sm:$0xff]
    %v468 = vld [vmem:[#allocation6 + $0xb80] sm:$0xff]
    %v469 = vld [vmem:[#allocation6 + $0xb88] sm:$0xff]
    %v470 = vld [vmem:[#allocation6 + $0xb90] sm:$0xff]
    %v471 = vld [vmem:[#allocation6 + $0xb98] sm:$0xff]
    %v472 = vld [vmem:[#allocation6 + $0xba0] sm:$0xff]
    %v473 = vld [vmem:[#allocation6 + $0xba8] sm:$0xff]
    %v474 = vld [vmem:[#allocation6 + $0xbb0] sm:$0xff]
    %v475 = vld [vmem:[#allocation6 + $0xbb8] sm:$0xff]
    %v476 = vld [vmem:[#allocation6 + $0xbc0] sm:$0xff]
    %v477 = vld [vmem:[#allocation6 + $0xbc8] sm:$0xff]
    %v478 = vld [vmem:[#allocation6 + $0xbd0] sm:$0xff]
    %v479 = vld [vmem:[#allocation6 + $0xbd8] sm:$0xff]
    %v480 = vld [vmem:[#allocation6 + $0xbe0] sm:$0xff]
    %v481 = vld [vmem:[#allocation6 + $0xbe8] sm:$0xff]
    %v482 = vld [vmem:[#allocation6 + $0xbf0] sm:$0xff]
    %v483 = vld [vmem:[#allocation6 + $0xbf8] sm:$0xff]
    %v484 = vld [vmem:[#allocation8] sm:$0x1]
    %v486 = vlaneseq
    %v487 = vshrl.u32 %v486, 7
    %v488 = vsub.s32 0, %v487
    %v489 = vrot.slane %v484, %v488
    %v503 = vcombine.high %v88, %v88
    %v504 = vcombine.high %v89, %v89
    %v505 = vcombine.high %v90, %v90
    %v506 = vcombine.high %v91, %v91
    %v507 = vcombine.high %v92, %v92
    %v508 = vcombine.high %v93, %v93
    %v509 = vcombine.high %v94, %v94
    %v510 = vcombine.high %v95, %v95
    %v511 = vcombine.high %v96, %v96
    %v512 = vcombine.high %v97, %v97
    %v513 = vcombine.high %v98, %v98
    %v514 = vcombine.high %v99, %v99
    %527 = vmatprep.subr.mxu0 0.0
    %528 = vmatpush1.msra.mxu0 %v100
    %529 = vmatprep.subr.mxu0 0.0
    %530 = vmatpush1.msra.mxu0 %v101
    %531 = vmatprep.subr.mxu0 0.0
    %532 = vmatpush1.msra.mxu0 %v102
    %533 = vmatprep.subr.mxu0 0.0
    %534 = vmatpush1.msra.mxu0 %v103
    %535 = vmatprep.subr.mxu0 0.0
    %536 = vmatpush1.msra.mxu0 %v104
    %537 = vmatprep.subr.mxu0 0.0
    %538 = vmatpush1.msra.mxu0 %v105
    %539 = vmatprep.subr.mxu0 0.0
    %540 = vmatpush1.msra.mxu0 %v106
    %541 = vmatprep.subr.mxu0 0.0
    %542 = vmatpush1.msra.mxu0 %v107
    %543 = vmatprep.subr.mxu0 0.0
    %544 = vmatpush1.msra.mxu0 %v108
    %545 = vmatprep.subr.mxu0 0.0
    %546 = vmatpush1.msra.mxu0 %v109
    %547 = vmatprep.subr.mxu0 0.0
    %548 = vmatpush1.msra.mxu0 %v110
    %549 = vmatprep.subr.mxu0 0.0
    %550 = vmatpush1.msra.mxu0 %v111
    %551 = vmatprep.subr.mxu0 0.0
    %552 = vmatpush1.msra.mxu0 %v112
    %553 = vmatprep.subr.mxu0 0.0
    %554 = vmatpush1.msra.mxu0 %v113
    %555 = vmatprep.subr.mxu0 0.0
    %556 = vmatpush1.msra.mxu0 %v114
    %557 = vmatprep.subr.mxu0 0.0
    %558 = vmatpush1.msra.mxu0 %v115
    %559 = vmatprep.subr.mxu0 0.0
    %560 = vmatpush1.msra.mxu0 %v116
    %561 = vmatprep.subr.mxu0 0.0
    %562 = vmatpush1.msra.mxu0 %v117
    %563 = vmatprep.subr.mxu0 0.0
    %564 = vmatpush1.msra.mxu0 %v118
    %565 = vmatprep.subr.mxu0 0.0
    %566 = vmatpush1.msra.mxu0 %v119
    %567 = vmatprep.subr.mxu0 0.0
    %568 = vmatpush1.msra.mxu0 %v120
    %569 = vmatprep.subr.mxu0 0.0
    %570 = vmatpush1.msra.mxu0 %v121
    %571 = vmatprep.subr.mxu0 0.0
    %572 = vmatpush1.msra.mxu0 %v122
    %573 = vmatprep.subr.mxu0 0.0
    %574 = vmatpush1.msra.mxu0 %v123
    %575 = vmatprep.subr.mxu0 0.0
    %576 = vmatpush1.msra.mxu0 %v124
    %577 = vmatprep.subr.mxu0 0.0
    %578 = vmatpush1.msra.mxu0 %v125
    %579 = vmatprep.subr.mxu0 0.0
    %580 = vmatpush1.msra.mxu0 %v126
    %581 = vmatprep.subr.mxu0 0.0
    %582 = vmatpush1.msra.mxu0 %v127
    %583 = vmatprep.subr.mxu0 0.0
    %584 = vmatpush1.msra.mxu0 %v128
    %585 = vmatprep.subr.mxu0 0.0
    %586 = vmatpush1.msra.mxu0 %v129
    %587 = vmatprep.subr.mxu0 0.0
    %588 = vmatpush1.msra.mxu0 %v130
    %589 = vmatprep.subr.mxu0 0.0
    %590 = vmatpush1.msra.mxu0 %v131
    %591 = vmatprep.mubr.f32.mxu0 %v503
    %592 = vmatmul.mubr.f32.gmra.mrb[0].mxu0 %v88
    %v593 = vpop.f32.mrb[0].mxu0
    %v594 = vadd.f32 %v489, %v593
    %v595 = vpop.f32.mrb[0].mxu0
    %596 = vdwg.mxu0
    %597 = vmatprep.subr.mxu0 0.0
    %598 = vmatpush1.msra.mxu0 %v132
    %599 = vmatprep.subr.mxu0 0.0
    %600 = vmatpush1.msra.mxu0 %v133
    %601 = vmatprep.subr.mxu0 0.0
    %602 = vmatpush1.msra.mxu0 %v134
    %603 = vmatprep.subr.mxu0 0.0
    %604 = vmatpush1.msra.mxu0 %v135
    %605 = vmatprep.subr.mxu0 0.0
    %606 = vmatpush1.msra.mxu0 %v136
    %607 = vmatprep.subr.mxu0 0.0
    %608 = vmatpush1.msra.mxu0 %v137
    %609 = vmatprep.subr.mxu0 0.0
    %610 = vmatpush1.msra.mxu0 %v138
    %611 = vmatprep.subr.mxu0 0.0
    %612 = vmatpush1.msra.mxu0 %v139
    %613 = vmatprep.subr.mxu0 0.0
    %614 = vmatpush1.msra.mxu0 %v140
    %615 = vmatprep.subr.mxu0 0.0
    %616 = vmatpush1.msra.mxu0 %v141
    %617 = vmatprep.subr.mxu0 0.0
    %618 = vmatpush1.msra.mxu0 %v142
    %619 = vmatprep.subr.mxu0 0.0
    %620 = vmatpush1.msra.mxu0 %v143
    %621 = vmatprep.subr.mxu0 0.0
    %622 = vmatpush1.msra.mxu0 %v144
    %623 = vmatprep.subr.mxu0 0.0
    %624 = vmatpush1.msra.mxu0 %v145
    %625 = vmatprep.subr.mxu0 0.0
    %626 = vmatpush1.msra.mxu0 %v146
    %627 = vmatprep.subr.mxu0 0.0
    %628 = vmatpush1.msra.mxu0 %v147
    %629 = vmatprep.subr.mxu0 0.0
    %630 = vmatpush1.msra.mxu0 %v148
    %631 = vmatprep.subr.mxu0 0.0
    %632 = vmatpush1.msra.mxu0 %v149
    %633 = vmatprep.subr.mxu0 0.0
    %634 = vmatpush1.msra.mxu0 %v150
    %635 = vmatprep.subr.mxu0 0.0
    %636 = vmatpush1.msra.mxu0 %v151
    %637 = vmatprep.subr.mxu0 0.0
    %638 = vmatpush1.msra.mxu0 %v152
    %639 = vmatprep.subr.mxu0 0.0
    %640 = vmatpush1.msra.mxu0 %v153
    %641 = vmatprep.subr.mxu0 0.0
    %642 = vmatpush1.msra.mxu0 %v154
    %643 = vmatprep.subr.mxu0 0.0
    %644 = vmatpush1.msra.mxu0 %v155
    %645 = vmatprep.subr.mxu0 0.0
    %646 = vmatpush1.msra.mxu0 %v156
    %647 = vmatprep.subr.mxu0 0.0
    %648 = vmatpush1.msra.mxu0 %v157
    %649 = vmatprep.subr.mxu0 0.0
    %650 = vmatpush1.msra.mxu0 %v158
    %651 = vmatprep.subr.mxu0 0.0
    %652 = vmatpush1.msra.mxu0 %v159
    %653 = vmatprep.subr.mxu0 0.0
    %654 = vmatpush1.msra.mxu0 %v160
    %655 = vmatprep.subr.mxu0 0.0
    %656 = vmatpush1.msra.mxu0 %v161
    %657 = vmatprep.subr.mxu0 0.0
    %658 = vmatpush1.msra.mxu0 %v162
    %659 = vmatprep.subr.mxu0 0.0
    %660 = vmatpush1.msra.mxu0 %v163
    %661 = vmatprep.mubr.f32.mxu0 %v504
    %662 = vmatmul.mubr.f32.gmra.mrb[0].mxu0 %v89
    %v663 = vpop.f32.mrb[0].mxu0
    %v664 = vadd.f32 %v594, %v663
    %v665 = vpop.f32.mrb[0].mxu0
    %666 = vdwg.mxu0
    %667 = vmatprep.subr.mxu0 0.0
    %668 = vmatpush1.msra.mxu0 %v164
    %669 = vmatprep.subr.mxu0 0.0
    %670 = vmatpush1.msra.mxu0 %v165
    %671 = vmatprep.subr.mxu0 0.0
    %672 = vmatpush1.msra.mxu0 %v166
    %673 = vmatprep.subr.mxu0 0.0
    %674 = vmatpush1.msra.mxu0 %v167
    %675 = vmatprep.subr.mxu0 0.0
    %676 = vmatpush1.msra.mxu0 %v168
    %677 = vmatprep.subr.mxu0 0.0
    %678 = vmatpush1.msra.mxu0 %v169
    %679 = vmatprep.subr.mxu0 0.0
    %680 = vmatpush1.msra.mxu0 %v170
    %681 = vmatprep.subr.mxu0 0.0
    %682 = vmatpush1.msra.mxu0 %v171
    %683 = vmatprep.subr.mxu0 0.0
    %684 = vmatpush1.msra.mxu0 %v172
    %685 = vmatprep.subr.mxu0 0.0
    %686 = vmatpush1.msra.mxu0 %v173
    %687 = vmatprep.subr.mxu0 0.0
    %688 = vmatpush1.msra.mxu0 %v174
    %689 = vmatprep.subr.mxu0 0.0
    %690 = vmatpush1.msra.mxu0 %v175
    %691 = vmatprep.subr.mxu0 0.0
    %692 = vmatpush1.msra.mxu0 %v176
    %693 = vmatprep.subr.mxu0 0.0
    %694 = vmatpush1.msra.mxu0 %v177
    %695 = vmatprep.subr.mxu0 0.0
    %696 = vmatpush1.msra.mxu0 %v178
    %697 = vmatprep.subr.mxu0 0.0
    %698 = vmatpush1.msra.mxu0 %v179
    %699 = vmatprep.subr.mxu0 0.0
    %700 = vmatpush1.msra.mxu0 %v180
    %701 = vmatprep.subr.mxu0 0.0
    %702 = vmatpush1.msra.mxu0 %v181
    %703 = vmatprep.subr.mxu0 0.0
    %704 = vmatpush1.msra.mxu0 %v182
    %705 = vmatprep.subr.mxu0 0.0
    %706 = vmatpush1.msra.mxu0 %v183
    %707 = vmatprep.subr.mxu0 0.0
    %708 = vmatpush1.msra.mxu0 %v184
    %709 = vmatprep.subr.mxu0 0.0
    %710 = vmatpush1.msra.mxu0 %v185
    %711 = vmatprep.subr.mxu0 0.0
    %712 = vmatpush1.msra.mxu0 %v186
    %713 = vmatprep.subr.mxu0 0.0
    %714 = vmatpush1.msra.mxu0 %v187
    %715 = vmatprep.subr.mxu0 0.0
    %716 = vmatpush1.msra.mxu0 %v188
    %717 = vmatprep.subr.mxu0 0.0
    %718 = vmatpush1.msra.mxu0 %v189
    %719 = vmatprep.subr.mxu0 0.0
    %720 = vmatpush1.msra.mxu0 %v190
    %721 = vmatprep.subr.mxu0 0.0
    %722 = vmatpush1.msra.mxu0 %v191
    %723 = vmatprep.subr.mxu0 0.0
    %724 = vmatpush1.msra.mxu0 %v192
    %725 = vmatprep.subr.mxu0 0.0
    %726 = vmatpush1.msra.mxu0 %v193
    %727 = vmatprep.subr.mxu0 0.0
    %728 = vmatpush1.msra.mxu0 %v194
    %729 = vmatprep.subr.mxu0 0.0
    %730 = vmatpush1.msra.mxu0 %v195
    %731 = vmatprep.mubr.f32.mxu0 %v505
    %732 = vmatmul.mubr.f32.gmra.mrb[0].mxu0 %v90
    %v733 = vpop.f32.mrb[0].mxu0
    %v734 = vadd.f32 %v664, %v733
    %v735 = vpop.f32.mrb[0].mxu0
    %736 = vdwg.mxu0
    %737 = vmatprep.subr.mxu0 0.0
    %738 = vmatpush1.msra.mxu0 %v196
    %739 = vmatprep.subr.mxu0 0.0
    %740 = vmatpush1.msra.mxu0 %v197
    %741 = vmatprep.subr.mxu0 0.0
    %742 = vmatpush1.msra.mxu0 %v198
    %743 = vmatprep.subr.mxu0 0.0
    %744 = vmatpush1.msra.mxu0 %v199
    %745 = vmatprep.subr.mxu0 0.0
    %746 = vmatpush1.msra.mxu0 %v200
    %747 = vmatprep.subr.mxu0 0.0
    %748 = vmatpush1.msra.mxu0 %v201
    %749 = vmatprep.subr.mxu0 0.0
    %750 = vmatpush1.msra.mxu0 %v202
    %751 = vmatprep.subr.mxu0 0.0
    %752 = vmatpush1.msra.mxu0 %v203
    %753 = vmatprep.subr.mxu0 0.0
    %754 = vmatpush1.msra.mxu0 %v204
    %755 = vmatprep.subr.mxu0 0.0
    %756 = vmatpush1.msra.mxu0 %v205
    %757 = vmatprep.subr.mxu0 0.0
    %758 = vmatpush1.msra.mxu0 %v206
    %759 = vmatprep.subr.mxu0 0.0
    %760 = vmatpush1.msra.mxu0 %v207
    %761 = vmatprep.subr.mxu0 0.0
    %762 = vmatpush1.msra.mxu0 %v208
    %763 = vmatprep.subr.mxu0 0.0
    %764 = vmatpush1.msra.mxu0 %v209
    %765 = vmatprep.subr.mxu0 0.0
    %766 = vmatpush1.msra.mxu0 %v210
    %767 = vmatprep.subr.mxu0 0.0
    %768 = vmatpush1.msra.mxu0 %v211
    %769 = vmatprep.subr.mxu0 0.0
    %770 = vmatpush1.msra.mxu0 %v212
    %771 = vmatprep.subr.mxu0 0.0
    %772 = vmatpush1.msra.mxu0 %v213
    %773 = vmatprep.subr.mxu0 0.0
    %774 = vmatpush1.msra.mxu0 %v214
    %775 = vmatprep.subr.mxu0 0.0
    %776 = vmatpush1.msra.mxu0 %v215
    %777 = vmatprep.subr.mxu0 0.0
    %778 = vmatpush1.msra.mxu0 %v216
    %779 = vmatprep.subr.mxu0 0.0
    %780 = vmatpush1.msra.mxu0 %v217
    %781 = vmatprep.subr.mxu0 0.0
    %782 = vmatpush1.msra.mxu0 %v218
    %783 = vmatprep.subr.mxu0 0.0
    %784 = vmatpush1.msra.mxu0 %v219
    %785 = vmatprep.subr.mxu0 0.0
    %786 = vmatpush1.msra.mxu0 %v220
    %787 = vmatprep.subr.mxu0 0.0
    %788 = vmatpush1.msra.mxu0 %v221
    %789 = vmatprep.subr.mxu0 0.0
    %790 = vmatpush1.msra.mxu0 %v222
    %791 = vmatprep.subr.mxu0 0.0
    %792 = vmatpush1.msra.mxu0 %v223
    %793 = vmatprep.subr.mxu0 0.0
    %794 = vmatpush1.msra.mxu0 %v224
    %795 = vmatprep.subr.mxu0 0.0
    %796 = vmatpush1.msra.mxu0 %v225
    %797 = vmatprep.subr.mxu0 0.0
    %798 = vmatpush1.msra.mxu0 %v226
    %799 = vmatprep.subr.mxu0 0.0
    %800 = vmatpush1.msra.mxu0 %v227
    %801 = vmatprep.mubr.f32.mxu0 %v506
    %802 = vmatmul.mubr.f32.gmra.mrb[0].mxu0 %v91
    %v803 = vpop.f32.mrb[0].mxu0
    %v804 = vadd.f32 %v734, %v803
    %v805 = vpop.f32.mrb[0].mxu0
    %806 = vdwg.mxu0
    %807 = vmatprep.subr.mxu0 0.0
    %808 = vmatpush1.msra.mxu0 %v228
    %809 = vmatprep.subr.mxu0 0.0
    %810 = vmatpush1.msra.mxu0 %v229
    %811 = vmatprep.subr.mxu0 0.0
    %812 = vmatpush1.msra.mxu0 %v230
    %813 = vmatprep.subr.mxu0 0.0
    %814 = vmatpush1.msra.mxu0 %v231
    %815 = vmatprep.subr.mxu0 0.0
    %816 = vmatpush1.msra.mxu0 %v232
    %817 = vmatprep.subr.mxu0 0.0
    %818 = vmatpush1.msra.mxu0 %v233
    %819 = vmatprep.subr.mxu0 0.0
    %820 = vmatpush1.msra.mxu0 %v234
    %821 = vmatprep.subr.mxu0 0.0
    %822 = vmatpush1.msra.mxu0 %v235
    %823 = vmatprep.subr.mxu0 0.0
    %824 = vmatpush1.msra.mxu0 %v236
    %825 = vmatprep.subr.mxu0 0.0
    %826 = vmatpush1.msra.mxu0 %v237
    %827 = vmatprep.subr.mxu0 0.0
    %828 = vmatpush1.msra.mxu0 %v238
    %829 = vmatprep.subr.mxu0 0.0
    %830 = vmatpush1.msra.mxu0 %v239
    %831 = vmatprep.subr.mxu0 0.0
    %832 = vmatpush1.msra.mxu0 %v240
    %833 = vmatprep.subr.mxu0 0.0
    %834 = vmatpush1.msra.mxu0 %v241
    %835 = vmatprep.subr.mxu0 0.0
    %836 = vmatpush1.msra.mxu0 %v242
    %837 = vmatprep.subr.mxu0 0.0
    %838 = vmatpush1.msra.mxu0 %v243
    %839 = vmatprep.subr.mxu0 0.0
    %840 = vmatpush1.msra.mxu0 %v244
    %841 = vmatprep.subr.mxu0 0.0
    %842 = vmatpush1.msra.mxu0 %v245
    %843 = vmatprep.subr.mxu0 0.0
    %844 = vmatpush1.msra.mxu0 %v246
    %845 = vmatprep.subr.mxu0 0.0
    %846 = vmatpush1.msra.mxu0 %v247
    %847 = vmatprep.subr.mxu0 0.0
    %848 = vmatpush1.msra.mxu0 %v248
    %849 = vmatprep.subr.mxu0 0.0
    %850 = vmatpush1.msra.mxu0 %v249
    %851 = vmatprep.subr.mxu0 0.0
    %852 = vmatpush1.msra.mxu0 %v250
    %853 = vmatprep.subr.mxu0 0.0
    %854 = vmatpush1.msra.mxu0 %v251
    %855 = vmatprep.subr.mxu0 0.0
    %856 = vmatpush1.msra.mxu0 %v252
    %857 = vmatprep.subr.mxu0 0.0
    %858 = vmatpush1.msra.mxu0 %v253
    %859 = vmatprep.subr.mxu0 0.0
    %860 = vmatpush1.msra.mxu0 %v254
    %861 = vmatprep.subr.mxu0 0.0
    %862 = vmatpush1.msra.mxu0 %v255
    %863 = vmatprep.subr.mxu0 0.0
    %864 = vmatpush1.msra.mxu0 %v256
    %865 = vmatprep.subr.mxu0 0.0
    %866 = vmatpush1.msra.mxu0 %v257
    %867 = vmatprep.subr.mxu0 0.0
    %868 = vmatpush1.msra.mxu0 %v258
    %869 = vmatprep.subr.mxu0 0.0
    %870 = vmatpush1.msra.mxu0 %v259
    %871 = vmatprep.mubr.f32.mxu0 %v507
    %872 = vmatmul.mubr.f32.gmra.mrb[0].mxu0 %v92
    %v873 = vpop.f32.mrb[0].mxu0
    %v874 = vadd.f32 %v804, %v873
    %v875 = vpop.f32.mrb[0].mxu0
    %876 = vdwg.mxu0
    %877 = vmatprep.subr.mxu0 0.0
    %878 = vmatpush1.msra.mxu0 %v260
    %879 = vmatprep.subr.mxu0 0.0
    %880 = vmatpush1.msra.mxu0 %v261
    %881 = vmatprep.subr.mxu0 0.0
    %882 = vmatpush1.msra.mxu0 %v262
    %883 = vmatprep.subr.mxu0 0.0
    %884 = vmatpush1.msra.mxu0 %v263
    %885 = vmatprep.subr.mxu0 0.0
    %886 = vmatpush1.msra.mxu0 %v264
    %887 = vmatprep.subr.mxu0 0.0
    %888 = vmatpush1.msra.mxu0 %v265
    %889 = vmatprep.subr.mxu0 0.0
    %890 = vmatpush1.msra.mxu0 %v266
    %891 = vmatprep.subr.mxu0 0.0
    %892 = vmatpush1.msra.mxu0 %v267
    %893 = vmatprep.subr.mxu0 0.0
    %894 = vmatpush1.msra.mxu0 %v268
    %895 = vmatprep.subr.mxu0 0.0
    %896 = vmatpush1.msra.mxu0 %v269
    %897 = vmatprep.subr.mxu0 0.0
    %898 = vmatpush1.msra.mxu0 %v270
    %899 = vmatprep.subr.mxu0 0.0
    %900 = vmatpush1.msra.mxu0 %v271
    %901 = vmatprep.subr.mxu0 0.0
    %902 = vmatpush1.msra.mxu0 %v272
    %903 = vmatprep.subr.mxu0 0.0
    %904 = vmatpush1.msra.mxu0 %v273
    %905 = vmatprep.subr.mxu0 0.0
    %906 = vmatpush1.msra.mxu0 %v274
    %907 = vmatprep.subr.mxu0 0.0
    %908 = vmatpush1.msra.mxu0 %v275
    %909 = vmatprep.subr.mxu0 0.0
    %910 = vmatpush1.msra.mxu0 %v276
    %911 = vmatprep.subr.mxu0 0.0
    %912 = vmatpush1.msra.mxu0 %v277
    %913 = vmatprep.subr.mxu0 0.0
    %914 = vmatpush1.msra.mxu0 %v278
    %915 = vmatprep.subr.mxu0 0.0
    %916 = vmatpush1.msra.mxu0 %v279
    %917 = vmatprep.subr.mxu0 0.0
    %918 = vmatpush1.msra.mxu0 %v280
    %919 = vmatprep.subr.mxu0 0.0
    %920 = vmatpush1.msra.mxu0 %v281
    %921 = vmatprep.subr.mxu0 0.0
    %922 = vmatpush1.msra.mxu0 %v282
    %923 = vmatprep.subr.mxu0 0.0
    %924 = vmatpush1.msra.mxu0 %v283
    %925 = vmatprep.subr.mxu0 0.0
    %926 = vmatpush1.msra.mxu0 %v284
    %927 = vmatprep.subr.mxu0 0.0
    %928 = vmatpush1.msra.mxu0 %v285
    %929 = vmatprep.subr.mxu0 0.0
    %930 = vmatpush1.msra.mxu0 %v286
    %931 = vmatprep.subr.mxu0 0.0
    %932 = vmatpush1.msra.mxu0 %v287
    %933 = vmatprep.subr.mxu0 0.0
    %934 = vmatpush1.msra.mxu0 %v288
    %935 = vmatprep.subr.mxu0 0.0
    %936 = vmatpush1.msra.mxu0 %v289
    %937 = vmatprep.subr.mxu0 0.0
    %938 = vmatpush1.msra.mxu0 %v290
    %939 = vmatprep.subr.mxu0 0.0
    %940 = vmatpush1.msra.mxu0 %v291
    %941 = vmatprep.mubr.f32.mxu0 %v508
    %942 = vmatmul.mubr.f32.gmra.mrb[0].mxu0 %v93
    %v943 = vpop.f32.mrb[0].mxu0
    %v944 = vadd.f32 %v874, %v943
    %v945 = vpop.f32.mrb[0].mxu0
    %946 = vdwg.mxu0
    %947 = vmatprep.subr.mxu0 0.0
    %948 = vmatpush1.msra.mxu0 %v292
    %949 = vmatprep.subr.mxu0 0.0
    %950 = vmatpush1.msra.mxu0 %v293
    %951 = vmatprep.subr.mxu0 0.0
    %952 = vmatpush1.msra.mxu0 %v294
    %953 = vmatprep.subr.mxu0 0.0
    %954 = vmatpush1.msra.mxu0 %v295
    %955 = vmatprep.subr.mxu0 0.0
    %956 = vmatpush1.msra.mxu0 %v296
    %957 = vmatprep.subr.mxu0 0.0
    %958 = vmatpush1.msra.mxu0 %v297
    %959 = vmatprep.subr.mxu0 0.0
    %960 = vmatpush1.msra.mxu0 %v298
    %961 = vmatprep.subr.mxu0 0.0
    %962 = vmatpush1.msra.mxu0 %v299
    %963 = vmatprep.subr.mxu0 0.0
    %964 = vmatpush1.msra.mxu0 %v300
    %965 = vmatprep.subr.mxu0 0.0
    %966 = vmatpush1.msra.mxu0 %v301
    %967 = vmatprep.subr.mxu0 0.0
    %968 = vmatpush1.msra.mxu0 %v302
    %969 = vmatprep.subr.mxu0 0.0
    %970 = vmatpush1.msra.mxu0 %v303
    %971 = vmatprep.subr.mxu0 0.0
    %972 = vmatpush1.msra.mxu0 %v304
    %973 = vmatprep.subr.mxu0 0.0
    %974 = vmatpush1.msra.mxu0 %v305
    %975 = vmatprep.subr.mxu0 0.0
    %976 = vmatpush1.msra.mxu0 %v306
    %977 = vmatprep.subr.mxu0 0.0
    %978 = vmatpush1.msra.mxu0 %v307
    %979 = vmatprep.subr.mxu0 0.0
    %980 = vmatpush1.msra.mxu0 %v308
    %981 = vmatprep.subr.mxu0 0.0
    %982 = vmatpush1.msra.mxu0 %v309
    %983 = vmatprep.subr.mxu0 0.0
    %984 = vmatpush1.msra.mxu0 %v310
    %985 = vmatprep.subr.mxu0 0.0
    %986 = vmatpush1.msra.mxu0 %v311
    %987 = vmatprep.subr.mxu0 0.0
    %988 = vmatpush1.msra.mxu0 %v312
    %989 = vmatprep.subr.mxu0 0.0
    %990 = vmatpush1.msra.mxu0 %v313
    %991 = vmatprep.subr.mxu0 0.0
    %992 = vmatpush1.msra.mxu0 %v314
    %993 = vmatprep.subr.mxu0 0.0
    %994 = vmatpush1.msra.mxu0 %v315
    %995 = vmatprep.subr.mxu0 0.0
    %996 = vmatpush1.msra.mxu0 %v316
    %997 = vmatprep.subr.mxu0 0.0
    %998 = vmatpush1.msra.mxu0 %v317
    %999 = vmatprep.subr.mxu0 0.0
    %1000 = vmatpush1.msra.mxu0 %v318
    %1001 = vmatprep.subr.mxu0 0.0
    %1002 = vmatpush1.msra.mxu0 %v319
    %1003 = vmatprep.subr.mxu0 0.0
    %1004 = vmatpush1.msra.mxu0 %v320
    %1005 = vmatprep.subr.mxu0 0.0
    %1006 = vmatpush1.msra.mxu0 %v321
    %1007 = vmatprep.subr.mxu0 0.0
    %1008 = vmatpush1.msra.mxu0 %v322
    %1009 = vmatprep.subr.mxu0 0.0
    %1010 = vmatpush1.msra.mxu0 %v323
    %1011 = vmatprep.mubr.f32.mxu0 %v509
    %1012 = vmatmul.mubr.f32.gmra.mrb[0].mxu0 %v94
    %v1013 = vpop.f32.mrb[0].mxu0
    %v1014 = vadd.f32 %v944, %v1013
    %v1015 = vpop.f32.mrb[0].mxu0
    %1016 = vdwg.mxu0
    %1017 = vmatprep.subr.mxu0 0.0
    %1018 = vmatpush1.msra.mxu0 %v324
    %1019 = vmatprep.subr.mxu0 0.0
    %1020 = vmatpush1.msra.mxu0 %v325
    %1021 = vmatprep.subr.mxu0 0.0
    %1022 = vmatpush1.msra.mxu0 %v326
    %1023 = vmatprep.subr.mxu0 0.0
    %1024 = vmatpush1.msra.mxu0 %v327
    %1025 = vmatprep.subr.mxu0 0.0
    %1026 = vmatpush1.msra.mxu0 %v328
    %1027 = vmatprep.subr.mxu0 0.0
    %1028 = vmatpush1.msra.mxu0 %v329
    %1029 = vmatprep.subr.mxu0 0.0
    %1030 = vmatpush1.msra.mxu0 %v330
    %1031 = vmatprep.subr.mxu0 0.0
    %1032 = vmatpush1.msra.mxu0 %v331
    %1033 = vmatprep.subr.mxu0 0.0
    %1034 = vmatpush1.msra.mxu0 %v332
    %1035 = vmatprep.subr.mxu0 0.0
    %1036 = vmatpush1.msra.mxu0 %v333
    %1037 = vmatprep.subr.mxu0 0.0
    %1038 = vmatpush1.msra.mxu0 %v334
    %1039 = vmatprep.subr.mxu0 0.0
    %1040 = vmatpush1.msra.mxu0 %v335
    %1041 = vmatprep.subr.mxu0 0.0
    %1042 = vmatpush1.msra.mxu0 %v336
    %1043 = vmatprep.subr.mxu0 0.0
    %1044 = vmatpush1.msra.mxu0 %v337
    %1045 = vmatprep.subr.mxu0 0.0
    %1046 = vmatpush1.msra.mxu0 %v338
    %1047 = vmatprep.subr.mxu0 0.0
    %1048 = vmatpush1.msra.mxu0 %v339
    %1049 = vmatprep.subr.mxu0 0.0
    %1050 = vmatpush1.msra.mxu0 %v340
    %1051 = vmatprep.subr.mxu0 0.0
    %1052 = vmatpush1.msra.mxu0 %v341
    %1053 = vmatprep.subr.mxu0 0.0
    %1054 = vmatpush1.msra.mxu0 %v342
    %1055 = vmatprep.subr.mxu0 0.0
    %1056 = vmatpush1.msra.mxu0 %v343
    %1057 = vmatprep.subr.mxu0 0.0
    %1058 = vmatpush1.msra.mxu0 %v344
    %1059 = vmatprep.subr.mxu0 0.0
    %1060 = vmatpush1.msra.mxu0 %v345
    %1061 = vmatprep.subr.mxu0 0.0
    %1062 = vmatpush1.msra.mxu0 %v346
    %1063 = vmatprep.subr.mxu0 0.0
    %1064 = vmatpush1.msra.mxu0 %v347
    %1065 = vmatprep.subr.mxu0 0.0
    %1066 = vmatpush1.msra.mxu0 %v348
    %1067 = vmatprep.subr.mxu0 0.0
    %1068 = vmatpush1.msra.mxu0 %v349
    %1069 = vmatprep.subr.mxu0 0.0
    %1070 = vmatpush1.msra.mxu0 %v350
    %1071 = vmatprep.subr.mxu0 0.0
    %1072 = vmatpush1.msra.mxu0 %v351
    %1073 = vmatprep.subr.mxu0 0.0
    %1074 = vmatpush1.msra.mxu0 %v352
    %1075 = vmatprep.subr.mxu0 0.0
    %1076 = vmatpush1.msra.mxu0 %v353
    %1077 = vmatprep.subr.mxu0 0.0
    %1078 = vmatpush1.msra.mxu0 %v354
    %1079 = vmatprep.subr.mxu0 0.0
    %1080 = vmatpush1.msra.mxu0 %v355
    %1081 = vmatprep.mubr.f32.mxu0 %v510
    %1082 = vmatmul.mubr.f32.gmra.mrb[0].mxu0 %v95
    %v1083 = vpop.f32.mrb[0].mxu0
    %v1084 = vadd.f32 %v1014, %v1083
    %v1085 = vpop.f32.mrb[0].mxu0
    %1086 = vdwg.mxu0
    %1087 = vmatprep.subr.mxu0 0.0
    %1088 = vmatpush1.msra.mxu0 %v356
    %1089 = vmatprep.subr.mxu0 0.0
    %1090 = vmatpush1.msra.mxu0 %v357
    %1091 = vmatprep.subr.mxu0 0.0
    %1092 = vmatpush1.msra.mxu0 %v358
    %1093 = vmatprep.subr.mxu0 0.0
    %1094 = vmatpush1.msra.mxu0 %v359
    %1095 = vmatprep.subr.mxu0 0.0
    %1096 = vmatpush1.msra.mxu0 %v360
    %1097 = vmatprep.subr.mxu0 0.0
    %1098 = vmatpush1.msra.mxu0 %v361
    %1099 = vmatprep.subr.mxu0 0.0
    %1100 = vmatpush1.msra.mxu0 %v362
    %1101 = vmatprep.subr.mxu0 0.0
    %1102 = vmatpush1.msra.mxu0 %v363
    %1103 = vmatprep.subr.mxu0 0.0
    %1104 = vmatpush1.msra.mxu0 %v364
    %1105 = vmatprep.subr.mxu0 0.0
    %1106 = vmatpush1.msra.mxu0 %v365
    %1107 = vmatprep.subr.mxu0 0.0
    %1108 = vmatpush1.msra.mxu0 %v366
    %1109 = vmatprep.subr.mxu0 0.0
    %1110 = vmatpush1.msra.mxu0 %v367
    %1111 = vmatprep.subr.mxu0 0.0
    %1112 = vmatpush1.msra.mxu0 %v368
    %1113 = vmatprep.subr.mxu0 0.0
    %1114 = vmatpush1.msra.mxu0 %v369
    %1115 = vmatprep.subr.mxu0 0.0
    %1116 = vmatpush1.msra.mxu0 %v370
    %1117 = vmatprep.subr.mxu0 0.0
    %1118 = vmatpush1.msra.mxu0 %v371
    %1119 = vmatprep.subr.mxu0 0.0
    %1120 = vmatpush1.msra.mxu0 %v372
    %1121 = vmatprep.subr.mxu0 0.0
    %1122 = vmatpush1.msra.mxu0 %v373
    %1123 = vmatprep.subr.mxu0 0.0
    %1124 = vmatpush1.msra.mxu0 %v374
    %1125 = vmatprep.subr.mxu0 0.0
    %1126 = vmatpush1.msra.mxu0 %v375
    %1127 = vmatprep.subr.mxu0 0.0
    %1128 = vmatpush1.msra.mxu0 %v376
    %1129 = vmatprep.subr.mxu0 0.0
    %1130 = vmatpush1.msra.mxu0 %v377
    %1131 = vmatprep.subr.mxu0 0.0
    %1132 = vmatpush1.msra.mxu0 %v378
    %1133 = vmatprep.subr.mxu0 0.0
    %1134 = vmatpush1.msra.mxu0 %v379
    %1135 = vmatprep.subr.mxu0 0.0
    %1136 = vmatpush1.msra.mxu0 %v380
    %1137 = vmatprep.subr.mxu0 0.0
    %1138 = vmatpush1.msra.mxu0 %v381
    %1139 = vmatprep.subr.mxu0 0.0
    %1140 = vmatpush1.msra.mxu0 %v382
    %1141 = vmatprep.subr.mxu0 0.0
    %1142 = vmatpush1.msra.mxu0 %v383
    %1143 = vmatprep.subr.mxu0 0.0
    %1144 = vmatpush1.msra.mxu0 %v384
    %1145 = vmatprep.subr.mxu0 0.0
    %1146 = vmatpush1.msra.mxu0 %v385
    %1147 = vmatprep.subr.mxu0 0.0
    %1148 = vmatpush1.msra.mxu0 %v386
    %1149 = vmatprep.subr.mxu0 0.0
    %1150 = vmatpush1.msra.mxu0 %v387
    %1151 = vmatprep.mubr.f32.mxu0 %v511
    %1152 = vmatmul.mubr.f32.gmra.mrb[0].mxu0 %v96
    %v1153 = vpop.f32.mrb[0].mxu0
    %v1154 = vadd.f32 %v1084, %v1153
    %v1155 = vpop.f32.mrb[0].mxu0
    %1156 = vdwg.mxu0
    %1157 = vmatprep.subr.mxu0 0.0
    %1158 = vmatpush1.msra.mxu0 %v388
    %1159 = vmatprep.subr.mxu0 0.0
    %1160 = vmatpush1.msra.mxu0 %v389
    %1161 = vmatprep.subr.mxu0 0.0
    %1162 = vmatpush1.msra.mxu0 %v390
    %1163 = vmatprep.subr.mxu0 0.0
    %1164 = vmatpush1.msra.mxu0 %v391
    %1165 = vmatprep.subr.mxu0 0.0
    %1166 = vmatpush1.msra.mxu0 %v392
    %1167 = vmatprep.subr.mxu0 0.0
    %1168 = vmatpush1.msra.mxu0 %v393
    %1169 = vmatprep.subr.mxu0 0.0
    %1170 = vmatpush1.msra.mxu0 %v394
    %1171 = vmatprep.subr.mxu0 0.0
    %1172 = vmatpush1.msra.mxu0 %v395
    %1173 = vmatprep.subr.mxu0 0.0
    %1174 = vmatpush1.msra.mxu0 %v396
    %1175 = vmatprep.subr.mxu0 0.0
    %1176 = vmatpush1.msra.mxu0 %v397
    %1177 = vmatprep.subr.mxu0 0.0
    %1178 = vmatpush1.msra.mxu0 %v398
    %1179 = vmatprep.subr.mxu0 0.0
    %1180 = vmatpush1.msra.mxu0 %v399
    %1181 = vmatprep.subr.mxu0 0.0
    %1182 = vmatpush1.msra.mxu0 %v400
    %1183 = vmatprep.subr.mxu0 0.0
    %1184 = vmatpush1.msra.mxu0 %v401
    %1185 = vmatprep.subr.mxu0 0.0
    %1186 = vmatpush1.msra.mxu0 %v402
    %1187 = vmatprep.subr.mxu0 0.0
    %1188 = vmatpush1.msra.mxu0 %v403
    %1189 = vmatprep.subr.mxu0 0.0
    %1190 = vmatpush1.msra.mxu0 %v404
    %1191 = vmatprep.subr.mxu0 0.0
    %1192 = vmatpush1.msra.mxu0 %v405
    %1193 = vmatprep.subr.mxu0 0.0
    %1194 = vmatpush1.msra.mxu0 %v406
    %1195 = vmatprep.subr.mxu0 0.0
    %1196 = vmatpush1.msra.mxu0 %v407
    %1197 = vmatprep.subr.mxu0 0.0
    %1198 = vmatpush1.msra.mxu0 %v408
    %1199 = vmatprep.subr.mxu0 0.0
    %1200 = vmatpush1.msra.mxu0 %v409
    %1201 = vmatprep.subr.mxu0 0.0
    %1202 = vmatpush1.msra.mxu0 %v410
    %1203 = vmatprep.subr.mxu0 0.0
    %1204 = vmatpush1.msra.mxu0 %v411
    %1205 = vmatprep.subr.mxu0 0.0
    %1206 = vmatpush1.msra.mxu0 %v412
    %1207 = vmatprep.subr.mxu0 0.0
    %1208 = vmatpush1.msra.mxu0 %v413
    %1209 = vmatprep.subr.mxu0 0.0
    %1210 = vmatpush1.msra.mxu0 %v414
    %1211 = vmatprep.subr.mxu0 0.0
    %1212 = vmatpush1.msra.mxu0 %v415
    %1213 = vmatprep.subr.mxu0 0.0
    %1214 = vmatpush1.msra.mxu0 %v416
    %1215 = vmatprep.subr.mxu0 0.0
    %1216 = vmatpush1.msra.mxu0 %v417
    %1217 = vmatprep.subr.mxu0 0.0
    %1218 = vmatpush1.msra.mxu0 %v418
    %1219 = vmatprep.subr.mxu0 0.0
    %1220 = vmatpush1.msra.mxu0 %v419
    %1221 = vmatprep.mubr.f32.mxu0 %v512
    %1222 = vmatmul.mubr.f32.gmra.mrb[0].mxu0 %v97
    %v1223 = vpop.f32.mrb[0].mxu0
    %v1224 = vadd.f32 %v1154, %v1223
    %v1225 = vpop.f32.mrb[0].mxu0
    %1226 = vdwg.mxu0
    %1227 = vmatprep.subr.mxu0 0.0
    %1228 = vmatpush1.msra.mxu0 %v420
    %1229 = vmatprep.subr.mxu0 0.0
    %1230 = vmatpush1.msra.mxu0 %v421
    %1231 = vmatprep.subr.mxu0 0.0
    %1232 = vmatpush1.msra.mxu0 %v422
    %1233 = vmatprep.subr.mxu0 0.0
    %1234 = vmatpush1.msra.mxu0 %v423
    %1235 = vmatprep.subr.mxu0 0.0
    %1236 = vmatpush1.msra.mxu0 %v424
    %1237 = vmatprep.subr.mxu0 0.0
    %1238 = vmatpush1.msra.mxu0 %v425
    %1239 = vmatprep.subr.mxu0 0.0
    %1240 = vmatpush1.msra.mxu0 %v426
    %1241 = vmatprep.subr.mxu0 0.0
    %1242 = vmatpush1.msra.mxu0 %v427
    %1243 = vmatprep.subr.mxu0 0.0
    %1244 = vmatpush1.msra.mxu0 %v428
    %1245 = vmatprep.subr.mxu0 0.0
    %1246 = vmatpush1.msra.mxu0 %v429
    %1247 = vmatprep.subr.mxu0 0.0
    %1248 = vmatpush1.msra.mxu0 %v430
    %1249 = vmatprep.subr.mxu0 0.0
    %1250 = vmatpush1.msra.mxu0 %v431
    %1251 = vmatprep.subr.mxu0 0.0
    %1252 = vmatpush1.msra.mxu0 %v432
    %1253 = vmatprep.subr.mxu0 0.0
    %1254 = vmatpush1.msra.mxu0 %v433
    %1255 = vmatprep.subr.mxu0 0.0
    %1256 = vmatpush1.msra.mxu0 %v434
    %1257 = vmatprep.subr.mxu0 0.0
    %1258 = vmatpush1.msra.mxu0 %v435
    %1259 = vmatprep.subr.mxu0 0.0
    %1260 = vmatpush1.msra.mxu0 %v436
    %1261 = vmatprep.subr.mxu0 0.0
    %1262 = vmatpush1.msra.mxu0 %v437
    %1263 = vmatprep.subr.mxu0 0.0
    %1264 = vmatpush1.msra.mxu0 %v438
    %1265 = vmatprep.subr.mxu0 0.0
    %1266 = vmatpush1.msra.mxu0 %v439
    %1267 = vmatprep.subr.mxu0 0.0
    %1268 = vmatpush1.msra.mxu0 %v440
    %1269 = vmatprep.subr.mxu0 0.0
    %1270 = vmatpush1.msra.mxu0 %v441
    %1271 = vmatprep.subr.mxu0 0.0
    %1272 = vmatpush1.msra.mxu0 %v442
    %1273 = vmatprep.subr.mxu0 0.0
    %1274 = vmatpush1.msra.mxu0 %v443
    %1275 = vmatprep.subr.mxu0 0.0
    %1276 = vmatpush1.msra.mxu0 %v444
    %1277 = vmatprep.subr.mxu0 0.0
    %1278 = vmatpush1.msra.mxu0 %v445
    %1279 = vmatprep.subr.mxu0 0.0
    %1280 = vmatpush1.msra.mxu0 %v446
    %1281 = vmatprep.subr.mxu0 0.0
    %1282 = vmatpush1.msra.mxu0 %v447
    %1283 = vmatprep.subr.mxu0 0.0
    %1284 = vmatpush1.msra.mxu0 %v448
    %1285 = vmatprep.subr.mxu0 0.0
    %1286 = vmatpush1.msra.mxu0 %v449
    %1287 = vmatprep.subr.mxu0 0.0
    %1288 = vmatpush1.msra.mxu0 %v450
    %1289 = vmatprep.subr.mxu0 0.0
    %1290 = vmatpush1.msra.mxu0 %v451
    %1291 = vmatprep.mubr.f32.mxu0 %v513
    %1292 = vmatmul.mubr.f32.gmra.mrb[0].mxu0 %v98
    %v1293 = vpop.f32.mrb[0].mxu0
    %v1294 = vadd.f32 %v1224, %v1293
    %v1295 = vpop.f32.mrb[0].mxu0
    %1296 = vdwg.mxu0
    %1297 = vmatprep.subr.mxu0 0.0
    %1298 = vmatpush1.msra.mxu0 %v452
    %1299 = vmatprep.subr.mxu0 0.0
    %1300 = vmatpush1.msra.mxu0 %v453
    %1301 = vmatprep.subr.mxu0 0.0
    %1302 = vmatpush1.msra.mxu0 %v454
    %1303 = vmatprep.subr.mxu0 0.0
    %1304 = vmatpush1.msra.mxu0 %v455
    %1305 = vmatprep.subr.mxu0 0.0
    %1306 = vmatpush1.msra.mxu0 %v456
    %1307 = vmatprep.subr.mxu0 0.0
    %1308 = vmatpush1.msra.mxu0 %v457
    %1309 = vmatprep.subr.mxu0 0.0
    %1310 = vmatpush1.msra.mxu0 %v458
    %1311 = vmatprep.subr.mxu0 0.0
    %1312 = vmatpush1.msra.mxu0 %v459
    %1313 = vmatprep.subr.mxu0 0.0
    %1314 = vmatpush1.msra.mxu0 %v460
    %1315 = vmatprep.subr.mxu0 0.0
    %1316 = vmatpush1.msra.mxu0 %v461
    %1317 = vmatprep.subr.mxu0 0.0
    %1318 = vmatpush1.msra.mxu0 %v462
    %1319 = vmatprep.subr.mxu0 0.0
    %1320 = vmatpush1.msra.mxu0 %v463
    %1321 = vmatprep.subr.mxu0 0.0
    %1322 = vmatpush1.msra.mxu0 %v464
    %1323 = vmatprep.subr.mxu0 0.0
    %1324 = vmatpush1.msra.mxu0 %v465
    %1325 = vmatprep.subr.mxu0 0.0
    %1326 = vmatpush1.msra.mxu0 %v466
    %1327 = vmatprep.subr.mxu0 0.0
    %1328 = vmatpush1.msra.mxu0 %v467
    %1329 = vmatprep.subr.mxu0 0.0
    %1330 = vmatpush1.msra.mxu0 %v468
    %1331 = vmatprep.subr.mxu0 0.0
    %1332 = vmatpush1.msra.mxu0 %v469
    %1333 = vmatprep.subr.mxu0 0.0
    %1334 = vmatpush1.msra.mxu0 %v470
    %1335 = vmatprep.subr.mxu0 0.0
    %1336 = vmatpush1.msra.mxu0 %v471
    %1337 = vmatprep.subr.mxu0 0.0
    %1338 = vmatpush1.msra.mxu0 %v472
    %1339 = vmatprep.subr.mxu0 0.0
    %1340 = vmatpush1.msra.mxu0 %v473
    %1341 = vmatprep.subr.mxu0 0.0
    %1342 = vmatpush1.msra.mxu0 %v474
    %1343 = vmatprep.subr.mxu0 0.0
    %1344 = vmatpush1.msra.mxu0 %v475
    %1345 = vmatprep.subr.mxu0 0.0
    %1346 = vmatpush1.msra.mxu0 %v476
    %1347 = vmatprep.subr.mxu0 0.0
    %1348 = vmatpush1.msra.mxu0 %v477
    %1349 = vmatprep.subr.mxu0 0.0
    %1350 = vmatpush1.msra.mxu0 %v478
    %1351 = vmatprep.subr.mxu0 0.0
    %1352 = vmatpush1.msra.mxu0 %v479
    %1353 = vmatprep.subr.mxu0 0.0
    %1354 = vmatpush1.msra.mxu0 %v480
    %1355 = vmatprep.subr.mxu0 0.0
    %1356 = vmatpush1.msra.mxu0 %v481
    %1357 = vmatprep.subr.mxu0 0.0
    %1358 = vmatpush1.msra.mxu0 %v482
    %1359 = vmatprep.subr.mxu0 0.0
    %1360 = vmatpush1.msra.mxu0 %v483
    %1361 = vmatprep.mubr.f32.mxu0 %v514
    %1362 = vmatmul.mubr.f32.gmra.mrb[0].mxu0 %v99
    %v1363 = vpop.f32.mrb[0].mxu0
    %v1364 = vadd.f32 %v1294, %v1363
    %v1365 = vpop.f32.mrb[0].mxu0
    %1366 = vdwg.mxu0
    %v1367 = vmax.f32 %v1364, 0.0
    %v1368 = vld [vmem:[#allocation2] sm:$0xf]
    %v1369 = vld [vmem:[#allocation9] sm:$0xff]
    %v1370 = vld [vmem:[#allocation9 + $0x8] sm:$0xff]
    %v1371 = vld [vmem:[#allocation9 + $0x10] sm:$0xff]
    %v1372 = vld [vmem:[#allocation9 + $0x18] sm:$0xff]
    %v1373 = vld [vmem:[#allocation9 + $0x20] sm:$0xff]
    %v1374 = vld [vmem:[#allocation9 + $0x28] sm:$0xff]
    %v1375 = vld [vmem:[#allocation9 + $0x30] sm:$0xff]
    %v1376 = vld [vmem:[#allocation9 + $0x38] sm:$0xff]
    %v1377 = vld [vmem:[#allocation9 + $0x40] sm:$0xff]
    %v1378 = vld [vmem:[#allocation9 + $0x48] sm:$0xff]
    %v1379 = vld [vmem:[#allocation9 + $0x50] sm:$0xff]
    %v1380 = vld [vmem:[#allocation9 + $0x58] sm:$0xff]
    %v1381 = vld [vmem:[#allocation9 + $0x60] sm:$0xff]
    %v1382 = vld [vmem:[#allocation9 + $0x68] sm:$0xff]
    %v1383 = vld [vmem:[#allocation9 + $0x70] sm:$0xff]
    %v1384 = vld [vmem:[#allocation9 + $0x78] sm:$0xff]
    %1385 = vmatprep.subr.mxu0 0.0
    %1386 = vmatpush1.msra.mxu0 %v1369
    %1387 = vmatprep.subr.mxu0 0.0
    %1388 = vmatpush1.msra.mxu0 %v1370
    %1389 = vmatprep.subr.mxu0 0.0
    %1390 = vmatpush1.msra.mxu0 %v1371
    %1391 = vmatprep.subr.mxu0 0.0
    %1392 = vmatpush1.msra.mxu0 %v1372
    %1393 = vmatprep.subr.mxu0 0.0
    %1394 = vmatpush1.msra.mxu0 %v1373
    %1395 = vmatprep.subr.mxu0 0.0
    %1396 = vmatpush1.msra.mxu0 %v1374
    %1397 = vmatprep.subr.mxu0 0.0
    %1398 = vmatpush1.msra.mxu0 %v1375
    %1399 = vmatprep.subr.mxu0 0.0
    %1400 = vmatpush1.msra.mxu0 %v1376
    %1401 = vmatprep.subr.mxu0 0.0
    %1402 = vmatpush1.msra.mxu0 %v1377
    %1403 = vmatprep.subr.mxu0 0.0
    %1404 = vmatpush1.msra.mxu0 %v1378
    %1405 = vmatprep.subr.mxu0 0.0
    %1406 = vmatpush1.msra.mxu0 %v1379
    %1407 = vmatprep.subr.mxu0 0.0
    %1408 = vmatpush1.msra.mxu0 %v1380
    %1409 = vmatprep.subr.mxu0 0.0
    %1410 = vmatpush1.msra.mxu0 %v1381
    %1411 = vmatprep.subr.mxu0 0.0
    %1412 = vmatpush1.msra.mxu0 %v1382
    %1413 = vmatprep.subr.mxu0 0.0
    %1414 = vmatpush1.msra.mxu0 %v1383
    %1415 = vmatprep.subr.mxu0 0.0
    %1416 = vmatpush1.msra.mxu0 %v1384
    %1417 = vmatprep.subr.mxu0 0.0
    %1418 = vmatpush1.msra.mxu0 0.0
    %1419 = vmatprep.subr.mxu0 0.0
    %1420 = vmatpush1.msra.mxu0 0.0
    %1421 = vmatprep.subr.mxu0 0.0
    %1422 = vmatpush1.msra.mxu0 0.0
    %1423 = vmatprep.subr.mxu0 0.0
    %1424 = vmatpush1.msra.mxu0 0.0
    %1425 = vmatprep.subr.mxu0 0.0
    %1426 = vmatpush1.msra.mxu0 0.0
    %1427 = vmatprep.subr.mxu0 0.0
    %1428 = vmatpush1.msra.mxu0 0.0
    %1429 = vmatprep.subr.mxu0 0.0
    %1430 = vmatpush1.msra.mxu0 0.0
    %1431 = vmatprep.subr.mxu0 0.0
    %1432 = vmatpush1.msra.mxu0 0.0
    %1433 = vmatprep.subr.mxu0 0.0
    %1434 = vmatpush1.msra.mxu0 0.0
    %1435 = vmatprep.subr.mxu0 0.0
    %1436 = vmatpush1.msra.mxu0 0.0
    %1437 = vmatprep.subr.mxu0 0.0
    %1438 = vmatpush1.msra.mxu0 0.0
    %1439 = vmatprep.subr.mxu0 0.0
    %1440 = vmatpush1.msra.mxu0 0.0
    %1441 = vmatprep.subr.mxu0 0.0
    %1442 = vmatpush1.msra.mxu0 0.0
    %1443 = vmatprep.subr.mxu0 0.0
    %1444 = vmatpush1.msra.mxu0 0.0
    %1445 = vmatprep.subr.mxu0 0.0
    %1446 = vmatpush1.msra.mxu0 0.0
    %1447 = vmatprep.subr.mxu0 0.0
    %1448 = vmatpush1.msra.mxu0 0.0
    %1449 = vmatprep.mubr.f32.mxu0 0.0
    %1450 = vmatmul.mubr.f32.gmra.mrb[0].mxu0 %v1367
    %v1451 = vpop.f32.mrb[0].mxu0
    %v1452 = vadd.f32 0.0, %v1451
    %v1453 = vpop.f32.mrb[0].mxu0
    %1454 = vdwg.mxu0
    %v1455 = vadd.f32 %v1368, %v1452
    %1456 = vst [vmem:[#allocation2] sm:$0xf] %v1455
    // Predicated region
    $region46: #{tpu_custom_call.1} parent=1 // pred_check
      %p1457 = pneg %p83
    $region47: #{tpu_custom_call.1} parent=1 // pred_check_branch
      %1459 = sbr.rel (%p1457) target = $region49
    $region48: #{tpu_custom_call.1} parent=1 // pred_region
      %v1460 = vld [vmem:[#allocation2] sm:$0xf]
      %v1461 = vld [vmem:[#allocation11] sm:$0x1]
      %v1463 = vlaneseq
      %v1464 = vshrl.u32 %v1463, 7
      %v1465 = vsub.s32 0, %v1464
      %v1466 = vrot.slane %v1461, %v1465
      %v1468 = vadd.f32 %v1460, %v1466
      %1469 = vst [vmem:[#allocation12] sm:$0xf] %v1468
    $region49: #{tpu_custom_call.1} parent=1 // pred_fallthru
      _
    // Predicated region
    $region50: #{tpu_custom_call.1} parent=1 // pred_check
      _
    $region51: #{tpu_custom_call.1} parent=1 // pred_check_branch
      %1471 = sbr.rel (0) target = $region53
    $region52: #{tpu_custom_call.1} parent=1 // pred_region
      %s1473 = ssub.s32 64, 64
      %1474 = vsyncadd [#allocation5], %s1473
      %s1476 = sshll.u32 [#allocation12], 4
      %s1477 = int_to_ptr.vmem [resolvable:$true] %s1476
      %1479 = dma.vmem_to_hbm [thread:$0]  %s1477, 64, %s5, [#allocation5]
    $region53: #{tpu_custom_call.1} parent=1 // pred_fallthru
      _
    // Predicated region
    $region54: #{tpu_custom_call.1} parent=1 // pred_check
      _
    $region55: #{tpu_custom_call.1} parent=1 // pred_check_branch
      %1481 = sbr.rel (0) target = $region57
    $region56: #{tpu_custom_call.1} parent=1 // pred_region
      %1482 = dma.done [#allocation5], 64
    $region57: #{tpu_custom_call.1} parent=1 // pred_fallthru
      _
    %1483 = vsyncpa [#allocation4], 1
    %1484 = vsyncpa [#allocation7], 1
    %1485 = vsyncpa [#allocation10], 1
    %1486 = vsyncpa [#allocation5], 1

</llo_original>
